<compile_context>
chip_gen: v7x
topology: tpu7x:2x2x1
jax: 0.10.0
libtpu: 0.0.40
codegen_flags: <defaults>
</compile_context>

<pallas_src>
import jax
import jax.numpy as jnp
from jax.experimental import pallas as pl
from jax.experimental.pallas import tpu as pltpu

FEAT_CH = 16        # self.feat_ch
HID = 32            # global_fc out
OUT = 16            # fc out
VIEWDIR_AGG = True  # cfg.enerf.viewdir_agg (static config flag)


def _round_up(x, m):
    return ((x + m - 1) // m) * m


def agg_kernel(feat_ref, dirs_ref, wv_ref, bv_ref, wgi_ref, wgv_ref, wgm_ref,
               bg_ref, wa_ref, ba_ref, wf_ref, bf_ref, out_ref, img_ref, g_ref):
    f32 = jnp.float32
    S, C, T = feat_ref.shape          # (views, feat_ch, lane tile)
    H = g_ref.shape[1]                # 32
    OC = out_ref.shape[0]             # 16

    # ---- pass A: view_fc + residual add; accumulate sum over views ----------
    bv_b = jnp.broadcast_to(bv_ref[...], (C, T))           # hoisted broadcast
    s1 = jnp.zeros((C, T), f32)
    for s in range(S):
        f = feat_ref[s].astype(f32)                        # (C, T)
        if VIEWDIR_AGG:
            d = dirs_ref[s].astype(f32)                    # (4, T)
            v = jnp.dot(wv_ref[...], d, preferred_element_type=f32) + bv_b
            img = f + jnp.maximum(v, 0.0)
        else:
            img = f
        img_ref[s] = img
        s1 = s1 + img
    mean = s1 * (1.0 / S)                                  # (C, T)

    # ---- pass B: unbiased variance over views (two-pass, matches torch.var) -
    vsum = jnp.zeros((C, T), f32)
    for s in range(S):
        dlt = img_ref[s] - mean
        vsum = vsum + dlt * dlt
    var = vsum * (1.0 / (S - 1))

    # var/mean rows are identical for every view, so their global_fc
    # contribution (+ bias) is computed once per tile instead of S times.
    gvm = (jnp.dot(wgv_ref[...], var, preferred_element_type=f32)
           + jnp.dot(wgm_ref[...], mean, preferred_element_type=f32)
           + jnp.broadcast_to(bg_ref[...], (H, T)))        # (H, T)

    # ---- pass C: global_fc per view + attention logit ------------------------
    wa_b = jnp.broadcast_to(wa_ref[...], (H, T))
    ba_b = jnp.broadcast_to(ba_ref[...], (1, T))
    score_rows = []
    for s in range(S):
        gf = jnp.dot(wgi_ref[...], img_ref[s], preferred_element_type=f32) + gvm
        gf = jnp.maximum(gf, 0.0)                          # (H, T)
        g_ref[s] = gf
        # agg_w_fc as multiply + sublane reduction (avoids a degenerate M=1 matmul)
        sc = jnp.sum(gf * wa_b, axis=0, keepdims=True) + ba_b
        score_rows.append(jnp.maximum(sc, 0.0))            # (1, T)
    scores = jnp.concatenate(score_rows, axis=0)           # (S, T)

    # ---- pass D: softmax over views, weighted sum, final fc -----------------
    m = jnp.max(scores, axis=0, keepdims=True)
    e = jnp.exp(scores - m)
    # exact reciprocal: approx=True (~1e-3 rel) would not hold the 1e-4 check.
    w = e * pl.reciprocal(jnp.sum(e, axis=0, keepdims=True), approx=False)

    acc = jnp.zeros((H, T), f32)
    for s in range(S):
        acc = acc + w[s:s + 1, :] * g_ref[s]               # (H, T)

    out = jnp.dot(wf_ref[...], acc, preferred_element_type=f32)
    out = out + jnp.broadcast_to(bf_ref[...], (OC, T))
    out_ref[...] = jnp.maximum(out, 0.0).astype(out_ref.dtype)


def agg_forward(x, params, *, tile_m=1024, in_dtype=jnp.float32):
    """x: (B, P, S, feat_ch+4) float32 -> (B, P, 16) float32.

    tile_m: lanes per grid step (sweep 512/1024/2048; keep <=2048 on v7x).
    in_dtype: set to jnp.bfloat16 to halve HBM traffic (v5e); compute stays f32.
    """
    B, P, S, Cin = x.shape
    C = Cin - 4
    N = B * P

    wv, bv, wg, bg, wa, ba, wf, bf = params
    H = wg.shape[1]
    OC = wf.shape[1]

    # Weight-stationary (transposed) parameters for the lane-major kernel.
    wvT = wv.T                                # (C, 4)
    bv_c = bv.reshape(C, 1)
    wgiT = wg[:C, :].T                        # (H, C)  img  part of global_fc
    wgvT = wg[C:2 * C, :].T                   # (H, C)  var  part
    wgmT = wg[2 * C:3 * C, :].T               # (H, C)  mean part
    bg_c = bg.reshape(H, 1)
    wa_c = wa.reshape(H, 1)
    ba_c = ba.reshape(1, 1)
    wfT = wf.T                                # (OC, H)
    bf_c = bf.reshape(OC, 1)

    # Lane tile: multiple of 128, no larger than (padded) N; pad N to grid*tile.
    tile = min(_round_up(max(tile_m, 128), 128), _round_up(N, 128))
    n_tiles = pl.cdiv(N, tile)
    Np = n_tiles * tile

    xf = x.reshape(N, S, Cin).astype(in_dtype)
    if Np != N:
        xf = jnp.pad(xf, ((0, Np - N), (0, 0), (0, 0)))    # zero rows are safe
    xt = jnp.transpose(xf, (1, 2, 0))                      # (S, Cin, Np)
    feat_t = xt[:, :C, :]                                  # (S, C, Np)
    dirs_t = xt[:, C:, :]                                  # (S, 4, Np)

    def full(a):
        nd = a.ndim
        return pl.BlockSpec(a.shape, lambda i, _nd=nd: (0,) * _nd)

    out = pl.pallas_call(
        agg_kernel,
        out_shape=jax.ShapeDtypeStruct((OC, Np), jnp.float32),
        grid=(n_tiles,),
        in_specs=[
            pl.BlockSpec((S, C, tile), lambda i: (0, 0, i)),
            pl.BlockSpec((S, 4, tile), lambda i: (0, 0, i)),
            full(wvT), full(bv_c), full(wgiT), full(wgvT), full(wgmT),
            full(bg_c), full(wa_c), full(ba_c), full(wfT), full(bf_c),
        ],
        out_specs=pl.BlockSpec((OC, tile), lambda i: (0, i)),
        scratch_shapes=[
            pltpu.VMEM((S, C, tile), jnp.float32),   # per-view img features
            pltpu.VMEM((S, H, tile), jnp.float32),   # per-view global_fc acts
        ],
        compiler_params=pltpu.CompilerParams(
            dimension_semantics=("parallel",),
            vmem_limit_bytes=32 * 1024 * 1024),
    )(feat_t, dirs_t, wvT, bv_c, wgiT, wgvT, wgmT, bg_c, wa_c, ba_c, wfT, bf_c)

    out = out[:, :N]                                       # drop lane padding
    return jnp.transpose(out, (1, 0)).reshape(B, P, OC)


def init_params(key, feat_ch=FEAT_CH):
    """Kaiming-normal weights, zero biases (matches weights_init)."""
    ks = jax.random.split(key, 4)

    def kaiming(k, fan_in, fan_out):
        return (jax.random.normal(k, (fan_in, fan_out), jnp.float32)
                * jnp.sqrt(2.0 / fan_in))

    wv = kaiming(ks[0], 4, feat_ch)
    bv = jnp.zeros((1, feat_ch), jnp.float32)
    wg = kaiming(ks[1], feat_ch * 3, HID)
    bg = jnp.zeros((1, HID), jnp.float32)
    wa = kaiming(ks[2], HID, 1)
    ba = jnp.zeros((1, 1), jnp.float32)
    wf = kaiming(ks[3], HID, OUT)
    bf = jnp.zeros((1, OUT), jnp.float32)
    return (wv, bv, wg, bg, wa, ba, wf, bf)


def agg_reference(x, params):
    """Pure-JAX reference mirroring the PyTorch forward."""
    wv, bv, wg, bg, wa, ba, wf, bf = params
    if VIEWDIR_AGG:
        dirs = x[..., -4:]
        view = jnp.maximum(dirs @ wv + bv[0], 0.0)
        img = x[..., :-4] + view
    else:
        img = x[..., :-4]
    mean = jnp.mean(img, axis=-2, keepdims=True)
    var = jnp.var(img, axis=-2, keepdims=True, ddof=1)     # torch.var unbiased
    cat = jnp.concatenate([img,
                           jnp.broadcast_to(var, img.shape),
                           jnp.broadcast_to(mean, img.shape)], axis=-1)
    gf = jnp.maximum(cat @ wg + bg[0], 0.0)
    w = jnp.maximum(gf @ wa + ba[0], 0.0)
    w = jax.nn.softmax(w, axis=-2)
    im = jnp.sum(gf * w, axis=-2)
    return jnp.maximum(im @ wf + bf[0], 0.0)


if __name__ == "__main__":
    key = jax.random.PRNGKey(0)
    kx, kp = jax.random.split(key)

    B, P, S = 2, 64, 8
    x = jax.random.normal(kx, (B, P, S, FEAT_CH + 4), jnp.float32)
    params = init_params(kp)

    out = agg_forward(x, params)       # demo N=128 -> single 128-lane tile
    out = jax.block_until_ready(out)

    ref = agg_reference(x, params)
    assert out.shape == (B, P, OUT)
    err = float(jnp.max(jnp.abs(out - ref)))
    assert jnp.allclose(out, ref, atol=1e-4, rtol=1e-4), err

    print("KERNEL_OK")
</pallas_src>

<mosaic_0001>
module attributes {stable_mosaic.version = 11 : i64} {
  func.func @agg_kernel(%arg0: i32, %arg1: memref<8x16x128xf32, #tpu.memory_space<vmem>>, %arg2: memref<8x4x128xf32, #tpu.memory_space<vmem>>, %arg3: memref<16x4xf32, #tpu.memory_space<vmem>>, %arg4: memref<16x1xf32, #tpu.memory_space<vmem>>, %arg5: memref<32x16xf32, #tpu.memory_space<vmem>>, %arg6: memref<32x16xf32, #tpu.memory_space<vmem>>, %arg7: memref<32x16xf32, #tpu.memory_space<vmem>>, %arg8: memref<32x1xf32, #tpu.memory_space<vmem>>, %arg9: memref<32x1xf32, #tpu.memory_space<vmem>>, %arg10: memref<1x1xf32, #tpu.memory_space<vmem>>, %arg11: memref<16x32xf32, #tpu.memory_space<vmem>>, %arg12: memref<16x1xf32, #tpu.memory_space<vmem>>, %arg13: memref<16x128xf32, #tpu.memory_space<vmem>>, %arg14: memref<8x16x128xf32, #tpu.memory_space<vmem>>, %arg15: memref<8x32x128xf32, #tpu.memory_space<vmem>>) attributes {dimension_semantics = [#tpu.dimension_semantics<parallel>], iteration_bounds = array<i64: 1>, scalar_prefetch = 0 : i64, scratch_operands = 2 : i64, tpu.core_type = #tpu.core_type<tc>, window_params = [{transform_indices = @transform_0, window_bounds = array<i64: 8, 16, 128>}, {transform_indices = @transform_1, window_bounds = array<i64: 8, 4, 128>}, {pipeline_mode = #tpu.pipeline_mode<synchronous>, transform_indices = @transform_2, window_bounds = array<i64: 16, 4>}, {pipeline_mode = #tpu.pipeline_mode<synchronous>, transform_indices = @transform_3, window_bounds = array<i64: 16, 1>}, {pipeline_mode = #tpu.pipeline_mode<synchronous>, transform_indices = @transform_4, window_bounds = array<i64: 32, 16>}, {pipeline_mode = #tpu.pipeline_mode<synchronous>, transform_indices = @transform_5, window_bounds = array<i64: 32, 16>}, {pipeline_mode = #tpu.pipeline_mode<synchronous>, transform_indices = @transform_6, window_bounds = array<i64: 32, 16>}, {pipeline_mode = #tpu.pipeline_mode<synchronous>, transform_indices = @transform_7, window_bounds = array<i64: 32, 1>}, {pipeline_mode = #tpu.pipeline_mode<synchronous>, transform_indices = @transform_8, window_bounds = array<i64: 32, 1>}, {pipeline_mode = #tpu.pipeline_mode<synchronous>, transform_indices = @transform_9, window_bounds = array<i64: 1, 1>}, {pipeline_mode = #tpu.pipeline_mode<synchronous>, transform_indices = @transform_10, window_bounds = array<i64: 16, 32>}, {pipeline_mode = #tpu.pipeline_mode<synchronous>, transform_indices = @transform_11, window_bounds = array<i64: 16, 1>}, {transform_indices = @transform_12, window_bounds = array<i64: 16, 128>}]} {
    %c0 = arith.constant 0 : index
    %c0_0 = arith.constant 0 : index
    %0 = vector.load %arg4[%c0, %c0_0] : memref<16x1xf32, #tpu.memory_space<vmem>>, vector<16x1xf32>
    %1 = vector.shape_cast %0 : vector<16x1xf32> to vector<16x1xf32>
    %2 = vector.broadcast %1 : vector<16x1xf32> to vector<16x128xf32>
    %cst = arith.constant 0.000000e+00 : f32
    %3 = vector.broadcast %cst : f32 to vector<16x128xf32>
    %c0_1 = arith.constant 0 : index
    %c0_2 = arith.constant 0 : index
    %c0_3 = arith.constant 0 : index
    %4 = vector.load %arg1[%c0_1, %c0_2, %c0_3] : memref<8x16x128xf32, #tpu.memory_space<vmem>>, vector<1x16x128xf32>
    %5 = vector.shape_cast %4 : vector<1x16x128xf32> to vector<16x128xf32>
    %c0_4 = arith.constant 0 : index
    %c0_5 = arith.constant 0 : index
    %c0_6 = arith.constant 0 : index
    %6 = vector.load %arg2[%c0_4, %c0_5, %c0_6] : memref<8x4x128xf32, #tpu.memory_space<vmem>>, vector<1x4x128xf32>
    %7 = vector.shape_cast %6 : vector<1x4x128xf32> to vector<4x128xf32>
    %c0_7 = arith.constant 0 : index
    %c0_8 = arith.constant 0 : index
    %8 = vector.load %arg3[%c0_7, %c0_8] : memref<16x4xf32, #tpu.memory_space<vmem>>, vector<16x4xf32>
    %cst_9 = arith.constant dense<0.000000e+00> : vector<16x128xf32>
    %9 = tpu.matmul %8, %7, %cst_9 {dimension_numbers = #tpu.dot_dimension_numbers<[1], [0], [0], [1], [0, 0, 1, 1], [], []>} : vector<16x4xf32>, vector<4x128xf32>, vector<16x128xf32> -> vector<16x128xf32>
    %10 = arith.addf %9, %2 : vector<16x128xf32>
    %cst_10 = arith.constant 0.000000e+00 : f32
    %11 = vector.broadcast %cst_10 : f32 to vector<16x128xf32>
    %12 = arith.maximumf %10, %11 : vector<16x128xf32>
    %13 = arith.addf %5, %12 : vector<16x128xf32>
    %c0_11 = arith.constant 0 : index
    %c0_12 = arith.constant 0 : index
    %c0_13 = arith.constant 0 : index
    %14 = vector.load %arg14[%c0_11, %c0_12, %c0_13] : memref<8x16x128xf32, #tpu.memory_space<vmem>>, vector<1x16x128xf32>
    %15 = vector.shape_cast %14 : vector<1x16x128xf32> to vector<16x128xf32>
    %16 = vector.shape_cast %13 : vector<16x128xf32> to vector<1x16x128xf32>
    tpu.vector_store %arg14[%c0_11, %c0_12, %c0_13], %16 {strides = array<i32>} : memref<8x16x128xf32, #tpu.memory_space<vmem>>, vector<1x16x128xf32>,
    %17 = arith.addf %3, %13 : vector<16x128xf32>
    %c1 = arith.constant 1 : index
    %c0_14 = arith.constant 0 : index
    %c0_15 = arith.constant 0 : index
    %18 = vector.load %arg1[%c1, %c0_14, %c0_15] : memref<8x16x128xf32, #tpu.memory_space<vmem>>, vector<1x16x128xf32>
    %19 = vector.shape_cast %18 : vector<1x16x128xf32> to vector<16x128xf32>
    %c1_16 = arith.constant 1 : index
    %c0_17 = arith.constant 0 : index
    %c0_18 = arith.constant 0 : index
    %20 = vector.load %arg2[%c1_16, %c0_17, %c0_18] : memref<8x4x128xf32, #tpu.memory_space<vmem>>, vector<1x4x128xf32>
    %21 = vector.shape_cast %20 : vector<1x4x128xf32> to vector<4x128xf32>
    %c0_19 = arith.constant 0 : index
    %c0_20 = arith.constant 0 : index
    %22 = vector.load %arg3[%c0_19, %c0_20] : memref<16x4xf32, #tpu.memory_space<vmem>>, vector<16x4xf32>
    %cst_21 = arith.constant dense<0.000000e+00> : vector<16x128xf32>
    %23 = tpu.matmul %22, %21, %cst_21 {dimension_numbers = #tpu.dot_dimension_numbers<[1], [0], [0], [1], [0, 0, 1, 1], [], []>} : vector<16x4xf32>, vector<4x128xf32>, vector<16x128xf32> -> vector<16x128xf32>
    %24 = arith.addf %23, %2 : vector<16x128xf32>
    %cst_22 = arith.constant 0.000000e+00 : f32
    %25 = vector.broadcast %cst_22 : f32 to vector<16x128xf32>
    %26 = arith.maximumf %24, %25 : vector<16x128xf32>
    %27 = arith.addf %19, %26 : vector<16x128xf32>
    %c1_23 = arith.constant 1 : index
    %c0_24 = arith.constant 0 : index
    %c0_25 = arith.constant 0 : index
    %28 = vector.load %arg14[%c1_23, %c0_24, %c0_25] : memref<8x16x128xf32, #tpu.memory_space<vmem>>, vector<1x16x128xf32>
    %29 = vector.shape_cast %28 : vector<1x16x128xf32> to vector<16x128xf32>
    %30 = vector.shape_cast %27 : vector<16x128xf32> to vector<1x16x128xf32>
    tpu.vector_store %arg14[%c1_23, %c0_24, %c0_25], %30 {strides = array<i32>} : memref<8x16x128xf32, #tpu.memory_space<vmem>>, vector<1x16x128xf32>,
    %31 = arith.addf %17, %27 : vector<16x128xf32>
    %c2 = arith.constant 2 : index
    %c0_26 = arith.constant 0 : index
    %c0_27 = arith.constant 0 : index
    %32 = vector.load %arg1[%c2, %c0_26, %c0_27] : memref<8x16x128xf32, #tpu.memory_space<vmem>>, vector<1x16x128xf32>
    %33 = vector.shape_cast %32 : vector<1x16x128xf32> to vector<16x128xf32>
    %c2_28 = arith.constant 2 : index
    %c0_29 = arith.constant 0 : index
    %c0_30 = arith.constant 0 : index
    %34 = vector.load %arg2[%c2_28, %c0_29, %c0_30] : memref<8x4x128xf32, #tpu.memory_space<vmem>>, vector<1x4x128xf32>
    %35 = vector.shape_cast %34 : vector<1x4x128xf32> to vector<4x128xf32>
    %c0_31 = arith.constant 0 : index
    %c0_32 = arith.constant 0 : index
    %36 = vector.load %arg3[%c0_31, %c0_32] : memref<16x4xf32, #tpu.memory_space<vmem>>, vector<16x4xf32>
    %cst_33 = arith.constant dense<0.000000e+00> : vector<16x128xf32>
    %37 = tpu.matmul %36, %35, %cst_33 {dimension_numbers = #tpu.dot_dimension_numbers<[1], [0], [0], [1], [0, 0, 1, 1], [], []>} : vector<16x4xf32>, vector<4x128xf32>, vector<16x128xf32> -> vector<16x128xf32>
    %38 = arith.addf %37, %2 : vector<16x128xf32>
    %cst_34 = arith.constant 0.000000e+00 : f32
    %39 = vector.broadcast %cst_34 : f32 to vector<16x128xf32>
    %40 = arith.maximumf %38, %39 : vector<16x128xf32>
    %41 = arith.addf %33, %40 : vector<16x128xf32>
    %c2_35 = arith.constant 2 : index
    %c0_36 = arith.constant 0 : index
    %c0_37 = arith.constant 0 : index
    %42 = vector.load %arg14[%c2_35, %c0_36, %c0_37] : memref<8x16x128xf32, #tpu.memory_space<vmem>>, vector<1x16x128xf32>
    %43 = vector.shape_cast %42 : vector<1x16x128xf32> to vector<16x128xf32>
    %44 = vector.shape_cast %41 : vector<16x128xf32> to vector<1x16x128xf32>
    tpu.vector_store %arg14[%c2_35, %c0_36, %c0_37], %44 {strides = array<i32>} : memref<8x16x128xf32, #tpu.memory_space<vmem>>, vector<1x16x128xf32>,
    %45 = arith.addf %31, %41 : vector<16x128xf32>
    %c3 = arith.constant 3 : index
    %c0_38 = arith.constant 0 : index
    %c0_39 = arith.constant 0 : index
    %46 = vector.load %arg1[%c3, %c0_38, %c0_39] : memref<8x16x128xf32, #tpu.memory_space<vmem>>, vector<1x16x128xf32>
    %47 = vector.shape_cast %46 : vector<1x16x128xf32> to vector<16x128xf32>
    %c3_40 = arith.constant 3 : index
    %c0_41 = arith.constant 0 : index
    %c0_42 = arith.constant 0 : index
    %48 = vector.load %arg2[%c3_40, %c0_41, %c0_42] : memref<8x4x128xf32, #tpu.memory_space<vmem>>, vector<1x4x128xf32>
    %49 = vector.shape_cast %48 : vector<1x4x128xf32> to vector<4x128xf32>
    %c0_43 = arith.constant 0 : index
    %c0_44 = arith.constant 0 : index
    %50 = vector.load %arg3[%c0_43, %c0_44] : memref<16x4xf32, #tpu.memory_space<vmem>>, vector<16x4xf32>
    %cst_45 = arith.constant dense<0.000000e+00> : vector<16x128xf32>
    %51 = tpu.matmul %50, %49, %cst_45 {dimension_numbers = #tpu.dot_dimension_numbers<[1], [0], [0], [1], [0, 0, 1, 1], [], []>} : vector<16x4xf32>, vector<4x128xf32>, vector<16x128xf32> -> vector<16x128xf32>
    %52 = arith.addf %51, %2 : vector<16x128xf32>
    %cst_46 = arith.constant 0.000000e+00 : f32
    %53 = vector.broadcast %cst_46 : f32 to vector<16x128xf32>
    %54 = arith.maximumf %52, %53 : vector<16x128xf32>
    %55 = arith.addf %47, %54 : vector<16x128xf32>
    %c3_47 = arith.constant 3 : index
    %c0_48 = arith.constant 0 : index
    %c0_49 = arith.constant 0 : index
    %56 = vector.load %arg14[%c3_47, %c0_48, %c0_49] : memref<8x16x128xf32, #tpu.memory_space<vmem>>, vector<1x16x128xf32>
    %57 = vector.shape_cast %56 : vector<1x16x128xf32> to vector<16x128xf32>
    %58 = vector.shape_cast %55 : vector<16x128xf32> to vector<1x16x128xf32>
    tpu.vector_store %arg14[%c3_47, %c0_48, %c0_49], %58 {strides = array<i32>} : memref<8x16x128xf32, #tpu.memory_space<vmem>>, vector<1x16x128xf32>,
    %59 = arith.addf %45, %55 : vector<16x128xf32>
    %c4 = arith.constant 4 : index
    %c0_50 = arith.constant 0 : index
    %c0_51 = arith.constant 0 : index
    %60 = vector.load %arg1[%c4, %c0_50, %c0_51] : memref<8x16x128xf32, #tpu.memory_space<vmem>>, vector<1x16x128xf32>
    %61 = vector.shape_cast %60 : vector<1x16x128xf32> to vector<16x128xf32>
    %c4_52 = arith.constant 4 : index
    %c0_53 = arith.constant 0 : index
    %c0_54 = arith.constant 0 : index
    %62 = vector.load %arg2[%c4_52, %c0_53, %c0_54] : memref<8x4x128xf32, #tpu.memory_space<vmem>>, vector<1x4x128xf32>
    %63 = vector.shape_cast %62 : vector<1x4x128xf32> to vector<4x128xf32>
    %c0_55 = arith.constant 0 : index
    %c0_56 = arith.constant 0 : index
    %64 = vector.load %arg3[%c0_55, %c0_56] : memref<16x4xf32, #tpu.memory_space<vmem>>, vector<16x4xf32>
    %cst_57 = arith.constant dense<0.000000e+00> : vector<16x128xf32>
    %65 = tpu.matmul %64, %63, %cst_57 {dimension_numbers = #tpu.dot_dimension_numbers<[1], [0], [0], [1], [0, 0, 1, 1], [], []>} : vector<16x4xf32>, vector<4x128xf32>, vector<16x128xf32> -> vector<16x128xf32>
    %66 = arith.addf %65, %2 : vector<16x128xf32>
    %cst_58 = arith.constant 0.000000e+00 : f32
    %67 = vector.broadcast %cst_58 : f32 to vector<16x128xf32>
    %68 = arith.maximumf %66, %67 : vector<16x128xf32>
    %69 = arith.addf %61, %68 : vector<16x128xf32>
    %c4_59 = arith.constant 4 : index
    %c0_60 = arith.constant 0 : index
    %c0_61 = arith.constant 0 : index
    %70 = vector.load %arg14[%c4_59, %c0_60, %c0_61] : memref<8x16x128xf32, #tpu.memory_space<vmem>>, vector<1x16x128xf32>
    %71 = vector.shape_cast %70 : vector<1x16x128xf32> to vector<16x128xf32>
    %72 = vector.shape_cast %69 : vector<16x128xf32> to vector<1x16x128xf32>
    tpu.vector_store %arg14[%c4_59, %c0_60, %c0_61], %72 {strides = array<i32>} : memref<8x16x128xf32, #tpu.memory_space<vmem>>, vector<1x16x128xf32>,
    %73 = arith.addf %59, %69 : vector<16x128xf32>
    %c5 = arith.constant 5 : index
    %c0_62 = arith.constant 0 : index
    %c0_63 = arith.constant 0 : index
    %74 = vector.load %arg1[%c5, %c0_62, %c0_63] : memref<8x16x128xf32, #tpu.memory_space<vmem>>, vector<1x16x128xf32>
    %75 = vector.shape_cast %74 : vector<1x16x128xf32> to vector<16x128xf32>
    %c5_64 = arith.constant 5 : index
    %c0_65 = arith.constant 0 : index
    %c0_66 = arith.constant 0 : index
    %76 = vector.load %arg2[%c5_64, %c0_65, %c0_66] : memref<8x4x128xf32, #tpu.memory_space<vmem>>, vector<1x4x128xf32>
    %77 = vector.shape_cast %76 : vector<1x4x128xf32> to vector<4x128xf32>
    %c0_67 = arith.constant 0 : index
    %c0_68 = arith.constant 0 : index
    %78 = vector.load %arg3[%c0_67, %c0_68] : memref<16x4xf32, #tpu.memory_space<vmem>>, vector<16x4xf32>
    %cst_69 = arith.constant dense<0.000000e+00> : vector<16x128xf32>
    %79 = tpu.matmul %78, %77, %cst_69 {dimension_numbers = #tpu.dot_dimension_numbers<[1], [0], [0], [1], [0, 0, 1, 1], [], []>} : vector<16x4xf32>, vector<4x128xf32>, vector<16x128xf32> -> vector<16x128xf32>
    %80 = arith.addf %79, %2 : vector<16x128xf32>
    %cst_70 = arith.constant 0.000000e+00 : f32
    %81 = vector.broadcast %cst_70 : f32 to vector<16x128xf32>
    %82 = arith.maximumf %80, %81 : vector<16x128xf32>
    %83 = arith.addf %75, %82 : vector<16x128xf32>
    %c5_71 = arith.constant 5 : index
    %c0_72 = arith.constant 0 : index
    %c0_73 = arith.constant 0 : index
    %84 = vector.load %arg14[%c5_71, %c0_72, %c0_73] : memref<8x16x128xf32, #tpu.memory_space<vmem>>, vector<1x16x128xf32>
    %85 = vector.shape_cast %84 : vector<1x16x128xf32> to vector<16x128xf32>
    %86 = vector.shape_cast %83 : vector<16x128xf32> to vector<1x16x128xf32>
    tpu.vector_store %arg14[%c5_71, %c0_72, %c0_73], %86 {strides = array<i32>} : memref<8x16x128xf32, #tpu.memory_space<vmem>>, vector<1x16x128xf32>,
    %87 = arith.addf %73, %83 : vector<16x128xf32>
    %c6 = arith.constant 6 : index
    %c0_74 = arith.constant 0 : index
    %c0_75 = arith.constant 0 : index
    %88 = vector.load %arg1[%c6, %c0_74, %c0_75] : memref<8x16x128xf32, #tpu.memory_space<vmem>>, vector<1x16x128xf32>
    %89 = vector.shape_cast %88 : vector<1x16x128xf32> to vector<16x128xf32>
    %c6_76 = arith.constant 6 : index
    %c0_77 = arith.constant 0 : index
    %c0_78 = arith.constant 0 : index
    %90 = vector.load %arg2[%c6_76, %c0_77, %c0_78] : memref<8x4x128xf32, #tpu.memory_space<vmem>>, vector<1x4x128xf32>
    %91 = vector.shape_cast %90 : vector<1x4x128xf32> to vector<4x128xf32>
    %c0_79 = arith.constant 0 : index
    %c0_80 = arith.constant 0 : index
    %92 = vector.load %arg3[%c0_79, %c0_80] : memref<16x4xf32, #tpu.memory_space<vmem>>, vector<16x4xf32>
    %cst_81 = arith.constant dense<0.000000e+00> : vector<16x128xf32>
    %93 = tpu.matmul %92, %91, %cst_81 {dimension_numbers = #tpu.dot_dimension_numbers<[1], [0], [0], [1], [0, 0, 1, 1], [], []>} : vector<16x4xf32>, vector<4x128xf32>, vector<16x128xf32> -> vector<16x128xf32>
    %94 = arith.addf %93, %2 : vector<16x128xf32>
    %cst_82 = arith.constant 0.000000e+00 : f32
    %95 = vector.broadcast %cst_82 : f32 to vector<16x128xf32>
    %96 = arith.maximumf %94, %95 : vector<16x128xf32>
    %97 = arith.addf %89, %96 : vector<16x128xf32>
    %c6_83 = arith.constant 6 : index
    %c0_84 = arith.constant 0 : index
    %c0_85 = arith.constant 0 : index
    %98 = vector.load %arg14[%c6_83, %c0_84, %c0_85] : memref<8x16x128xf32, #tpu.memory_space<vmem>>, vector<1x16x128xf32>
    %99 = vector.shape_cast %98 : vector<1x16x128xf32> to vector<16x128xf32>
    %100 = vector.shape_cast %97 : vector<16x128xf32> to vector<1x16x128xf32>
    tpu.vector_store %arg14[%c6_83, %c0_84, %c0_85], %100 {strides = array<i32>} : memref<8x16x128xf32, #tpu.memory_space<vmem>>, vector<1x16x128xf32>,
    %101 = arith.addf %87, %97 : vector<16x128xf32>
    %c7 = arith.constant 7 : index
    %c0_86 = arith.constant 0 : index
    %c0_87 = arith.constant 0 : index
    %102 = vector.load %arg1[%c7, %c0_86, %c0_87] : memref<8x16x128xf32, #tpu.memory_space<vmem>>, vector<1x16x128xf32>
    %103 = vector.shape_cast %102 : vector<1x16x128xf32> to vector<16x128xf32>
    %c7_88 = arith.constant 7 : index
    %c0_89 = arith.constant 0 : index
    %c0_90 = arith.constant 0 : index
    %104 = vector.load %arg2[%c7_88, %c0_89, %c0_90] : memref<8x4x128xf32, #tpu.memory_space<vmem>>, vector<1x4x128xf32>
    %105 = vector.shape_cast %104 : vector<1x4x128xf32> to vector<4x128xf32>
    %c0_91 = arith.constant 0 : index
    %c0_92 = arith.constant 0 : index
    %106 = vector.load %arg3[%c0_91, %c0_92] : memref<16x4xf32, #tpu.memory_space<vmem>>, vector<16x4xf32>
    %cst_93 = arith.constant dense<0.000000e+00> : vector<16x128xf32>
    %107 = tpu.matmul %106, %105, %cst_93 {dimension_numbers = #tpu.dot_dimension_numbers<[1], [0], [0], [1], [0, 0, 1, 1], [], []>} : vector<16x4xf32>, vector<4x128xf32>, vector<16x128xf32> -> vector<16x128xf32>
    %108 = arith.addf %107, %2 : vector<16x128xf32>
    %cst_94 = arith.constant 0.000000e+00 : f32
    %109 = vector.broadcast %cst_94 : f32 to vector<16x128xf32>
    %110 = arith.maximumf %108, %109 : vector<16x128xf32>
    %111 = arith.addf %103, %110 : vector<16x128xf32>
    %c7_95 = arith.constant 7 : index
    %c0_96 = arith.constant 0 : index
    %c0_97 = arith.constant 0 : index
    %112 = vector.load %arg14[%c7_95, %c0_96, %c0_97] : memref<8x16x128xf32, #tpu.memory_space<vmem>>, vector<1x16x128xf32>
    %113 = vector.shape_cast %112 : vector<1x16x128xf32> to vector<16x128xf32>
    %114 = vector.shape_cast %111 : vector<16x128xf32> to vector<1x16x128xf32>
    tpu.vector_store %arg14[%c7_95, %c0_96, %c0_97], %114 {strides = array<i32>} : memref<8x16x128xf32, #tpu.memory_space<vmem>>, vector<1x16x128xf32>,
    %115 = arith.addf %101, %111 : vector<16x128xf32>
    %cst_98 = arith.constant 1.250000e-01 : f32
    %116 = vector.broadcast %cst_98 : f32 to vector<16x128xf32>
    %117 = arith.mulf %115, %116 : vector<16x128xf32>
    %cst_99 = arith.constant 0.000000e+00 : f32
    %118 = vector.broadcast %cst_99 : f32 to vector<16x128xf32>
    %c0_100 = arith.constant 0 : index
    %c0_101 = arith.constant 0 : index
    %c0_102 = arith.constant 0 : index
    %119 = vector.load %arg14[%c0_100, %c0_101, %c0_102] : memref<8x16x128xf32, #tpu.memory_space<vmem>>, vector<1x16x128xf32>
    %120 = vector.shape_cast %119 : vector<1x16x128xf32> to vector<16x128xf32>
    %121 = arith.subf %120, %117 : vector<16x128xf32>
    %122 = arith.mulf %121, %121 : vector<16x128xf32>
    %123 = arith.addf %118, %122 : vector<16x128xf32>
    %c1_103 = arith.constant 1 : index
    %c0_104 = arith.constant 0 : index
    %c0_105 = arith.constant 0 : index
    %124 = vector.load %arg14[%c1_103, %c0_104, %c0_105] : memref<8x16x128xf32, #tpu.memory_space<vmem>>, vector<1x16x128xf32>
    %125 = vector.shape_cast %124 : vector<1x16x128xf32> to vector<16x128xf32>
    %126 = arith.subf %125, %117 : vector<16x128xf32>
    %127 = arith.mulf %126, %126 : vector<16x128xf32>
    %128 = arith.addf %123, %127 : vector<16x128xf32>
    %c2_106 = arith.constant 2 : index
    %c0_107 = arith.constant 0 : index
    %c0_108 = arith.constant 0 : index
    %129 = vector.load %arg14[%c2_106, %c0_107, %c0_108] : memref<8x16x128xf32, #tpu.memory_space<vmem>>, vector<1x16x128xf32>
    %130 = vector.shape_cast %129 : vector<1x16x128xf32> to vector<16x128xf32>
    %131 = arith.subf %130, %117 : vector<16x128xf32>
    %132 = arith.mulf %131, %131 : vector<16x128xf32>
    %133 = arith.addf %128, %132 : vector<16x128xf32>
    %c3_109 = arith.constant 3 : index
    %c0_110 = arith.constant 0 : index
    %c0_111 = arith.constant 0 : index
    %134 = vector.load %arg14[%c3_109, %c0_110, %c0_111] : memref<8x16x128xf32, #tpu.memory_space<vmem>>, vector<1x16x128xf32>
    %135 = vector.shape_cast %134 : vector<1x16x128xf32> to vector<16x128xf32>
    %136 = arith.subf %135, %117 : vector<16x128xf32>
    %137 = arith.mulf %136, %136 : vector<16x128xf32>
    %138 = arith.addf %133, %137 : vector<16x128xf32>
    %c4_112 = arith.constant 4 : index
    %c0_113 = arith.constant 0 : index
    %c0_114 = arith.constant 0 : index
    %139 = vector.load %arg14[%c4_112, %c0_113, %c0_114] : memref<8x16x128xf32, #tpu.memory_space<vmem>>, vector<1x16x128xf32>
    %140 = vector.shape_cast %139 : vector<1x16x128xf32> to vector<16x128xf32>
    %141 = arith.subf %140, %117 : vector<16x128xf32>
    %142 = arith.mulf %141, %141 : vector<16x128xf32>
    %143 = arith.addf %138, %142 : vector<16x128xf32>
    %c5_115 = arith.constant 5 : index
    %c0_116 = arith.constant 0 : index
    %c0_117 = arith.constant 0 : index
    %144 = vector.load %arg14[%c5_115, %c0_116, %c0_117] : memref<8x16x128xf32, #tpu.memory_space<vmem>>, vector<1x16x128xf32>
    %145 = vector.shape_cast %144 : vector<1x16x128xf32> to vector<16x128xf32>
    %146 = arith.subf %145, %117 : vector<16x128xf32>
    %147 = arith.mulf %146, %146 : vector<16x128xf32>
    %148 = arith.addf %143, %147 : vector<16x128xf32>
    %c6_118 = arith.constant 6 : index
    %c0_119 = arith.constant 0 : index
    %c0_120 = arith.constant 0 : index
    %149 = vector.load %arg14[%c6_118, %c0_119, %c0_120] : memref<8x16x128xf32, #tpu.memory_space<vmem>>, vector<1x16x128xf32>
    %150 = vector.shape_cast %149 : vector<1x16x128xf32> to vector<16x128xf32>
    %151 = arith.subf %150, %117 : vector<16x128xf32>
    %152 = arith.mulf %151, %151 : vector<16x128xf32>
    %153 = arith.addf %148, %152 : vector<16x128xf32>
    %c7_121 = arith.constant 7 : index
    %c0_122 = arith.constant 0 : index
    %c0_123 = arith.constant 0 : index
    %154 = vector.load %arg14[%c7_121, %c0_122, %c0_123] : memref<8x16x128xf32, #tpu.memory_space<vmem>>, vector<1x16x128xf32>
    %155 = vector.shape_cast %154 : vector<1x16x128xf32> to vector<16x128xf32>
    %156 = arith.subf %155, %117 : vector<16x128xf32>
    %157 = arith.mulf %156, %156 : vector<16x128xf32>
    %158 = arith.addf %153, %157 : vector<16x128xf32>
    %cst_124 = arith.constant 0.142857149 : f32
    %159 = vector.broadcast %cst_124 : f32 to vector<16x128xf32>
    %160 = arith.mulf %158, %159 : vector<16x128xf32>
    %c0_125 = arith.constant 0 : index
    %c0_126 = arith.constant 0 : index
    %161 = vector.load %arg6[%c0_125, %c0_126] : memref<32x16xf32, #tpu.memory_space<vmem>>, vector<32x16xf32>
    %cst_127 = arith.constant dense<0.000000e+00> : vector<32x128xf32>
    %162 = tpu.matmul %161, %160, %cst_127 {dimension_numbers = #tpu.dot_dimension_numbers<[1], [0], [0], [1], [0, 0, 1, 1], [], []>} : vector<32x16xf32>, vector<16x128xf32>, vector<32x128xf32> -> vector<32x128xf32>
    %c0_128 = arith.constant 0 : index
    %c0_129 = arith.constant 0 : index
    %163 = vector.load %arg7[%c0_128, %c0_129] : memref<32x16xf32, #tpu.memory_space<vmem>>, vector<32x16xf32>
    %cst_130 = arith.constant dense<0.000000e+00> : vector<32x128xf32>
    %164 = tpu.matmul %163, %117, %cst_130 {dimension_numbers = #tpu.dot_dimension_numbers<[1], [0], [0], [1], [0, 0, 1, 1], [], []>} : vector<32x16xf32>, vector<16x128xf32>, vector<32x128xf32> -> vector<32x128xf32>
    %165 = arith.addf %162, %164 : vector<32x128xf32>
    %c0_131 = arith.constant 0 : index
    %c0_132 = arith.constant 0 : index
    %166 = vector.load %arg8[%c0_131, %c0_132] : memref<32x1xf32, #tpu.memory_space<vmem>>, vector<32x1xf32>
    %167 = vector.shape_cast %166 : vector<32x1xf32> to vector<32x1xf32>
    %168 = vector.broadcast %167 : vector<32x1xf32> to vector<32x128xf32>
    %169 = arith.addf %165, %168 : vector<32x128xf32>
    %c0_133 = arith.constant 0 : index
    %c0_134 = arith.constant 0 : index
    %170 = vector.load %arg9[%c0_133, %c0_134] : memref<32x1xf32, #tpu.memory_space<vmem>>, vector<32x1xf32>
    %171 = vector.shape_cast %170 : vector<32x1xf32> to vector<32x1xf32>
    %172 = vector.broadcast %171 : vector<32x1xf32> to vector<32x128xf32>
    %c0_135 = arith.constant 0 : index
    %c0_136 = arith.constant 0 : index
    %173 = vector.load %arg10[%c0_135, %c0_136] : memref<1x1xf32, #tpu.memory_space<vmem>>, vector<1x1xf32>
    %174 = vector.shape_cast %173 : vector<1x1xf32> to vector<1x1xf32>
    %175 = vector.broadcast %174 : vector<1x1xf32> to vector<1x128xf32>
    %c0_137 = arith.constant 0 : index
    %c0_138 = arith.constant 0 : index
    %176 = vector.load %arg5[%c0_137, %c0_138] : memref<32x16xf32, #tpu.memory_space<vmem>>, vector<32x16xf32>
    %c0_139 = arith.constant 0 : index
    %c0_140 = arith.constant 0 : index
    %c0_141 = arith.constant 0 : index
    %177 = vector.load %arg14[%c0_139, %c0_140, %c0_141] : memref<8x16x128xf32, #tpu.memory_space<vmem>>, vector<1x16x128xf32>
    %178 = vector.shape_cast %177 : vector<1x16x128xf32> to vector<16x128xf32>
    %cst_142 = arith.constant dense<0.000000e+00> : vector<32x128xf32>
    %179 = tpu.matmul %176, %178, %cst_142 {dimension_numbers = #tpu.dot_dimension_numbers<[1], [0], [0], [1], [0, 0, 1, 1], [], []>} : vector<32x16xf32>, vector<16x128xf32>, vector<32x128xf32> -> vector<32x128xf32>
    %180 = arith.addf %179, %169 : vector<32x128xf32>
    %cst_143 = arith.constant 0.000000e+00 : f32
    %181 = vector.broadcast %cst_143 : f32 to vector<32x128xf32>
    %182 = arith.maximumf %180, %181 : vector<32x128xf32>
    %c0_144 = arith.constant 0 : index
    %c0_145 = arith.constant 0 : index
    %c0_146 = arith.constant 0 : index
    %183 = vector.load %arg15[%c0_144, %c0_145, %c0_146] : memref<8x32x128xf32, #tpu.memory_space<vmem>>, vector<1x32x128xf32>
    %184 = vector.shape_cast %183 : vector<1x32x128xf32> to vector<32x128xf32>
    %185 = vector.shape_cast %182 : vector<32x128xf32> to vector<1x32x128xf32>
    tpu.vector_store %arg15[%c0_144, %c0_145, %c0_146], %185 {strides = array<i32>} : memref<8x32x128xf32, #tpu.memory_space<vmem>>, vector<1x32x128xf32>,
    %186 = arith.mulf %182, %172 : vector<32x128xf32>
    %cst_147 = arith.constant dense<0.000000e+00> : vector<128xf32>
    %187 = vector.multi_reduction <add>, %186, %cst_147 [0] : vector<32x128xf32> to vector<128xf32>
    %188 = vector.shape_cast %187 : vector<128xf32> to vector<1x128xf32>
    %189 = arith.addf %188, %175 : vector<1x128xf32>
    %cst_148 = arith.constant 0.000000e+00 : f32
    %190 = vector.broadcast %cst_148 : f32 to vector<1x128xf32>
    %191 = arith.maximumf %189, %190 : vector<1x128xf32>
    %c0_149 = arith.constant 0 : index
    %c0_150 = arith.constant 0 : index
    %192 = vector.load %arg5[%c0_149, %c0_150] : memref<32x16xf32, #tpu.memory_space<vmem>>, vector<32x16xf32>
    %c1_151 = arith.constant 1 : index
    %c0_152 = arith.constant 0 : index
    %c0_153 = arith.constant 0 : index
    %193 = vector.load %arg14[%c1_151, %c0_152, %c0_153] : memref<8x16x128xf32, #tpu.memory_space<vmem>>, vector<1x16x128xf32>
    %194 = vector.shape_cast %193 : vector<1x16x128xf32> to vector<16x128xf32>
    %cst_154 = arith.constant dense<0.000000e+00> : vector<32x128xf32>
    %195 = tpu.matmul %192, %194, %cst_154 {dimension_numbers = #tpu.dot_dimension_numbers<[1], [0], [0], [1], [0, 0, 1, 1], [], []>} : vector<32x16xf32>, vector<16x128xf32>, vector<32x128xf32> -> vector<32x128xf32>
    %196 = arith.addf %195, %169 : vector<32x128xf32>
    %cst_155 = arith.constant 0.000000e+00 : f32
    %197 = vector.broadcast %cst_155 : f32 to vector<32x128xf32>
    %198 = arith.maximumf %196, %197 : vector<32x128xf32>
    %c1_156 = arith.constant 1 : index
    %c0_157 = arith.constant 0 : index
    %c0_158 = arith.constant 0 : index
    %199 = vector.load %arg15[%c1_156, %c0_157, %c0_158] : memref<8x32x128xf32, #tpu.memory_space<vmem>>, vector<1x32x128xf32>
    %200 = vector.shape_cast %199 : vector<1x32x128xf32> to vector<32x128xf32>
    %201 = vector.shape_cast %198 : vector<32x128xf32> to vector<1x32x128xf32>
    tpu.vector_store %arg15[%c1_156, %c0_157, %c0_158], %201 {strides = array<i32>} : memref<8x32x128xf32, #tpu.memory_space<vmem>>, vector<1x32x128xf32>,
    %202 = arith.mulf %198, %172 : vector<32x128xf32>
    %cst_159 = arith.constant dense<0.000000e+00> : vector<128xf32>
    %203 = vector.multi_reduction <add>, %202, %cst_159 [0] : vector<32x128xf32> to vector<128xf32>
    %204 = vector.shape_cast %203 : vector<128xf32> to vector<1x128xf32>
    %205 = arith.addf %204, %175 : vector<1x128xf32>
    %cst_160 = arith.constant 0.000000e+00 : f32
    %206 = vector.broadcast %cst_160 : f32 to vector<1x128xf32>
    %207 = arith.maximumf %205, %206 : vector<1x128xf32>
    %c0_161 = arith.constant 0 : index
    %c0_162 = arith.constant 0 : index
    %208 = vector.load %arg5[%c0_161, %c0_162] : memref<32x16xf32, #tpu.memory_space<vmem>>, vector<32x16xf32>
    %c2_163 = arith.constant 2 : index
    %c0_164 = arith.constant 0 : index
    %c0_165 = arith.constant 0 : index
    %209 = vector.load %arg14[%c2_163, %c0_164, %c0_165] : memref<8x16x128xf32, #tpu.memory_space<vmem>>, vector<1x16x128xf32>
    %210 = vector.shape_cast %209 : vector<1x16x128xf32> to vector<16x128xf32>
    %cst_166 = arith.constant dense<0.000000e+00> : vector<32x128xf32>
    %211 = tpu.matmul %208, %210, %cst_166 {dimension_numbers = #tpu.dot_dimension_numbers<[1], [0], [0], [1], [0, 0, 1, 1], [], []>} : vector<32x16xf32>, vector<16x128xf32>, vector<32x128xf32> -> vector<32x128xf32>
    %212 = arith.addf %211, %169 : vector<32x128xf32>
    %cst_167 = arith.constant 0.000000e+00 : f32
    %213 = vector.broadcast %cst_167 : f32 to vector<32x128xf32>
    %214 = arith.maximumf %212, %213 : vector<32x128xf32>
    %c2_168 = arith.constant 2 : index
    %c0_169 = arith.constant 0 : index
    %c0_170 = arith.constant 0 : index
    %215 = vector.load %arg15[%c2_168, %c0_169, %c0_170] : memref<8x32x128xf32, #tpu.memory_space<vmem>>, vector<1x32x128xf32>
    %216 = vector.shape_cast %215 : vector<1x32x128xf32> to vector<32x128xf32>
    %217 = vector.shape_cast %214 : vector<32x128xf32> to vector<1x32x128xf32>
    tpu.vector_store %arg15[%c2_168, %c0_169, %c0_170], %217 {strides = array<i32>} : memref<8x32x128xf32, #tpu.memory_space<vmem>>, vector<1x32x128xf32>,
    %218 = arith.mulf %214, %172 : vector<32x128xf32>
    %cst_171 = arith.constant dense<0.000000e+00> : vector<128xf32>
    %219 = vector.multi_reduction <add>, %218, %cst_171 [0] : vector<32x128xf32> to vector<128xf32>
    %220 = vector.shape_cast %219 : vector<128xf32> to vector<1x128xf32>
    %221 = arith.addf %220, %175 : vector<1x128xf32>
    %cst_172 = arith.constant 0.000000e+00 : f32
    %222 = vector.broadcast %cst_172 : f32 to vector<1x128xf32>
    %223 = arith.maximumf %221, %222 : vector<1x128xf32>
    %c0_173 = arith.constant 0 : index
    %c0_174 = arith.constant 0 : index
    %224 = vector.load %arg5[%c0_173, %c0_174] : memref<32x16xf32, #tpu.memory_space<vmem>>, vector<32x16xf32>
    %c3_175 = arith.constant 3 : index
    %c0_176 = arith.constant 0 : index
    %c0_177 = arith.constant 0 : index
    %225 = vector.load %arg14[%c3_175, %c0_176, %c0_177] : memref<8x16x128xf32, #tpu.memory_space<vmem>>, vector<1x16x128xf32>
    %226 = vector.shape_cast %225 : vector<1x16x128xf32> to vector<16x128xf32>
    %cst_178 = arith.constant dense<0.000000e+00> : vector<32x128xf32>
    %227 = tpu.matmul %224, %226, %cst_178 {dimension_numbers = #tpu.dot_dimension_numbers<[1], [0], [0], [1], [0, 0, 1, 1], [], []>} : vector<32x16xf32>, vector<16x128xf32>, vector<32x128xf32> -> vector<32x128xf32>
    %228 = arith.addf %227, %169 : vector<32x128xf32>
    %cst_179 = arith.constant 0.000000e+00 : f32
    %229 = vector.broadcast %cst_179 : f32 to vector<32x128xf32>
    %230 = arith.maximumf %228, %229 : vector<32x128xf32>
    %c3_180 = arith.constant 3 : index
    %c0_181 = arith.constant 0 : index
    %c0_182 = arith.constant 0 : index
    %231 = vector.load %arg15[%c3_180, %c0_181, %c0_182] : memref<8x32x128xf32, #tpu.memory_space<vmem>>, vector<1x32x128xf32>
    %232 = vector.shape_cast %231 : vector<1x32x128xf32> to vector<32x128xf32>
    %233 = vector.shape_cast %230 : vector<32x128xf32> to vector<1x32x128xf32>
    tpu.vector_store %arg15[%c3_180, %c0_181, %c0_182], %233 {strides = array<i32>} : memref<8x32x128xf32, #tpu.memory_space<vmem>>, vector<1x32x128xf32>,
    %234 = arith.mulf %230, %172 : vector<32x128xf32>
    %cst_183 = arith.constant dense<0.000000e+00> : vector<128xf32>
    %235 = vector.multi_reduction <add>, %234, %cst_183 [0] : vector<32x128xf32> to vector<128xf32>
    %236 = vector.shape_cast %235 : vector<128xf32> to vector<1x128xf32>
    %237 = arith.addf %236, %175 : vector<1x128xf32>
    %cst_184 = arith.constant 0.000000e+00 : f32
    %238 = vector.broadcast %cst_184 : f32 to vector<1x128xf32>
    %239 = arith.maximumf %237, %238 : vector<1x128xf32>
    %c0_185 = arith.constant 0 : index
    %c0_186 = arith.constant 0 : index
    %240 = vector.load %arg5[%c0_185, %c0_186] : memref<32x16xf32, #tpu.memory_space<vmem>>, vector<32x16xf32>
    %c4_187 = arith.constant 4 : index
    %c0_188 = arith.constant 0 : index
    %c0_189 = arith.constant 0 : index
    %241 = vector.load %arg14[%c4_187, %c0_188, %c0_189] : memref<8x16x128xf32, #tpu.memory_space<vmem>>, vector<1x16x128xf32>
    %242 = vector.shape_cast %241 : vector<1x16x128xf32> to vector<16x128xf32>
    %cst_190 = arith.constant dense<0.000000e+00> : vector<32x128xf32>
    %243 = tpu.matmul %240, %242, %cst_190 {dimension_numbers = #tpu.dot_dimension_numbers<[1], [0], [0], [1], [0, 0, 1, 1], [], []>} : vector<32x16xf32>, vector<16x128xf32>, vector<32x128xf32> -> vector<32x128xf32>
    %244 = arith.addf %243, %169 : vector<32x128xf32>
    %cst_191 = arith.constant 0.000000e+00 : f32
    %245 = vector.broadcast %cst_191 : f32 to vector<32x128xf32>
    %246 = arith.maximumf %244, %245 : vector<32x128xf32>
    %c4_192 = arith.constant 4 : index
    %c0_193 = arith.constant 0 : index
    %c0_194 = arith.constant 0 : index
    %247 = vector.load %arg15[%c4_192, %c0_193, %c0_194] : memref<8x32x128xf32, #tpu.memory_space<vmem>>, vector<1x32x128xf32>
    %248 = vector.shape_cast %247 : vector<1x32x128xf32> to vector<32x128xf32>
    %249 = vector.shape_cast %246 : vector<32x128xf32> to vector<1x32x128xf32>
    tpu.vector_store %arg15[%c4_192, %c0_193, %c0_194], %249 {strides = array<i32>} : memref<8x32x128xf32, #tpu.memory_space<vmem>>, vector<1x32x128xf32>,
    %250 = arith.mulf %246, %172 : vector<32x128xf32>
    %cst_195 = arith.constant dense<0.000000e+00> : vector<128xf32>
    %251 = vector.multi_reduction <add>, %250, %cst_195 [0] : vector<32x128xf32> to vector<128xf32>
    %252 = vector.shape_cast %251 : vector<128xf32> to vector<1x128xf32>
    %253 = arith.addf %252, %175 : vector<1x128xf32>
    %cst_196 = arith.constant 0.000000e+00 : f32
    %254 = vector.broadcast %cst_196 : f32 to vector<1x128xf32>
    %255 = arith.maximumf %253, %254 : vector<1x128xf32>
    %c0_197 = arith.constant 0 : index
    %c0_198 = arith.constant 0 : index
    %256 = vector.load %arg5[%c0_197, %c0_198] : memref<32x16xf32, #tpu.memory_space<vmem>>, vector<32x16xf32>
    %c5_199 = arith.constant 5 : index
    %c0_200 = arith.constant 0 : index
    %c0_201 = arith.constant 0 : index
    %257 = vector.load %arg14[%c5_199, %c0_200, %c0_201] : memref<8x16x128xf32, #tpu.memory_space<vmem>>, vector<1x16x128xf32>
    %258 = vector.shape_cast %257 : vector<1x16x128xf32> to vector<16x128xf32>
    %cst_202 = arith.constant dense<0.000000e+00> : vector<32x128xf32>
    %259 = tpu.matmul %256, %258, %cst_202 {dimension_numbers = #tpu.dot_dimension_numbers<[1], [0], [0], [1], [0, 0, 1, 1], [], []>} : vector<32x16xf32>, vector<16x128xf32>, vector<32x128xf32> -> vector<32x128xf32>
    %260 = arith.addf %259, %169 : vector<32x128xf32>
    %cst_203 = arith.constant 0.000000e+00 : f32
    %261 = vector.broadcast %cst_203 : f32 to vector<32x128xf32>
    %262 = arith.maximumf %260, %261 : vector<32x128xf32>
    %c5_204 = arith.constant 5 : index
    %c0_205 = arith.constant 0 : index
    %c0_206 = arith.constant 0 : index
    %263 = vector.load %arg15[%c5_204, %c0_205, %c0_206] : memref<8x32x128xf32, #tpu.memory_space<vmem>>, vector<1x32x128xf32>
    %264 = vector.shape_cast %263 : vector<1x32x128xf32> to vector<32x128xf32>
    %265 = vector.shape_cast %262 : vector<32x128xf32> to vector<1x32x128xf32>
    tpu.vector_store %arg15[%c5_204, %c0_205, %c0_206], %265 {strides = array<i32>} : memref<8x32x128xf32, #tpu.memory_space<vmem>>, vector<1x32x128xf32>,
    %266 = arith.mulf %262, %172 : vector<32x128xf32>
    %cst_207 = arith.constant dense<0.000000e+00> : vector<128xf32>
    %267 = vector.multi_reduction <add>, %266, %cst_207 [0] : vector<32x128xf32> to vector<128xf32>
    %268 = vector.shape_cast %267 : vector<128xf32> to vector<1x128xf32>
    %269 = arith.addf %268, %175 : vector<1x128xf32>
    %cst_208 = arith.constant 0.000000e+00 : f32
    %270 = vector.broadcast %cst_208 : f32 to vector<1x128xf32>
    %271 = arith.maximumf %269, %270 : vector<1x128xf32>
    %c0_209 = arith.constant 0 : index
    %c0_210 = arith.constant 0 : index
    %272 = vector.load %arg5[%c0_209, %c0_210] : memref<32x16xf32, #tpu.memory_space<vmem>>, vector<32x16xf32>
    %c6_211 = arith.constant 6 : index
    %c0_212 = arith.constant 0 : index
    %c0_213 = arith.constant 0 : index
    %273 = vector.load %arg14[%c6_211, %c0_212, %c0_213] : memref<8x16x128xf32, #tpu.memory_space<vmem>>, vector<1x16x128xf32>
    %274 = vector.shape_cast %273 : vector<1x16x128xf32> to vector<16x128xf32>
    %cst_214 = arith.constant dense<0.000000e+00> : vector<32x128xf32>
    %275 = tpu.matmul %272, %274, %cst_214 {dimension_numbers = #tpu.dot_dimension_numbers<[1], [0], [0], [1], [0, 0, 1, 1], [], []>} : vector<32x16xf32>, vector<16x128xf32>, vector<32x128xf32> -> vector<32x128xf32>
    %276 = arith.addf %275, %169 : vector<32x128xf32>
    %cst_215 = arith.constant 0.000000e+00 : f32
    %277 = vector.broadcast %cst_215 : f32 to vector<32x128xf32>
    %278 = arith.maximumf %276, %277 : vector<32x128xf32>
    %c6_216 = arith.constant 6 : index
    %c0_217 = arith.constant 0 : index
    %c0_218 = arith.constant 0 : index
    %279 = vector.load %arg15[%c6_216, %c0_217, %c0_218] : memref<8x32x128xf32, #tpu.memory_space<vmem>>, vector<1x32x128xf32>
    %280 = vector.shape_cast %279 : vector<1x32x128xf32> to vector<32x128xf32>
    %281 = vector.shape_cast %278 : vector<32x128xf32> to vector<1x32x128xf32>
    tpu.vector_store %arg15[%c6_216, %c0_217, %c0_218], %281 {strides = array<i32>} : memref<8x32x128xf32, #tpu.memory_space<vmem>>, vector<1x32x128xf32>,
    %282 = arith.mulf %278, %172 : vector<32x128xf32>
    %cst_219 = arith.constant dense<0.000000e+00> : vector<128xf32>
    %283 = vector.multi_reduction <add>, %282, %cst_219 [0] : vector<32x128xf32> to vector<128xf32>
    %284 = vector.shape_cast %283 : vector<128xf32> to vector<1x128xf32>
    %285 = arith.addf %284, %175 : vector<1x128xf32>
    %cst_220 = arith.constant 0.000000e+00 : f32
    %286 = vector.broadcast %cst_220 : f32 to vector<1x128xf32>
    %287 = arith.maximumf %285, %286 : vector<1x128xf32>
    %c0_221 = arith.constant 0 : index
    %c0_222 = arith.constant 0 : index
    %288 = vector.load %arg5[%c0_221, %c0_222] : memref<32x16xf32, #tpu.memory_space<vmem>>, vector<32x16xf32>
    %c7_223 = arith.constant 7 : index
    %c0_224 = arith.constant 0 : index
    %c0_225 = arith.constant 0 : index
    %289 = vector.load %arg14[%c7_223, %c0_224, %c0_225] : memref<8x16x128xf32, #tpu.memory_space<vmem>>, vector<1x16x128xf32>
    %290 = vector.shape_cast %289 : vector<1x16x128xf32> to vector<16x128xf32>
    %cst_226 = arith.constant dense<0.000000e+00> : vector<32x128xf32>
    %291 = tpu.matmul %288, %290, %cst_226 {dimension_numbers = #tpu.dot_dimension_numbers<[1], [0], [0], [1], [0, 0, 1, 1], [], []>} : vector<32x16xf32>, vector<16x128xf32>, vector<32x128xf32> -> vector<32x128xf32>
    %292 = arith.addf %291, %169 : vector<32x128xf32>
    %cst_227 = arith.constant 0.000000e+00 : f32
    %293 = vector.broadcast %cst_227 : f32 to vector<32x128xf32>
    %294 = arith.maximumf %292, %293 : vector<32x128xf32>
    %c7_228 = arith.constant 7 : index
    %c0_229 = arith.constant 0 : index
    %c0_230 = arith.constant 0 : index
    %295 = vector.load %arg15[%c7_228, %c0_229, %c0_230] : memref<8x32x128xf32, #tpu.memory_space<vmem>>, vector<1x32x128xf32>
    %296 = vector.shape_cast %295 : vector<1x32x128xf32> to vector<32x128xf32>
    %297 = vector.shape_cast %294 : vector<32x128xf32> to vector<1x32x128xf32>
    tpu.vector_store %arg15[%c7_228, %c0_229, %c0_230], %297 {strides = array<i32>} : memref<8x32x128xf32, #tpu.memory_space<vmem>>, vector<1x32x128xf32>,
    %298 = arith.mulf %294, %172 : vector<32x128xf32>
    %cst_231 = arith.constant dense<0.000000e+00> : vector<128xf32>
    %299 = vector.multi_reduction <add>, %298, %cst_231 [0] : vector<32x128xf32> to vector<128xf32>
    %300 = vector.shape_cast %299 : vector<128xf32> to vector<1x128xf32>
    %301 = arith.addf %300, %175 : vector<1x128xf32>
    %cst_232 = arith.constant 0.000000e+00 : f32
    %302 = vector.broadcast %cst_232 : f32 to vector<1x128xf32>
    %303 = arith.maximumf %301, %302 : vector<1x128xf32>
    %304 = tpu.concatenate %191, %207, %223, %239, %255, %271, %287, %303 in 0 : vector<1x128xf32>, vector<1x128xf32>, vector<1x128xf32>, vector<1x128xf32>, vector<1x128xf32>, vector<1x128xf32>, vector<1x128xf32>, vector<1x128xf32> -> vector<8x128xf32>
    %cst_233 = arith.constant dense<0xFF800000> : vector<128xf32>
    %305 = vector.multi_reduction <maximumf>, %304, %cst_233 [0] : vector<8x128xf32> to vector<128xf32>
    %306 = vector.shape_cast %305 : vector<128xf32> to vector<1x128xf32>
    %307 = vector.broadcast %306 : vector<1x128xf32> to vector<8x128xf32>
    %308 = arith.subf %304, %307 : vector<8x128xf32>
    %309 = math.exp %308 : vector<8x128xf32>
    %cst_234 = arith.constant dense<0.000000e+00> : vector<128xf32>
    %310 = vector.multi_reduction <add>, %309, %cst_234 [0] : vector<8x128xf32> to vector<128xf32>
    %311 = vector.shape_cast %310 : vector<128xf32> to vector<1x128xf32>
    %312 = tpu.reciprocal %311 : vector<1x128xf32> -> vector<1x128xf32>
    %313 = vector.broadcast %312 : vector<1x128xf32> to vector<8x128xf32>
    %314 = arith.mulf %309, %313 : vector<8x128xf32>
    %cst_235 = arith.constant 0.000000e+00 : f32
    %315 = vector.broadcast %cst_235 : f32 to vector<32x128xf32>
    %316 = vector.extract_strided_slice %314 {offsets = [0, 0], sizes = [1, 128], strides = [1, 1]} : vector<8x128xf32> to vector<1x128xf32>
    %c0_236 = arith.constant 0 : index
    %c0_237 = arith.constant 0 : index
    %c0_238 = arith.constant 0 : index
    %317 = vector.load %arg15[%c0_236, %c0_237, %c0_238] : memref<8x32x128xf32, #tpu.memory_space<vmem>>, vector<1x32x128xf32>
    %318 = vector.shape_cast %317 : vector<1x32x128xf32> to vector<32x128xf32>
    %319 = vector.broadcast %316 : vector<1x128xf32> to vector<32x128xf32>
    %320 = arith.mulf %319, %318 : vector<32x128xf32>
    %321 = arith.addf %315, %320 : vector<32x128xf32>
    %322 = vector.extract_strided_slice %314 {offsets = [1, 0], sizes = [1, 128], strides = [1, 1]} : vector<8x128xf32> to vector<1x128xf32>
    %c1_239 = arith.constant 1 : index
    %c0_240 = arith.constant 0 : index
    %c0_241 = arith.constant 0 : index
    %323 = vector.load %arg15[%c1_239, %c0_240, %c0_241] : memref<8x32x128xf32, #tpu.memory_space<vmem>>, vector<1x32x128xf32>
    %324 = vector.shape_cast %323 : vector<1x32x128xf32> to vector<32x128xf32>
    %325 = vector.broadcast %322 : vector<1x128xf32> to vector<32x128xf32>
    %326 = arith.mulf %325, %324 : vector<32x128xf32>
    %327 = arith.addf %321, %326 : vector<32x128xf32>
    %328 = vector.extract_strided_slice %314 {offsets = [2, 0], sizes = [1, 128], strides = [1, 1]} : vector<8x128xf32> to vector<1x128xf32>
    %c2_242 = arith.constant 2 : index
    %c0_243 = arith.constant 0 : index
    %c0_244 = arith.constant 0 : index
    %329 = vector.load %arg15[%c2_242, %c0_243, %c0_244] : memref<8x32x128xf32, #tpu.memory_space<vmem>>, vector<1x32x128xf32>
    %330 = vector.shape_cast %329 : vector<1x32x128xf32> to vector<32x128xf32>
    %331 = vector.broadcast %328 : vector<1x128xf32> to vector<32x128xf32>
    %332 = arith.mulf %331, %330 : vector<32x128xf32>
    %333 = arith.addf %327, %332 : vector<32x128xf32>
    %334 = vector.extract_strided_slice %314 {offsets = [3, 0], sizes = [1, 128], strides = [1, 1]} : vector<8x128xf32> to vector<1x128xf32>
    %c3_245 = arith.constant 3 : index
    %c0_246 = arith.constant 0 : index
    %c0_247 = arith.constant 0 : index
    %335 = vector.load %arg15[%c3_245, %c0_246, %c0_247] : memref<8x32x128xf32, #tpu.memory_space<vmem>>, vector<1x32x128xf32>
    %336 = vector.shape_cast %335 : vector<1x32x128xf32> to vector<32x128xf32>
    %337 = vector.broadcast %334 : vector<1x128xf32> to vector<32x128xf32>
    %338 = arith.mulf %337, %336 : vector<32x128xf32>
    %339 = arith.addf %333, %338 : vector<32x128xf32>
    %340 = vector.extract_strided_slice %314 {offsets = [4, 0], sizes = [1, 128], strides = [1, 1]} : vector<8x128xf32> to vector<1x128xf32>
    %c4_248 = arith.constant 4 : index
    %c0_249 = arith.constant 0 : index
    %c0_250 = arith.constant 0 : index
    %341 = vector.load %arg15[%c4_248, %c0_249, %c0_250] : memref<8x32x128xf32, #tpu.memory_space<vmem>>, vector<1x32x128xf32>
    %342 = vector.shape_cast %341 : vector<1x32x128xf32> to vector<32x128xf32>
    %343 = vector.broadcast %340 : vector<1x128xf32> to vector<32x128xf32>
    %344 = arith.mulf %343, %342 : vector<32x128xf32>
    %345 = arith.addf %339, %344 : vector<32x128xf32>
    %346 = vector.extract_strided_slice %314 {offsets = [5, 0], sizes = [1, 128], strides = [1, 1]} : vector<8x128xf32> to vector<1x128xf32>
    %c5_251 = arith.constant 5 : index
    %c0_252 = arith.constant 0 : index
    %c0_253 = arith.constant 0 : index
    %347 = vector.load %arg15[%c5_251, %c0_252, %c0_253] : memref<8x32x128xf32, #tpu.memory_space<vmem>>, vector<1x32x128xf32>
    %348 = vector.shape_cast %347 : vector<1x32x128xf32> to vector<32x128xf32>
    %349 = vector.broadcast %346 : vector<1x128xf32> to vector<32x128xf32>
    %350 = arith.mulf %349, %348 : vector<32x128xf32>
    %351 = arith.addf %345, %350 : vector<32x128xf32>
    %352 = vector.extract_strided_slice %314 {offsets = [6, 0], sizes = [1, 128], strides = [1, 1]} : vector<8x128xf32> to vector<1x128xf32>
    %c6_254 = arith.constant 6 : index
    %c0_255 = arith.constant 0 : index
    %c0_256 = arith.constant 0 : index
    %353 = vector.load %arg15[%c6_254, %c0_255, %c0_256] : memref<8x32x128xf32, #tpu.memory_space<vmem>>, vector<1x32x128xf32>
    %354 = vector.shape_cast %353 : vector<1x32x128xf32> to vector<32x128xf32>
    %355 = vector.broadcast %352 : vector<1x128xf32> to vector<32x128xf32>
    %356 = arith.mulf %355, %354 : vector<32x128xf32>
    %357 = arith.addf %351, %356 : vector<32x128xf32>
    %358 = vector.extract_strided_slice %314 {offsets = [7, 0], sizes = [1, 128], strides = [1, 1]} : vector<8x128xf32> to vector<1x128xf32>
    %c7_257 = arith.constant 7 : index
    %c0_258 = arith.constant 0 : index
    %c0_259 = arith.constant 0 : index
    %359 = vector.load %arg15[%c7_257, %c0_258, %c0_259] : memref<8x32x128xf32, #tpu.memory_space<vmem>>, vector<1x32x128xf32>
    %360 = vector.shape_cast %359 : vector<1x32x128xf32> to vector<32x128xf32>
    %361 = vector.broadcast %358 : vector<1x128xf32> to vector<32x128xf32>
    %362 = arith.mulf %361, %360 : vector<32x128xf32>
    %363 = arith.addf %357, %362 : vector<32x128xf32>
    %c0_260 = arith.constant 0 : index
    %c0_261 = arith.constant 0 : index
    %364 = vector.load %arg11[%c0_260, %c0_261] : memref<16x32xf32, #tpu.memory_space<vmem>>, vector<16x32xf32>
    %cst_262 = arith.constant dense<0.000000e+00> : vector<16x128xf32>
    %365 = tpu.matmul %364, %363, %cst_262 {dimension_numbers = #tpu.dot_dimension_numbers<[1], [0], [0], [1], [0, 0, 1, 1], [], []>} : vector<16x32xf32>, vector<32x128xf32>, vector<16x128xf32> -> vector<16x128xf32>
    %c0_263 = arith.constant 0 : index
    %c0_264 = arith.constant 0 : index
    %366 = vector.load %arg12[%c0_263, %c0_264] : memref<16x1xf32, #tpu.memory_space<vmem>>, vector<16x1xf32>
    %367 = vector.shape_cast %366 : vector<16x1xf32> to vector<16x1xf32>
    %368 = vector.broadcast %367 : vector<16x1xf32> to vector<16x128xf32>
    %369 = arith.addf %365, %368 : vector<16x128xf32>
    %cst_265 = arith.constant 0.000000e+00 : f32
    %370 = vector.broadcast %cst_265 : f32 to vector<16x128xf32>
    %371 = arith.maximumf %369, %370 : vector<16x128xf32>
    %c0_266 = arith.constant 0 : index
    %c0_267 = arith.constant 0 : index
    %372 = vector.load %arg13[%c0_266, %c0_267] : memref<16x128xf32, #tpu.memory_space<vmem>>, vector<16x128xf32>
    tpu.vector_store %arg13[%c0_266, %c0_267], %371 {strides = array<i32>} : memref<16x128xf32, #tpu.memory_space<vmem>>, vector<16x128xf32>,
    return
  }
  func.func @transform_0(%arg0: i32) -> (i32, i32, i32) {
    %c0_i32 = arith.constant 0 : i32
    %c0_i32_0 = arith.constant 0 : i32
    %c0_i32_1 = arith.constant 0 : i32
    return %c0_i32, %c0_i32_0, %arg0 : i32, i32, i32
  }
  func.func @transform_1(%arg0: i32) -> (i32, i32, i32) {
    %c0_i32 = arith.constant 0 : i32
    %c0_i32_0 = arith.constant 0 : i32
    %c0_i32_1 = arith.constant 0 : i32
    return %c0_i32, %c0_i32_0, %arg0 : i32, i32, i32
  }
  func.func @transform_2(%arg0: i32) -> (i32, i32) {
    %c0_i32 = arith.constant 0 : i32
    %c0_i32_0 = arith.constant 0 : i32
    %c0_i32_1 = arith.constant 0 : i32
    return %c0_i32, %c0_i32_0 : i32, i32
  }
  func.func @transform_3(%arg0: i32) -> (i32, i32) {
    %c0_i32 = arith.constant 0 : i32
    %c0_i32_0 = arith.constant 0 : i32
    %c0_i32_1 = arith.constant 0 : i32
    return %c0_i32, %c0_i32_0 : i32, i32
  }
  func.func @transform_4(%arg0: i32) -> (i32, i32) {
    %c0_i32 = arith.constant 0 : i32
    %c0_i32_0 = arith.constant 0 : i32
    %c0_i32_1 = arith.constant 0 : i32
    return %c0_i32, %c0_i32_0 : i32, i32
  }
  func.func @transform_5(%arg0: i32) -> (i32, i32) {
    %c0_i32 = arith.constant 0 : i32
    %c0_i32_0 = arith.constant 0 : i32
    %c0_i32_1 = arith.constant 0 : i32
    return %c0_i32, %c0_i32_0 : i32, i32
  }
  func.func @transform_6(%arg0: i32) -> (i32, i32) {
    %c0_i32 = arith.constant 0 : i32
    %c0_i32_0 = arith.constant 0 : i32
    %c0_i32_1 = arith.constant 0 : i32
    return %c0_i32, %c0_i32_0 : i32, i32
  }
  func.func @transform_7(%arg0: i32) -> (i32, i32) {
    %c0_i32 = arith.constant 0 : i32
    %c0_i32_0 = arith.constant 0 : i32
    %c0_i32_1 = arith.constant 0 : i32
    return %c0_i32, %c0_i32_0 : i32, i32
  }
  func.func @transform_8(%arg0: i32) -> (i32, i32) {
    %c0_i32 = arith.constant 0 : i32
    %c0_i32_0 = arith.constant 0 : i32
    %c0_i32_1 = arith.constant 0 : i32
    return %c0_i32, %c0_i32_0 : i32, i32
  }
  func.func @transform_9(%arg0: i32) -> (i32, i32) {
    %c0_i32 = arith.constant 0 : i32
    %c0_i32_0 = arith.constant 0 : i32
    %c0_i32_1 = arith.constant 0 : i32
    return %c0_i32, %c0_i32_0 : i32, i32
  }
  func.func @transform_10(%arg0: i32) -> (i32, i32) {
    %c0_i32 = arith.constant 0 : i32
    %c0_i32_0 = arith.constant 0 : i32
    %c0_i32_1 = arith.constant 0 : i32
    return %c0_i32, %c0_i32_0 : i32, i32
  }
  func.func @transform_11(%arg0: i32) -> (i32, i32) {
    %c0_i32 = arith.constant 0 : i32
    %c0_i32_0 = arith.constant 0 : i32
    %c0_i32_1 = arith.constant 0 : i32
    return %c0_i32, %c0_i32_0 : i32, i32
  }
  func.func @transform_12(%arg0: i32) -> (i32, i32) {
    %c0_i32 = arith.constant 0 : i32
    %c0_i32_0 = arith.constant 0 : i32
    return %c0_i32, %arg0 : i32, i32
  }
}

</mosaic_0001>

<llo_original>
// kernel: tpu_custom_call.1
$region0: #{tpu_custom_call.1}
  #allocation0 [shape = 'u32[]', space=smem, size = 0x4, offset = 0x4, fixed_abs, tag = 'smem constant byte address 0x4 - core index']
  #allocation1 [shape = 'u32[144,128]{1,0:T(1,128)}', space=vmem, size = 0x12000, scoped, tag = 'internal scratch']
  #allocation2 [shape = 'f32[8,16,128]{2,1,0:T(8,128)}', space=vmem, size = 0x10000, scoped, tag = 'scratch operand']
  #allocation3 [shape = 'f32[8,32,128]{2,1,0:T(8,128)}', space=vmem, size = 0x20000, scoped, tag = 'scratch operand']
  #allocation4 [shape = 'f32[1,1]{1,0:T(1,128)S(1)}', space=vmem, size = 0x200, scoped, tag = 'scoped memory for tpu_custom_call.1']
  %s0 = inlined_call_operand.vmem [shape: f32[8,16,128], index: 0, kind: input, shape index: {}]
  %s1 = inlined_call_operand.vmem [shape: f32[8,4,128], index: 1, kind: input, shape index: {}]
  %s2 = inlined_call_operand.vmem [shape: f32[16,4], index: 2, kind: input, shape index: {}]
  %s3 = inlined_call_operand.vmem [shape: f32[16,1], index: 3, kind: input, shape index: {}]
  %s4 = inlined_call_operand.vmem [shape: f32[32,16], index: 4, kind: input, shape index: {}]
  %s5 = inlined_call_operand.vmem [shape: f32[32,16], index: 5, kind: input, shape index: {}]
  %s6 = inlined_call_operand.vmem [shape: f32[32,16], index: 6, kind: input, shape index: {}]
  %s7 = inlined_call_operand.vmem [shape: f32[32,1], index: 7, kind: input, shape index: {}]
  %s8 = inlined_call_operand.vmem [shape: f32[32,1], index: 8, kind: input, shape index: {}]
  %s9 = inlined_call_operand.<no memory space> [shape: f32[1,1], index: 9, kind: input, shape index: {}]
  %s10 = inlined_call_operand.vmem [shape: f32[16,32], index: 10, kind: input, shape index: {}]
  %s11 = inlined_call_operand.vmem [shape: f32[16,1], index: 11, kind: input, shape index: {}]
  %s12 = inlined_call_operand.hbm [shape: f32[16,128], index: 12, kind: output, shape index: {}]
  %s13 = sld [smem:[#allocation0]]
  $region58: #{tpu_custom_call.1} parent=0
    _
  %s15 = ssub.s32 1, %s13
  %s16 = scalar_select 0, %s15, %s13
  %v17 = vstv %s9
  %18 = vst [vmem:[#allocation4] sm:$0x1] %v17
  $region1: #{tpu_custom_call.1} parent=0
    #allocation5 [shape = 'u8[8192]{0}', space=vmem, size = 0x2000, scoped, tag = 'output window, operand 0, single buffered']
    #allocation6 [shape = 's32[1]{0}', space=sflag, size = 0x4, scoped, tag = 'scoped memory for tpu_custom_call.1']
    %19 = vsyncpa [#allocation6], 0
    // Predicated region
    $region2: #{tpu_custom_call.1} parent=1 // pred_check
      _
    $region3: #{tpu_custom_call.1} parent=1 // pred_check_branch
      %21 = sbr.rel (0) target = $region5
    $region4: #{tpu_custom_call.1} parent=1 // pred_region
      _
    $region5: #{tpu_custom_call.1} parent=1 // pred_fallthru
      _
    // Predicated region
    $region6: #{tpu_custom_call.1} parent=1 // pred_check
      _
    $region7: #{tpu_custom_call.1} parent=1 // pred_check_branch
      %23 = sbr.rel (0) target = $region9
    $region8: #{tpu_custom_call.1} parent=1 // pred_region
      _
    $region9: #{tpu_custom_call.1} parent=1 // pred_fallthru
      _
    // Predicated region
    $region10: #{tpu_custom_call.1} parent=1 // pred_check
      _
    $region11: #{tpu_custom_call.1} parent=1 // pred_check_branch
      %25 = sbr.rel (0) target = $region13
    $region12: #{tpu_custom_call.1} parent=1 // pred_region
      _
    $region13: #{tpu_custom_call.1} parent=1 // pred_fallthru
      _
    // Predicated region
    $region14: #{tpu_custom_call.1} parent=1 // pred_check
      _
    $region15: #{tpu_custom_call.1} parent=1 // pred_check_branch
      %27 = sbr.rel (0) target = $region17
    $region16: #{tpu_custom_call.1} parent=1 // pred_region
      _
    $region17: #{tpu_custom_call.1} parent=1 // pred_fallthru
      _
    // Predicated region
    $region18: #{tpu_custom_call.1} parent=1 // pred_check
      _
    $region19: #{tpu_custom_call.1} parent=1 // pred_check_branch
      %29 = sbr.rel (0) target = $region21
    $region20: #{tpu_custom_call.1} parent=1 // pred_region
      _
    $region21: #{tpu_custom_call.1} parent=1 // pred_fallthru
      _
    // Predicated region
    $region22: #{tpu_custom_call.1} parent=1 // pred_check
      _
    $region23: #{tpu_custom_call.1} parent=1 // pred_check_branch
      %31 = sbr.rel (0) target = $region25
    $region24: #{tpu_custom_call.1} parent=1 // pred_region
      _
    $region25: #{tpu_custom_call.1} parent=1 // pred_fallthru
      _
    // Predicated region
    $region26: #{tpu_custom_call.1} parent=1 // pred_check
      _
    $region27: #{tpu_custom_call.1} parent=1 // pred_check_branch
      %33 = sbr.rel (0) target = $region29
    $region28: #{tpu_custom_call.1} parent=1 // pred_region
      _
    $region29: #{tpu_custom_call.1} parent=1 // pred_fallthru
      _
    // Predicated region
    $region30: #{tpu_custom_call.1} parent=1 // pred_check
      _
    $region31: #{tpu_custom_call.1} parent=1 // pred_check_branch
      %35 = sbr.rel (0) target = $region33
    $region32: #{tpu_custom_call.1} parent=1 // pred_region
      _
    $region33: #{tpu_custom_call.1} parent=1 // pred_fallthru
      _
    // Predicated region
    $region34: #{tpu_custom_call.1} parent=1 // pred_check
      _
    $region35: #{tpu_custom_call.1} parent=1 // pred_check_branch
      %37 = sbr.rel (0) target = $region37
    $region36: #{tpu_custom_call.1} parent=1 // pred_region
      _
    $region37: #{tpu_custom_call.1} parent=1 // pred_fallthru
      _
    // Predicated region
    $region38: #{tpu_custom_call.1} parent=1 // pred_check
      _
    $region39: #{tpu_custom_call.1} parent=1 // pred_check_branch
      %39 = sbr.rel (0) target = $region41
    $region40: #{tpu_custom_call.1} parent=1 // pred_region
      _
    $region41: #{tpu_custom_call.1} parent=1 // pred_fallthru
      _
    // Predicated region
    $region42: #{tpu_custom_call.1} parent=1 // pred_check
      _
    $region43: #{tpu_custom_call.1} parent=1 // pred_check_branch
      %41 = sbr.rel (0) target = $region45
    $region44: #{tpu_custom_call.1} parent=1 // pred_region
      _
    $region45: #{tpu_custom_call.1} parent=1 // pred_fallthru
      _
    // Predicated region
    $region46: #{tpu_custom_call.1} parent=1 // pred_check
      _
    $region47: #{tpu_custom_call.1} parent=1 // pred_check_branch
      %43 = sbr.rel (0) target = $region49
    $region48: #{tpu_custom_call.1} parent=1 // pred_region
      _
    $region49: #{tpu_custom_call.1} parent=1 // pred_fallthru
      _
    %v44 = vld [vmem:[%s3] sm:$0xff]
    %v45 = vld [vmem:[%s3 + $0x8] sm:$0xff]
    %47 = vset.pattern.permute.xlu0 0
    %48 = vperm.xlu0 %47, %v44
    %v49 = vpop.permute.xlu0 %48
    %52 = vset.pattern.permute.xlu0 0
    %53 = vperm.xlu0 %52, %v45
    %v54 = vpop.permute.xlu0 %53
    %v56 = vld [vmem:[%s0] sm:$0xff]
    %v57 = vld [vmem:[%s0 + $0x8] sm:$0xff]
    %v58 = vld [vmem:[%s1] sm:$0xf]
    %v59 = vld [vmem:[%s2] sm:$0xff]
    %v60 = vld [vmem:[%s2 + $0x8] sm:$0xff]
    %vm61 = vcmask 31744
    %v63 = vsel %vm61, %v59, 0
    %v66 = vsel %vm61, %v60, 0
    %vm68 = vcmask 1043456
    %v70 = vsel %vm68, %v58, 0
    %72 = vmatprep.subr.mxu0 0.0
    %73 = vmatpush1.msra.mxu0 %v70
    %74 = vmatprep.subr.mxu0 0.0
    %75 = vmatpush1.msra.mxu0 0.0
    %76 = vmatprep.subr.mxu0 0.0
    %77 = vmatpush1.msra.mxu0 0.0
    %78 = vmatprep.subr.mxu0 0.0
    %79 = vmatpush1.msra.mxu0 0.0
    %80 = vmatprep.subr.mxu0 0.0
    %81 = vmatpush1.msra.mxu0 0.0
    %82 = vmatprep.subr.mxu0 0.0
    %83 = vmatpush1.msra.mxu0 0.0
    %84 = vmatprep.subr.mxu0 0.0
    %85 = vmatpush1.msra.mxu0 0.0
    %86 = vmatprep.subr.mxu0 0.0
    %87 = vmatpush1.msra.mxu0 0.0
    %88 = vmatprep.subr.mxu0 0.0
    %89 = vmatpush1.msra.mxu0 0.0
    %90 = vmatprep.subr.mxu0 0.0
    %91 = vmatpush1.msra.mxu0 0.0
    %92 = vmatprep.subr.mxu0 0.0
    %93 = vmatpush1.msra.mxu0 0.0
    %94 = vmatprep.subr.mxu0 0.0
    %95 = vmatpush1.msra.mxu0 0.0
    %96 = vmatprep.subr.mxu0 0.0
    %97 = vmatpush1.msra.mxu0 0.0
    %98 = vmatprep.subr.mxu0 0.0
    %99 = vmatpush1.msra.mxu0 0.0
    %100 = vmatprep.subr.mxu0 0.0
    %101 = vmatpush1.msra.mxu0 0.0
    %102 = vmatprep.subr.mxu0 0.0
    %103 = vmatpush1.msra.mxu0 0.0
    %104 = vmatprep.subr.mxu0 0.0
    %105 = vmatpush1.msra.mxu0 0.0
    %106 = vmatprep.subr.mxu0 0.0
    %107 = vmatpush1.msra.mxu0 0.0
    %108 = vmatprep.subr.mxu0 0.0
    %109 = vmatpush1.msra.mxu0 0.0
    %110 = vmatprep.subr.mxu0 0.0
    %111 = vmatpush1.msra.mxu0 0.0
    %112 = vmatprep.subr.mxu0 0.0
    %113 = vmatpush1.msra.mxu0 0.0
    %114 = vmatprep.subr.mxu0 0.0
    %115 = vmatpush1.msra.mxu0 0.0
    %116 = vmatprep.subr.mxu0 0.0
    %117 = vmatpush1.msra.mxu0 0.0
    %118 = vmatprep.subr.mxu0 0.0
    %119 = vmatpush1.msra.mxu0 0.0
    %120 = vmatprep.subr.mxu0 0.0
    %121 = vmatpush1.msra.mxu0 0.0
    %122 = vmatprep.subr.mxu0 0.0
    %123 = vmatpush1.msra.mxu0 0.0
    %124 = vmatprep.subr.mxu0 0.0
    %125 = vmatpush1.msra.mxu0 0.0
    %126 = vmatprep.subr.mxu0 0.0
    %127 = vmatpush1.msra.mxu0 0.0
    %128 = vmatprep.subr.mxu0 0.0
    %129 = vmatpush1.msra.mxu0 0.0
    %130 = vmatprep.subr.mxu0 0.0
    %131 = vmatpush1.msra.mxu0 0.0
    %132 = vmatprep.subr.mxu0 0.0
    %133 = vmatpush1.msra.mxu0 0.0
    %134 = vmatprep.subr.mxu0 0.0
    %135 = vmatpush1.msra.mxu0 0.0
    %136 = vmatprep.mubr.f32.mxu0 0.0
    %137 = vmatmul.mubr.f32.gmra.mrb[0].mxu0 %v63
    %v138 = vpop.f32.mrb[0].mxu0
    %v139 = vadd.f32 %v49, %v138
    %v140 = vpop.f32.mrb[0].mxu0
    %141 = vmatprep.mubr.f32.mxu0 0.0
    %142 = vmatmul.mubr.f32.gmra.mrb[0].mxu0 %v66
    %v143 = vpop.f32.mrb[0].mxu0
    %v144 = vadd.f32 %v54, %v143
    %v145 = vpop.f32.mrb[0].mxu0
    %146 = vdwg.mxu0
    %v147 = vmax.f32 %v139, 0.0
    %v148 = vmax.f32 %v144, 0.0
    %v149 = vadd.f32 %v56, %v147
    %v150 = vadd.f32 %v57, %v148
    %151 = vst [vmem:[#allocation2] sm:$0xff] %v149
    %152 = vst [vmem:[#allocation2 + $0x8] sm:$0xff] %v150
    %v153 = vadd.f32 %v149, 0.0
    %v154 = vadd.f32 %v150, 0.0
    %s155 = scalar_lea.vmem %s0, 16
    %v156 = vld [vmem:[%s155] sm:$0xff]
    %v157 = vld [vmem:[%s155 + $0x8] sm:$0xff]
    %s158 = scalar_lea.vmem %s1, 4
    %v159 = vld [vmem:[%s158] sm:$0xf]
    %v160 = vld [vmem:[%s2] sm:$0xff]
    %v161 = vld [vmem:[%s2 + $0x8] sm:$0xff]
    %v163 = vsel %vm61, %v160, 0
    %v166 = vsel %vm61, %v161, 0
    %v169 = vsel %vm68, %v159, 0
    %171 = vmatprep.subr.mxu0 0.0
    %172 = vmatpush1.msra.mxu0 %v169
    %173 = vmatprep.subr.mxu0 0.0
    %174 = vmatpush1.msra.mxu0 0.0
    %175 = vmatprep.subr.mxu0 0.0
    %176 = vmatpush1.msra.mxu0 0.0
    %177 = vmatprep.subr.mxu0 0.0
    %178 = vmatpush1.msra.mxu0 0.0
    %179 = vmatprep.subr.mxu0 0.0
    %180 = vmatpush1.msra.mxu0 0.0
    %181 = vmatprep.subr.mxu0 0.0
    %182 = vmatpush1.msra.mxu0 0.0
    %183 = vmatprep.subr.mxu0 0.0
    %184 = vmatpush1.msra.mxu0 0.0
    %185 = vmatprep.subr.mxu0 0.0
    %186 = vmatpush1.msra.mxu0 0.0
    %187 = vmatprep.subr.mxu0 0.0
    %188 = vmatpush1.msra.mxu0 0.0
    %189 = vmatprep.subr.mxu0 0.0
    %190 = vmatpush1.msra.mxu0 0.0
    %191 = vmatprep.subr.mxu0 0.0
    %192 = vmatpush1.msra.mxu0 0.0
    %193 = vmatprep.subr.mxu0 0.0
    %194 = vmatpush1.msra.mxu0 0.0
    %195 = vmatprep.subr.mxu0 0.0
    %196 = vmatpush1.msra.mxu0 0.0
    %197 = vmatprep.subr.mxu0 0.0
    %198 = vmatpush1.msra.mxu0 0.0
    %199 = vmatprep.subr.mxu0 0.0
    %200 = vmatpush1.msra.mxu0 0.0
    %201 = vmatprep.subr.mxu0 0.0
    %202 = vmatpush1.msra.mxu0 0.0
    %203 = vmatprep.subr.mxu0 0.0
    %204 = vmatpush1.msra.mxu0 0.0
    %205 = vmatprep.subr.mxu0 0.0
    %206 = vmatpush1.msra.mxu0 0.0
    %207 = vmatprep.subr.mxu0 0.0
    %208 = vmatpush1.msra.mxu0 0.0
    %209 = vmatprep.subr.mxu0 0.0
    %210 = vmatpush1.msra.mxu0 0.0
    %211 = vmatprep.subr.mxu0 0.0
    %212 = vmatpush1.msra.mxu0 0.0
    %213 = vmatprep.subr.mxu0 0.0
    %214 = vmatpush1.msra.mxu0 0.0
    %215 = vmatprep.subr.mxu0 0.0
    %216 = vmatpush1.msra.mxu0 0.0
    %217 = vmatprep.subr.mxu0 0.0
    %218 = vmatpush1.msra.mxu0 0.0
    %219 = vmatprep.subr.mxu0 0.0
    %220 = vmatpush1.msra.mxu0 0.0
    %221 = vmatprep.subr.mxu0 0.0
    %222 = vmatpush1.msra.mxu0 0.0
    %223 = vmatprep.subr.mxu0 0.0
    %224 = vmatpush1.msra.mxu0 0.0
    %225 = vmatprep.subr.mxu0 0.0
    %226 = vmatpush1.msra.mxu0 0.0
    %227 = vmatprep.subr.mxu0 0.0
    %228 = vmatpush1.msra.mxu0 0.0
    %229 = vmatprep.subr.mxu0 0.0
    %230 = vmatpush1.msra.mxu0 0.0
    %231 = vmatprep.subr.mxu0 0.0
    %232 = vmatpush1.msra.mxu0 0.0
    %233 = vmatprep.subr.mxu0 0.0
    %234 = vmatpush1.msra.mxu0 0.0
    %235 = vmatprep.mubr.f32.mxu0 0.0
    %236 = vmatmul.mubr.f32.gmra.mrb[0].mxu0 %v163
    %v237 = vpop.f32.mrb[0].mxu0
    %v238 = vadd.f32 %v49, %v237
    %v239 = vpop.f32.mrb[0].mxu0
    %240 = vmatprep.mubr.f32.mxu0 0.0
    %241 = vmatmul.mubr.f32.gmra.mrb[0].mxu0 %v166
    %v242 = vpop.f32.mrb[0].mxu0
    %v243 = vadd.f32 %v54, %v242
    %v244 = vpop.f32.mrb[0].mxu0
    %245 = vdwg.mxu0
    %v246 = vmax.f32 %v238, 0.0
    %v247 = vmax.f32 %v243, 0.0
    %v248 = vadd.f32 %v156, %v246
    %v249 = vadd.f32 %v157, %v247
    %s250 = scalar_lea.vmem [#allocation2], 16
    %251 = vst [vmem:[%s250] sm:$0xff] %v248
    %252 = vst [vmem:[%s250 + $0x8] sm:$0xff] %v249
    %v253 = vadd.f32 %v153, %v248
    %v254 = vadd.f32 %v154, %v249
    %s255 = scalar_lea.vmem %s0, 32
    %v256 = vld [vmem:[%s255] sm:$0xff]
    %v257 = vld [vmem:[%s255 + $0x8] sm:$0xff]
    %s258 = scalar_lea.vmem %s1, 8
    %v259 = vld [vmem:[%s258] sm:$0xf]
    %v260 = vld [vmem:[%s2] sm:$0xff]
    %v261 = vld [vmem:[%s2 + $0x8] sm:$0xff]
    %v263 = vsel %vm61, %v260, 0
    %v266 = vsel %vm61, %v261, 0
    %v269 = vsel %vm68, %v259, 0
    %271 = vmatprep.subr.mxu0 0.0
    %272 = vmatpush1.msra.mxu0 %v269
    %273 = vmatprep.subr.mxu0 0.0
    %274 = vmatpush1.msra.mxu0 0.0
    %275 = vmatprep.subr.mxu0 0.0
    %276 = vmatpush1.msra.mxu0 0.0
    %277 = vmatprep.subr.mxu0 0.0
    %278 = vmatpush1.msra.mxu0 0.0
    %279 = vmatprep.subr.mxu0 0.0
    %280 = vmatpush1.msra.mxu0 0.0
    %281 = vmatprep.subr.mxu0 0.0
    %282 = vmatpush1.msra.mxu0 0.0
    %283 = vmatprep.subr.mxu0 0.0
    %284 = vmatpush1.msra.mxu0 0.0
    %285 = vmatprep.subr.mxu0 0.0
    %286 = vmatpush1.msra.mxu0 0.0
    %287 = vmatprep.subr.mxu0 0.0
    %288 = vmatpush1.msra.mxu0 0.0
    %289 = vmatprep.subr.mxu0 0.0
    %290 = vmatpush1.msra.mxu0 0.0
    %291 = vmatprep.subr.mxu0 0.0
    %292 = vmatpush1.msra.mxu0 0.0
    %293 = vmatprep.subr.mxu0 0.0
    %294 = vmatpush1.msra.mxu0 0.0
    %295 = vmatprep.subr.mxu0 0.0
    %296 = vmatpush1.msra.mxu0 0.0
    %297 = vmatprep.subr.mxu0 0.0
    %298 = vmatpush1.msra.mxu0 0.0
    %299 = vmatprep.subr.mxu0 0.0
    %300 = vmatpush1.msra.mxu0 0.0
    %301 = vmatprep.subr.mxu0 0.0
    %302 = vmatpush1.msra.mxu0 0.0
    %303 = vmatprep.subr.mxu0 0.0
    %304 = vmatpush1.msra.mxu0 0.0
    %305 = vmatprep.subr.mxu0 0.0
    %306 = vmatpush1.msra.mxu0 0.0
    %307 = vmatprep.subr.mxu0 0.0
    %308 = vmatpush1.msra.mxu0 0.0
    %309 = vmatprep.subr.mxu0 0.0
    %310 = vmatpush1.msra.mxu0 0.0
    %311 = vmatprep.subr.mxu0 0.0
    %312 = vmatpush1.msra.mxu0 0.0
    %313 = vmatprep.subr.mxu0 0.0
    %314 = vmatpush1.msra.mxu0 0.0
    %315 = vmatprep.subr.mxu0 0.0
    %316 = vmatpush1.msra.mxu0 0.0
    %317 = vmatprep.subr.mxu0 0.0
    %318 = vmatpush1.msra.mxu0 0.0
    %319 = vmatprep.subr.mxu0 0.0
    %320 = vmatpush1.msra.mxu0 0.0
    %321 = vmatprep.subr.mxu0 0.0
    %322 = vmatpush1.msra.mxu0 0.0
    %323 = vmatprep.subr.mxu0 0.0
    %324 = vmatpush1.msra.mxu0 0.0
    %325 = vmatprep.subr.mxu0 0.0
    %326 = vmatpush1.msra.mxu0 0.0
    %327 = vmatprep.subr.mxu0 0.0
    %328 = vmatpush1.msra.mxu0 0.0
    %329 = vmatprep.subr.mxu0 0.0
    %330 = vmatpush1.msra.mxu0 0.0
    %331 = vmatprep.subr.mxu0 0.0
    %332 = vmatpush1.msra.mxu0 0.0
    %333 = vmatprep.subr.mxu0 0.0
    %334 = vmatpush1.msra.mxu0 0.0
    %335 = vmatprep.mubr.f32.mxu0 0.0
    %336 = vmatmul.mubr.f32.gmra.mrb[0].mxu0 %v263
    %v337 = vpop.f32.mrb[0].mxu0
    %v338 = vadd.f32 %v49, %v337
    %v339 = vpop.f32.mrb[0].mxu0
    %340 = vmatprep.mubr.f32.mxu0 0.0
    %341 = vmatmul.mubr.f32.gmra.mrb[0].mxu0 %v266
    %v342 = vpop.f32.mrb[0].mxu0
    %v343 = vadd.f32 %v54, %v342
    %v344 = vpop.f32.mrb[0].mxu0
    %345 = vdwg.mxu0
    %v346 = vmax.f32 %v338, 0.0
    %v347 = vmax.f32 %v343, 0.0
    %v348 = vadd.f32 %v256, %v346
    %v349 = vadd.f32 %v257, %v347
    %s350 = scalar_lea.vmem [#allocation2], 32
    %351 = vst [vmem:[%s350] sm:$0xff] %v348
    %352 = vst [vmem:[%s350 + $0x8] sm:$0xff] %v349
    %v353 = vadd.f32 %v253, %v348
    %v354 = vadd.f32 %v254, %v349
    %s355 = scalar_lea.vmem %s0, 48
    %v356 = vld [vmem:[%s355] sm:$0xff]
    %v357 = vld [vmem:[%s355 + $0x8] sm:$0xff]
    %s358 = scalar_lea.vmem %s1, 12
    %v359 = vld [vmem:[%s358] sm:$0xf]
    %v360 = vld [vmem:[%s2] sm:$0xff]
    %v361 = vld [vmem:[%s2 + $0x8] sm:$0xff]
    %v363 = vsel %vm61, %v360, 0
    %v366 = vsel %vm61, %v361, 0
    %v369 = vsel %vm68, %v359, 0
    %371 = vmatprep.subr.mxu0 0.0
    %372 = vmatpush1.msra.mxu0 %v369
    %373 = vmatprep.subr.mxu0 0.0
    %374 = vmatpush1.msra.mxu0 0.0
    %375 = vmatprep.subr.mxu0 0.0
    %376 = vmatpush1.msra.mxu0 0.0
    %377 = vmatprep.subr.mxu0 0.0
    %378 = vmatpush1.msra.mxu0 0.0
    %379 = vmatprep.subr.mxu0 0.0
    %380 = vmatpush1.msra.mxu0 0.0
    %381 = vmatprep.subr.mxu0 0.0
    %382 = vmatpush1.msra.mxu0 0.0
    %383 = vmatprep.subr.mxu0 0.0
    %384 = vmatpush1.msra.mxu0 0.0
    %385 = vmatprep.subr.mxu0 0.0
    %386 = vmatpush1.msra.mxu0 0.0
    %387 = vmatprep.subr.mxu0 0.0
    %388 = vmatpush1.msra.mxu0 0.0
    %389 = vmatprep.subr.mxu0 0.0
    %390 = vmatpush1.msra.mxu0 0.0
    %391 = vmatprep.subr.mxu0 0.0
    %392 = vmatpush1.msra.mxu0 0.0
    %393 = vmatprep.subr.mxu0 0.0
    %394 = vmatpush1.msra.mxu0 0.0
    %395 = vmatprep.subr.mxu0 0.0
    %396 = vmatpush1.msra.mxu0 0.0
    %397 = vmatprep.subr.mxu0 0.0
    %398 = vmatpush1.msra.mxu0 0.0
    %399 = vmatprep.subr.mxu0 0.0
    %400 = vmatpush1.msra.mxu0 0.0
    %401 = vmatprep.subr.mxu0 0.0
    %402 = vmatpush1.msra.mxu0 0.0
    %403 = vmatprep.subr.mxu0 0.0
    %404 = vmatpush1.msra.mxu0 0.0
    %405 = vmatprep.subr.mxu0 0.0
    %406 = vmatpush1.msra.mxu0 0.0
    %407 = vmatprep.subr.mxu0 0.0
    %408 = vmatpush1.msra.mxu0 0.0
    %409 = vmatprep.subr.mxu0 0.0
    %410 = vmatpush1.msra.mxu0 0.0
    %411 = vmatprep.subr.mxu0 0.0
    %412 = vmatpush1.msra.mxu0 0.0
    %413 = vmatprep.subr.mxu0 0.0
    %414 = vmatpush1.msra.mxu0 0.0
    %415 = vmatprep.subr.mxu0 0.0
    %416 = vmatpush1.msra.mxu0 0.0
    %417 = vmatprep.subr.mxu0 0.0
    %418 = vmatpush1.msra.mxu0 0.0
    %419 = vmatprep.subr.mxu0 0.0
    %420 = vmatpush1.msra.mxu0 0.0
    %421 = vmatprep.subr.mxu0 0.0
    %422 = vmatpush1.msra.mxu0 0.0
    %423 = vmatprep.subr.mxu0 0.0
    %424 = vmatpush1.msra.mxu0 0.0
    %425 = vmatprep.subr.mxu0 0.0
    %426 = vmatpush1.msra.mxu0 0.0
    %427 = vmatprep.subr.mxu0 0.0
    %428 = vmatpush1.msra.mxu0 0.0
    %429 = vmatprep.subr.mxu0 0.0
    %430 = vmatpush1.msra.mxu0 0.0
    %431 = vmatprep.subr.mxu0 0.0
    %432 = vmatpush1.msra.mxu0 0.0
    %433 = vmatprep.subr.mxu0 0.0
    %434 = vmatpush1.msra.mxu0 0.0
    %435 = vmatprep.mubr.f32.mxu0 0.0
    %436 = vmatmul.mubr.f32.gmra.mrb[0].mxu0 %v363
    %v437 = vpop.f32.mrb[0].mxu0
    %v438 = vadd.f32 %v49, %v437
    %v439 = vpop.f32.mrb[0].mxu0
    %440 = vmatprep.mubr.f32.mxu0 0.0
    %441 = vmatmul.mubr.f32.gmra.mrb[0].mxu0 %v366
    %v442 = vpop.f32.mrb[0].mxu0
    %v443 = vadd.f32 %v54, %v442
    %v444 = vpop.f32.mrb[0].mxu0
    %445 = vdwg.mxu0
    %v446 = vmax.f32 %v438, 0.0
    %v447 = vmax.f32 %v443, 0.0
    %v448 = vadd.f32 %v356, %v446
    %v449 = vadd.f32 %v357, %v447
    %s450 = scalar_lea.vmem [#allocation2], 48
    %451 = vst [vmem:[%s450] sm:$0xff] %v448
    %452 = vst [vmem:[%s450 + $0x8] sm:$0xff] %v449
    %v453 = vadd.f32 %v353, %v448
    %v454 = vadd.f32 %v354, %v449
    %s455 = scalar_lea.vmem %s0, 64
    %v456 = vld [vmem:[%s455] sm:$0xff]
    %v457 = vld [vmem:[%s455 + $0x8] sm:$0xff]
    %s458 = scalar_lea.vmem %s1, 16
    %v459 = vld [vmem:[%s458] sm:$0xf]
    %v460 = vld [vmem:[%s2] sm:$0xff]
    %v461 = vld [vmem:[%s2 + $0x8] sm:$0xff]
    %v463 = vsel %vm61, %v460, 0
    %v466 = vsel %vm61, %v461, 0
    %v469 = vsel %vm68, %v459, 0
    %471 = vmatprep.subr.mxu0 0.0
    %472 = vmatpush1.msra.mxu0 %v469
    %473 = vmatprep.subr.mxu0 0.0
    %474 = vmatpush1.msra.mxu0 0.0
    %475 = vmatprep.subr.mxu0 0.0
    %476 = vmatpush1.msra.mxu0 0.0
    %477 = vmatprep.subr.mxu0 0.0
    %478 = vmatpush1.msra.mxu0 0.0
    %479 = vmatprep.subr.mxu0 0.0
    %480 = vmatpush1.msra.mxu0 0.0
    %481 = vmatprep.subr.mxu0 0.0
    %482 = vmatpush1.msra.mxu0 0.0
    %483 = vmatprep.subr.mxu0 0.0
    %484 = vmatpush1.msra.mxu0 0.0
    %485 = vmatprep.subr.mxu0 0.0
    %486 = vmatpush1.msra.mxu0 0.0
    %487 = vmatprep.subr.mxu0 0.0
    %488 = vmatpush1.msra.mxu0 0.0
    %489 = vmatprep.subr.mxu0 0.0
    %490 = vmatpush1.msra.mxu0 0.0
    %491 = vmatprep.subr.mxu0 0.0
    %492 = vmatpush1.msra.mxu0 0.0
    %493 = vmatprep.subr.mxu0 0.0
    %494 = vmatpush1.msra.mxu0 0.0
    %495 = vmatprep.subr.mxu0 0.0
    %496 = vmatpush1.msra.mxu0 0.0
    %497 = vmatprep.subr.mxu0 0.0
    %498 = vmatpush1.msra.mxu0 0.0
    %499 = vmatprep.subr.mxu0 0.0
    %500 = vmatpush1.msra.mxu0 0.0
    %501 = vmatprep.subr.mxu0 0.0
    %502 = vmatpush1.msra.mxu0 0.0
    %503 = vmatprep.subr.mxu0 0.0
    %504 = vmatpush1.msra.mxu0 0.0
    %505 = vmatprep.subr.mxu0 0.0
    %506 = vmatpush1.msra.mxu0 0.0
    %507 = vmatprep.subr.mxu0 0.0
    %508 = vmatpush1.msra.mxu0 0.0
    %509 = vmatprep.subr.mxu0 0.0
    %510 = vmatpush1.msra.mxu0 0.0
    %511 = vmatprep.subr.mxu0 0.0
    %512 = vmatpush1.msra.mxu0 0.0
    %513 = vmatprep.subr.mxu0 0.0
    %514 = vmatpush1.msra.mxu0 0.0
    %515 = vmatprep.subr.mxu0 0.0
    %516 = vmatpush1.msra.mxu0 0.0
    %517 = vmatprep.subr.mxu0 0.0
    %518 = vmatpush1.msra.mxu0 0.0
    %519 = vmatprep.subr.mxu0 0.0
    %520 = vmatpush1.msra.mxu0 0.0
    %521 = vmatprep.subr.mxu0 0.0
    %522 = vmatpush1.msra.mxu0 0.0
    %523 = vmatprep.subr.mxu0 0.0
    %524 = vmatpush1.msra.mxu0 0.0
    %525 = vmatprep.subr.mxu0 0.0
    %526 = vmatpush1.msra.mxu0 0.0
    %527 = vmatprep.subr.mxu0 0.0
    %528 = vmatpush1.msra.mxu0 0.0
    %529 = vmatprep.subr.mxu0 0.0
    %530 = vmatpush1.msra.mxu0 0.0
    %531 = vmatprep.subr.mxu0 0.0
    %532 = vmatpush1.msra.mxu0 0.0
    %533 = vmatprep.subr.mxu0 0.0
    %534 = vmatpush1.msra.mxu0 0.0
    %535 = vmatprep.mubr.f32.mxu0 0.0
    %536 = vmatmul.mubr.f32.gmra.mrb[0].mxu0 %v463
    %v537 = vpop.f32.mrb[0].mxu0
    %v538 = vadd.f32 %v49, %v537
    %v539 = vpop.f32.mrb[0].mxu0
    %540 = vmatprep.mubr.f32.mxu0 0.0
    %541 = vmatmul.mubr.f32.gmra.mrb[0].mxu0 %v466
    %v542 = vpop.f32.mrb[0].mxu0
    %v543 = vadd.f32 %v54, %v542
    %v544 = vpop.f32.mrb[0].mxu0
    %545 = vdwg.mxu0
    %v546 = vmax.f32 %v538, 0.0
    %v547 = vmax.f32 %v543, 0.0
    %v548 = vadd.f32 %v456, %v546
    %v549 = vadd.f32 %v457, %v547
    %s550 = scalar_lea.vmem [#allocation2], 64
    %551 = vst [vmem:[%s550] sm:$0xff] %v548
    %552 = vst [vmem:[%s550 + $0x8] sm:$0xff] %v549
    %v553 = vadd.f32 %v453, %v548
    %v554 = vadd.f32 %v454, %v549
    %s555 = scalar_lea.vmem %s0, 80
    %v556 = vld [vmem:[%s555] sm:$0xff]
    %v557 = vld [vmem:[%s555 + $0x8] sm:$0xff]
    %s558 = scalar_lea.vmem %s1, 20
    %v559 = vld [vmem:[%s558] sm:$0xf]
    %v560 = vld [vmem:[%s2] sm:$0xff]
    %v561 = vld [vmem:[%s2 + $0x8] sm:$0xff]
    %v563 = vsel %vm61, %v560, 0
    %v566 = vsel %vm61, %v561, 0
    %v569 = vsel %vm68, %v559, 0
    %571 = vmatprep.subr.mxu0 0.0
    %572 = vmatpush1.msra.mxu0 %v569
    %573 = vmatprep.subr.mxu0 0.0
    %574 = vmatpush1.msra.mxu0 0.0
    %575 = vmatprep.subr.mxu0 0.0
    %576 = vmatpush1.msra.mxu0 0.0
    %577 = vmatprep.subr.mxu0 0.0
    %578 = vmatpush1.msra.mxu0 0.0
    %579 = vmatprep.subr.mxu0 0.0
    %580 = vmatpush1.msra.mxu0 0.0
    %581 = vmatprep.subr.mxu0 0.0
    %582 = vmatpush1.msra.mxu0 0.0
    %583 = vmatprep.subr.mxu0 0.0
    %584 = vmatpush1.msra.mxu0 0.0
    %585 = vmatprep.subr.mxu0 0.0
    %586 = vmatpush1.msra.mxu0 0.0
    %587 = vmatprep.subr.mxu0 0.0
    %588 = vmatpush1.msra.mxu0 0.0
    %589 = vmatprep.subr.mxu0 0.0
    %590 = vmatpush1.msra.mxu0 0.0
    %591 = vmatprep.subr.mxu0 0.0
    %592 = vmatpush1.msra.mxu0 0.0
    %593 = vmatprep.subr.mxu0 0.0
    %594 = vmatpush1.msra.mxu0 0.0
    %595 = vmatprep.subr.mxu0 0.0
    %596 = vmatpush1.msra.mxu0 0.0
    %597 = vmatprep.subr.mxu0 0.0
    %598 = vmatpush1.msra.mxu0 0.0
    %599 = vmatprep.subr.mxu0 0.0
    %600 = vmatpush1.msra.mxu0 0.0
    %601 = vmatprep.subr.mxu0 0.0
    %602 = vmatpush1.msra.mxu0 0.0
    %603 = vmatprep.subr.mxu0 0.0
    %604 = vmatpush1.msra.mxu0 0.0
    %605 = vmatprep.subr.mxu0 0.0
    %606 = vmatpush1.msra.mxu0 0.0
    %607 = vmatprep.subr.mxu0 0.0
    %608 = vmatpush1.msra.mxu0 0.0
    %609 = vmatprep.subr.mxu0 0.0
    %610 = vmatpush1.msra.mxu0 0.0
    %611 = vmatprep.subr.mxu0 0.0
    %612 = vmatpush1.msra.mxu0 0.0
    %613 = vmatprep.subr.mxu0 0.0
    %614 = vmatpush1.msra.mxu0 0.0
    %615 = vmatprep.subr.mxu0 0.0
    %616 = vmatpush1.msra.mxu0 0.0
    %617 = vmatprep.subr.mxu0 0.0
    %618 = vmatpush1.msra.mxu0 0.0
    %619 = vmatprep.subr.mxu0 0.0
    %620 = vmatpush1.msra.mxu0 0.0
    %621 = vmatprep.subr.mxu0 0.0
    %622 = vmatpush1.msra.mxu0 0.0
    %623 = vmatprep.subr.mxu0 0.0
    %624 = vmatpush1.msra.mxu0 0.0
    %625 = vmatprep.subr.mxu0 0.0
    %626 = vmatpush1.msra.mxu0 0.0
    %627 = vmatprep.subr.mxu0 0.0
    %628 = vmatpush1.msra.mxu0 0.0
    %629 = vmatprep.subr.mxu0 0.0
    %630 = vmatpush1.msra.mxu0 0.0
    %631 = vmatprep.subr.mxu0 0.0
    %632 = vmatpush1.msra.mxu0 0.0
    %633 = vmatprep.subr.mxu0 0.0
    %634 = vmatpush1.msra.mxu0 0.0
    %635 = vmatprep.mubr.f32.mxu0 0.0
    %636 = vmatmul.mubr.f32.gmra.mrb[0].mxu0 %v563
    %v637 = vpop.f32.mrb[0].mxu0
    %v638 = vadd.f32 %v49, %v637
    %v639 = vpop.f32.mrb[0].mxu0
    %640 = vmatprep.mubr.f32.mxu0 0.0
    %641 = vmatmul.mubr.f32.gmra.mrb[0].mxu0 %v566
    %v642 = vpop.f32.mrb[0].mxu0
    %v643 = vadd.f32 %v54, %v642
    %v644 = vpop.f32.mrb[0].mxu0
    %645 = vdwg.mxu0
    %v646 = vmax.f32 %v638, 0.0
    %v647 = vmax.f32 %v643, 0.0
    %v648 = vadd.f32 %v556, %v646
    %v649 = vadd.f32 %v557, %v647
    %s650 = scalar_lea.vmem [#allocation2], 80
    %651 = vst [vmem:[%s650] sm:$0xff] %v648
    %652 = vst [vmem:[%s650 + $0x8] sm:$0xff] %v649
    %v653 = vadd.f32 %v553, %v648
    %v654 = vadd.f32 %v554, %v649
    %s655 = scalar_lea.vmem %s0, 96
    %v656 = vld [vmem:[%s655] sm:$0xff]
    %v657 = vld [vmem:[%s655 + $0x8] sm:$0xff]
    %s658 = scalar_lea.vmem %s1, 24
    %v659 = vld [vmem:[%s658] sm:$0xf]
    %v660 = vld [vmem:[%s2] sm:$0xff]
    %v661 = vld [vmem:[%s2 + $0x8] sm:$0xff]
    %v663 = vsel %vm61, %v660, 0
    %v666 = vsel %vm61, %v661, 0
    %v669 = vsel %vm68, %v659, 0
    %671 = vmatprep.subr.mxu0 0.0
    %672 = vmatpush1.msra.mxu0 %v669
    %673 = vmatprep.subr.mxu0 0.0
    %674 = vmatpush1.msra.mxu0 0.0
    %675 = vmatprep.subr.mxu0 0.0
    %676 = vmatpush1.msra.mxu0 0.0
    %677 = vmatprep.subr.mxu0 0.0
    %678 = vmatpush1.msra.mxu0 0.0
    %679 = vmatprep.subr.mxu0 0.0
    %680 = vmatpush1.msra.mxu0 0.0
    %681 = vmatprep.subr.mxu0 0.0
    %682 = vmatpush1.msra.mxu0 0.0
    %683 = vmatprep.subr.mxu0 0.0
    %684 = vmatpush1.msra.mxu0 0.0
    %685 = vmatprep.subr.mxu0 0.0
    %686 = vmatpush1.msra.mxu0 0.0
    %687 = vmatprep.subr.mxu0 0.0
    %688 = vmatpush1.msra.mxu0 0.0
    %689 = vmatprep.subr.mxu0 0.0
    %690 = vmatpush1.msra.mxu0 0.0
    %691 = vmatprep.subr.mxu0 0.0
    %692 = vmatpush1.msra.mxu0 0.0
    %693 = vmatprep.subr.mxu0 0.0
    %694 = vmatpush1.msra.mxu0 0.0
    %695 = vmatprep.subr.mxu0 0.0
    %696 = vmatpush1.msra.mxu0 0.0
    %697 = vmatprep.subr.mxu0 0.0
    %698 = vmatpush1.msra.mxu0 0.0
    %699 = vmatprep.subr.mxu0 0.0
    %700 = vmatpush1.msra.mxu0 0.0
    %701 = vmatprep.subr.mxu0 0.0
    %702 = vmatpush1.msra.mxu0 0.0
    %703 = vmatprep.subr.mxu0 0.0
    %704 = vmatpush1.msra.mxu0 0.0
    %705 = vmatprep.subr.mxu0 0.0
    %706 = vmatpush1.msra.mxu0 0.0
    %707 = vmatprep.subr.mxu0 0.0
    %708 = vmatpush1.msra.mxu0 0.0
    %709 = vmatprep.subr.mxu0 0.0
    %710 = vmatpush1.msra.mxu0 0.0
    %711 = vmatprep.subr.mxu0 0.0
    %712 = vmatpush1.msra.mxu0 0.0
    %713 = vmatprep.subr.mxu0 0.0
    %714 = vmatpush1.msra.mxu0 0.0
    %715 = vmatprep.subr.mxu0 0.0
    %716 = vmatpush1.msra.mxu0 0.0
    %717 = vmatprep.subr.mxu0 0.0
    %718 = vmatpush1.msra.mxu0 0.0
    %719 = vmatprep.subr.mxu0 0.0
    %720 = vmatpush1.msra.mxu0 0.0
    %721 = vmatprep.subr.mxu0 0.0
    %722 = vmatpush1.msra.mxu0 0.0
    %723 = vmatprep.subr.mxu0 0.0
    %724 = vmatpush1.msra.mxu0 0.0
    %725 = vmatprep.subr.mxu0 0.0
    %726 = vmatpush1.msra.mxu0 0.0
    %727 = vmatprep.subr.mxu0 0.0
    %728 = vmatpush1.msra.mxu0 0.0
    %729 = vmatprep.subr.mxu0 0.0
    %730 = vmatpush1.msra.mxu0 0.0
    %731 = vmatprep.subr.mxu0 0.0
    %732 = vmatpush1.msra.mxu0 0.0
    %733 = vmatprep.subr.mxu0 0.0
    %734 = vmatpush1.msra.mxu0 0.0
    %735 = vmatprep.mubr.f32.mxu0 0.0
    %736 = vmatmul.mubr.f32.gmra.mrb[0].mxu0 %v663
    %v737 = vpop.f32.mrb[0].mxu0
    %v738 = vadd.f32 %v49, %v737
    %v739 = vpop.f32.mrb[0].mxu0
    %740 = vmatprep.mubr.f32.mxu0 0.0
    %741 = vmatmul.mubr.f32.gmra.mrb[0].mxu0 %v666
    %v742 = vpop.f32.mrb[0].mxu0
    %v743 = vadd.f32 %v54, %v742
    %v744 = vpop.f32.mrb[0].mxu0
    %745 = vdwg.mxu0
    %v746 = vmax.f32 %v738, 0.0
    %v747 = vmax.f32 %v743, 0.0
    %v748 = vadd.f32 %v656, %v746
    %v749 = vadd.f32 %v657, %v747
    %s750 = scalar_lea.vmem [#allocation2], 96
    %751 = vst [vmem:[%s750] sm:$0xff] %v748
    %752 = vst [vmem:[%s750 + $0x8] sm:$0xff] %v749
    %v753 = vadd.f32 %v653, %v748
    %v754 = vadd.f32 %v654, %v749
    %s755 = scalar_lea.vmem %s0, 112
    %v756 = vld [vmem:[%s755] sm:$0xff]
    %v757 = vld [vmem:[%s755 + $0x8] sm:$0xff]
    %s758 = scalar_lea.vmem %s1, 28
    %v759 = vld [vmem:[%s758] sm:$0xf]
    %v760 = vld [vmem:[%s2] sm:$0xff]
    %v761 = vld [vmem:[%s2 + $0x8] sm:$0xff]
    %v763 = vsel %vm61, %v760, 0
    %v766 = vsel %vm61, %v761, 0
    %v769 = vsel %vm68, %v759, 0
    %771 = vmatprep.subr.mxu0 0.0
    %772 = vmatpush1.msra.mxu0 %v769
    %773 = vmatprep.subr.mxu0 0.0
    %774 = vmatpush1.msra.mxu0 0.0
    %775 = vmatprep.subr.mxu0 0.0
    %776 = vmatpush1.msra.mxu0 0.0
    %777 = vmatprep.subr.mxu0 0.0
    %778 = vmatpush1.msra.mxu0 0.0
    %779 = vmatprep.subr.mxu0 0.0
    %780 = vmatpush1.msra.mxu0 0.0
    %781 = vmatprep.subr.mxu0 0.0
    %782 = vmatpush1.msra.mxu0 0.0
    %783 = vmatprep.subr.mxu0 0.0
    %784 = vmatpush1.msra.mxu0 0.0
    %785 = vmatprep.subr.mxu0 0.0
    %786 = vmatpush1.msra.mxu0 0.0
    %787 = vmatprep.subr.mxu0 0.0
    %788 = vmatpush1.msra.mxu0 0.0
    %789 = vmatprep.subr.mxu0 0.0
    %790 = vmatpush1.msra.mxu0 0.0
    %791 = vmatprep.subr.mxu0 0.0
    %792 = vmatpush1.msra.mxu0 0.0
    %793 = vmatprep.subr.mxu0 0.0
    %794 = vmatpush1.msra.mxu0 0.0
    %795 = vmatprep.subr.mxu0 0.0
    %796 = vmatpush1.msra.mxu0 0.0
    %797 = vmatprep.subr.mxu0 0.0
    %798 = vmatpush1.msra.mxu0 0.0
    %799 = vmatprep.subr.mxu0 0.0
    %800 = vmatpush1.msra.mxu0 0.0
    %801 = vmatprep.subr.mxu0 0.0
    %802 = vmatpush1.msra.mxu0 0.0
    %803 = vmatprep.subr.mxu0 0.0
    %804 = vmatpush1.msra.mxu0 0.0
    %805 = vmatprep.subr.mxu0 0.0
    %806 = vmatpush1.msra.mxu0 0.0
    %807 = vmatprep.subr.mxu0 0.0
    %808 = vmatpush1.msra.mxu0 0.0
    %809 = vmatprep.subr.mxu0 0.0
    %810 = vmatpush1.msra.mxu0 0.0
    %811 = vmatprep.subr.mxu0 0.0
    %812 = vmatpush1.msra.mxu0 0.0
    %813 = vmatprep.subr.mxu0 0.0
    %814 = vmatpush1.msra.mxu0 0.0
    %815 = vmatprep.subr.mxu0 0.0
    %816 = vmatpush1.msra.mxu0 0.0
    %817 = vmatprep.subr.mxu0 0.0
    %818 = vmatpush1.msra.mxu0 0.0
    %819 = vmatprep.subr.mxu0 0.0
    %820 = vmatpush1.msra.mxu0 0.0
    %821 = vmatprep.subr.mxu0 0.0
    %822 = vmatpush1.msra.mxu0 0.0
    %823 = vmatprep.subr.mxu0 0.0
    %824 = vmatpush1.msra.mxu0 0.0
    %825 = vmatprep.subr.mxu0 0.0
    %826 = vmatpush1.msra.mxu0 0.0
    %827 = vmatprep.subr.mxu0 0.0
    %828 = vmatpush1.msra.mxu0 0.0
    %829 = vmatprep.subr.mxu0 0.0
    %830 = vmatpush1.msra.mxu0 0.0
    %831 = vmatprep.subr.mxu0 0.0
    %832 = vmatpush1.msra.mxu0 0.0
    %833 = vmatprep.subr.mxu0 0.0
    %834 = vmatpush1.msra.mxu0 0.0
    %835 = vmatprep.mubr.f32.mxu0 0.0
    %836 = vmatmul.mubr.f32.gmra.mrb[0].mxu0 %v763
    %v837 = vpop.f32.mrb[0].mxu0
    %v838 = vadd.f32 %v49, %v837
    %v839 = vpop.f32.mrb[0].mxu0
    %840 = vmatprep.mubr.f32.mxu0 0.0
    %841 = vmatmul.mubr.f32.gmra.mrb[0].mxu0 %v766
    %v842 = vpop.f32.mrb[0].mxu0
    %v843 = vadd.f32 %v54, %v842
    %v844 = vpop.f32.mrb[0].mxu0
    %845 = vdwg.mxu0
    %v846 = vmax.f32 %v838, 0.0
    %v847 = vmax.f32 %v843, 0.0
    %v848 = vadd.f32 %v756, %v846
    %v849 = vadd.f32 %v757, %v847
    %s850 = scalar_lea.vmem [#allocation2], 112
    %851 = vst [vmem:[%s850] sm:$0xff] %v848
    %852 = vst [vmem:[%s850 + $0x8] sm:$0xff] %v849
    %v853 = vadd.f32 %v753, %v848
    %v854 = vadd.f32 %v754, %v849
    %v855 = vmul.f32 %v853, 0.125
    %v856 = vmul.f32 %v854, 0.125
    %v857 = vld [vmem:[#allocation2] sm:$0xff]
    %v858 = vld [vmem:[#allocation2 + $0x8] sm:$0xff]
    %v859 = vsub.f32 %v857, %v855
    %v860 = vsub.f32 %v858, %v856
    %v861 = vmul.f32 %v859, %v859
    %v862 = vmul.f32 %v860, %v860
    %v863 = vadd.f32 %v861, 0.0
    %v864 = vadd.f32 %v862, 0.0
    %v865 = vld [vmem:[%s250] sm:$0xff]
    %v866 = vld [vmem:[%s250 + $0x8] sm:$0xff]
    %v867 = vsub.f32 %v865, %v855
    %v868 = vsub.f32 %v866, %v856
    %v869 = vmul.f32 %v867, %v867
    %v870 = vmul.f32 %v868, %v868
    %v871 = vadd.f32 %v863, %v869
    %v872 = vadd.f32 %v864, %v870
    %v873 = vld [vmem:[%s350] sm:$0xff]
    %v874 = vld [vmem:[%s350 + $0x8] sm:$0xff]
    %v875 = vsub.f32 %v873, %v855
    %v876 = vsub.f32 %v874, %v856
    %v877 = vmul.f32 %v875, %v875
    %v878 = vmul.f32 %v876, %v876
    %v879 = vadd.f32 %v871, %v877
    %v880 = vadd.f32 %v872, %v878
    %v881 = vld [vmem:[%s450] sm:$0xff]
    %v882 = vld [vmem:[%s450 + $0x8] sm:$0xff]
    %v883 = vsub.f32 %v881, %v855
    %v884 = vsub.f32 %v882, %v856
    %v885 = vmul.f32 %v883, %v883
    %v886 = vmul.f32 %v884, %v884
    %v887 = vadd.f32 %v879, %v885
    %v888 = vadd.f32 %v880, %v886
    %v889 = vld [vmem:[%s550] sm:$0xff]
    %v890 = vld [vmem:[%s550 + $0x8] sm:$0xff]
    %v891 = vsub.f32 %v889, %v855
    %v892 = vsub.f32 %v890, %v856
    %v893 = vmul.f32 %v891, %v891
    %v894 = vmul.f32 %v892, %v892
    %v895 = vadd.f32 %v887, %v893
    %v896 = vadd.f32 %v888, %v894
    %v897 = vld [vmem:[%s650] sm:$0xff]
    %v898 = vld [vmem:[%s650 + $0x8] sm:$0xff]
    %v899 = vsub.f32 %v897, %v855
    %v900 = vsub.f32 %v898, %v856
    %v901 = vmul.f32 %v899, %v899
    %v902 = vmul.f32 %v900, %v900
    %v903 = vadd.f32 %v895, %v901
    %v904 = vadd.f32 %v896, %v902
    %v905 = vld [vmem:[%s750] sm:$0xff]
    %v906 = vld [vmem:[%s750 + $0x8] sm:$0xff]
    %v907 = vsub.f32 %v905, %v855
    %v908 = vsub.f32 %v906, %v856
    %v909 = vmul.f32 %v907, %v907
    %v910 = vmul.f32 %v908, %v908
    %v911 = vadd.f32 %v903, %v909
    %v912 = vadd.f32 %v904, %v910
    %v913 = vld [vmem:[%s850] sm:$0xff]
    %v914 = vld [vmem:[%s850 + $0x8] sm:$0xff]
    %v915 = vsub.f32 %v913, %v855
    %v916 = vsub.f32 %v914, %v856
    %v917 = vmul.f32 %v915, %v915
    %v918 = vmul.f32 %v916, %v916
    %v919 = vadd.f32 %v911, %v917
    %v920 = vadd.f32 %v912, %v918
    %v921 = vmul.f32 %v919, 0.14285715
    %v922 = vmul.f32 %v920, 0.14285715
    %v923 = vld [vmem:[%s5] sm:$0xff]
    %v924 = vld [vmem:[%s5 + $0x8] sm:$0xff]
    %v925 = vld [vmem:[%s5 + $0x10] sm:$0xff]
    %v926 = vld [vmem:[%s5 + $0x18] sm:$0xff]
    %v927 = vld [vmem:[%s6] sm:$0xff]
    %v928 = vld [vmem:[%s6 + $0x8] sm:$0xff]
    %v929 = vld [vmem:[%s6 + $0x10] sm:$0xff]
    %v930 = vld [vmem:[%s6 + $0x18] sm:$0xff]
    %vm931 = vcmask 130048
    %v933 = vsel %vm931, %v927, 0
    %v936 = vsel %vm931, %v928, 0
    %v939 = vsel %vm931, %v929, 0
    %v942 = vsel %vm931, %v930, 0
    %944 = vmatprep.subr.mxu0 0.0
    %945 = vmatpush1.msra.mxu0 %v855
    %946 = vmatprep.subr.mxu0 0.0
    %947 = vmatpush1.msra.mxu0 %v856
    %948 = vmatprep.subr.mxu0 0.0
    %949 = vmatpush1.msra.mxu0 0.0
    %950 = vmatprep.subr.mxu0 0.0
    %951 = vmatpush1.msra.mxu0 0.0
    %952 = vmatprep.subr.mxu0 0.0
    %953 = vmatpush1.msra.mxu0 0.0
    %954 = vmatprep.subr.mxu0 0.0
    %955 = vmatpush1.msra.mxu0 0.0
    %956 = vmatprep.subr.mxu0 0.0
    %957 = vmatpush1.msra.mxu0 0.0
    %958 = vmatprep.subr.mxu0 0.0
    %959 = vmatpush1.msra.mxu0 0.0
    %960 = vmatprep.subr.mxu0 0.0
    %961 = vmatpush1.msra.mxu0 0.0
    %962 = vmatprep.subr.mxu0 0.0
    %963 = vmatpush1.msra.mxu0 0.0
    %964 = vmatprep.subr.mxu0 0.0
    %965 = vmatpush1.msra.mxu0 0.0
    %966 = vmatprep.subr.mxu0 0.0
    %967 = vmatpush1.msra.mxu0 0.0
    %968 = vmatprep.subr.mxu0 0.0
    %969 = vmatpush1.msra.mxu0 0.0
    %970 = vmatprep.subr.mxu0 0.0
    %971 = vmatpush1.msra.mxu0 0.0
    %972 = vmatprep.subr.mxu0 0.0
    %973 = vmatpush1.msra.mxu0 0.0
    %974 = vmatprep.subr.mxu0 0.0
    %975 = vmatpush1.msra.mxu0 0.0
    %976 = vmatprep.subr.mxu0 0.0
    %977 = vmatpush1.msra.mxu0 0.0
    %978 = vmatprep.subr.mxu0 0.0
    %979 = vmatpush1.msra.mxu0 0.0
    %980 = vmatprep.subr.mxu0 0.0
    %981 = vmatpush1.msra.mxu0 0.0
    %982 = vmatprep.subr.mxu0 0.0
    %983 = vmatpush1.msra.mxu0 0.0
    %984 = vmatprep.subr.mxu0 0.0
    %985 = vmatpush1.msra.mxu0 0.0
    %986 = vmatprep.subr.mxu0 0.0
    %987 = vmatpush1.msra.mxu0 0.0
    %988 = vmatprep.subr.mxu0 0.0
    %989 = vmatpush1.msra.mxu0 0.0
    %990 = vmatprep.subr.mxu0 0.0
    %991 = vmatpush1.msra.mxu0 0.0
    %992 = vmatprep.subr.mxu0 0.0
    %993 = vmatpush1.msra.mxu0 0.0
    %994 = vmatprep.subr.mxu0 0.0
    %995 = vmatpush1.msra.mxu0 0.0
    %996 = vmatprep.subr.mxu0 0.0
    %997 = vmatpush1.msra.mxu0 0.0
    %998 = vmatprep.subr.mxu0 0.0
    %999 = vmatpush1.msra.mxu0 0.0
    %1000 = vmatprep.subr.mxu0 0.0
    %1001 = vmatpush1.msra.mxu0 0.0
    %1002 = vmatprep.subr.mxu0 0.0
    %1003 = vmatpush1.msra.mxu0 0.0
    %1004 = vmatprep.subr.mxu0 0.0
    %1005 = vmatpush1.msra.mxu0 0.0
    %1006 = vmatprep.subr.mxu0 0.0
    %1007 = vmatpush1.msra.mxu0 0.0
    %1008 = vmatprep.mubr.f32.mxu0 0.0
    %1009 = vmatmul.mubr.f32.gmra.mrb[0].mxu0 %v933
    %v1010 = vpop.f32.mrb[0].mxu0
    %v1011 = vadd.f32 0.0, %v1010
    %v1012 = vpop.f32.mrb[0].mxu0
    %1013 = vmatprep.mubr.f32.mxu0 0.0
    %1014 = vmatmul.mubr.f32.gmra.mrb[0].mxu0 %v936
    %v1015 = vpop.f32.mrb[0].mxu0
    %v1016 = vadd.f32 0.0, %v1015
    %v1017 = vpop.f32.mrb[0].mxu0
    %1018 = vmatprep.mubr.f32.mxu0 0.0
    %1019 = vmatmul.mubr.f32.gmra.mrb[0].mxu0 %v939
    %v1020 = vpop.f32.mrb[0].mxu0
    %v1021 = vadd.f32 0.0, %v1020
    %v1022 = vpop.f32.mrb[0].mxu0
    %1023 = vmatprep.mubr.f32.mxu0 0.0
    %1024 = vmatmul.mubr.f32.gmra.mrb[0].mxu0 %v942
    %v1025 = vpop.f32.mrb[0].mxu0
    %v1026 = vadd.f32 0.0, %v1025
    %v1027 = vpop.f32.mrb[0].mxu0
    %1028 = vdwg.mxu0
    %v1030 = vsel %vm931, %v923, 0
    %v1033 = vsel %vm931, %v924, 0
    %v1036 = vsel %vm931, %v925, 0
    %v1039 = vsel %vm931, %v926, 0
    %1041 = vmatprep.subr.mxu0 0.0
    %1042 = vmatpush1.msra.mxu0 %v921
    %1043 = vmatprep.subr.mxu0 0.0
    %1044 = vmatpush1.msra.mxu0 %v922
    %1045 = vmatprep.subr.mxu0 0.0
    %1046 = vmatpush1.msra.mxu0 0.0
    %1047 = vmatprep.subr.mxu0 0.0
    %1048 = vmatpush1.msra.mxu0 0.0
    %1049 = vmatprep.subr.mxu0 0.0
    %1050 = vmatpush1.msra.mxu0 0.0
    %1051 = vmatprep.subr.mxu0 0.0
    %1052 = vmatpush1.msra.mxu0 0.0
    %1053 = vmatprep.subr.mxu0 0.0
    %1054 = vmatpush1.msra.mxu0 0.0
    %1055 = vmatprep.subr.mxu0 0.0
    %1056 = vmatpush1.msra.mxu0 0.0
    %1057 = vmatprep.subr.mxu0 0.0
    %1058 = vmatpush1.msra.mxu0 0.0
    %1059 = vmatprep.subr.mxu0 0.0
    %1060 = vmatpush1.msra.mxu0 0.0
    %1061 = vmatprep.subr.mxu0 0.0
    %1062 = vmatpush1.msra.mxu0 0.0
    %1063 = vmatprep.subr.mxu0 0.0
    %1064 = vmatpush1.msra.mxu0 0.0
    %1065 = vmatprep.subr.mxu0 0.0
    %1066 = vmatpush1.msra.mxu0 0.0
    %1067 = vmatprep.subr.mxu0 0.0
    %1068 = vmatpush1.msra.mxu0 0.0
    %1069 = vmatprep.subr.mxu0 0.0
    %1070 = vmatpush1.msra.mxu0 0.0
    %1071 = vmatprep.subr.mxu0 0.0
    %1072 = vmatpush1.msra.mxu0 0.0
    %1073 = vmatprep.subr.mxu0 0.0
    %1074 = vmatpush1.msra.mxu0 0.0
    %1075 = vmatprep.subr.mxu0 0.0
    %1076 = vmatpush1.msra.mxu0 0.0
    %1077 = vmatprep.subr.mxu0 0.0
    %1078 = vmatpush1.msra.mxu0 0.0
    %1079 = vmatprep.subr.mxu0 0.0
    %1080 = vmatpush1.msra.mxu0 0.0
    %1081 = vmatprep.subr.mxu0 0.0
    %1082 = vmatpush1.msra.mxu0 0.0
    %1083 = vmatprep.subr.mxu0 0.0
    %1084 = vmatpush1.msra.mxu0 0.0
    %1085 = vmatprep.subr.mxu0 0.0
    %1086 = vmatpush1.msra.mxu0 0.0
    %1087 = vmatprep.subr.mxu0 0.0
    %1088 = vmatpush1.msra.mxu0 0.0
    %1089 = vmatprep.subr.mxu0 0.0
    %1090 = vmatpush1.msra.mxu0 0.0
    %1091 = vmatprep.subr.mxu0 0.0
    %1092 = vmatpush1.msra.mxu0 0.0
    %1093 = vmatprep.subr.mxu0 0.0
    %1094 = vmatpush1.msra.mxu0 0.0
    %1095 = vmatprep.subr.mxu0 0.0
    %1096 = vmatpush1.msra.mxu0 0.0
    %1097 = vmatprep.subr.mxu0 0.0
    %1098 = vmatpush1.msra.mxu0 0.0
    %1099 = vmatprep.subr.mxu0 0.0
    %1100 = vmatpush1.msra.mxu0 0.0
    %1101 = vmatprep.subr.mxu0 0.0
    %1102 = vmatpush1.msra.mxu0 0.0
    %1103 = vmatprep.subr.mxu0 0.0
    %1104 = vmatpush1.msra.mxu0 0.0
    %1105 = vmatprep.mubr.f32.mxu0 0.0
    %1106 = vmatmul.mubr.f32.gmra.mrb[0].mxu0 %v1030
    %v1107 = vpop.f32.mrb[0].mxu0
    %v1108 = vadd.f32 %v1011, %v1107
    %v1109 = vpop.f32.mrb[0].mxu0
    %1110 = vmatprep.mubr.f32.mxu0 0.0
    %1111 = vmatmul.mubr.f32.gmra.mrb[0].mxu0 %v1033
    %v1112 = vpop.f32.mrb[0].mxu0
    %v1113 = vadd.f32 %v1016, %v1112
    %v1114 = vpop.f32.mrb[0].mxu0
    %1115 = vmatprep.mubr.f32.mxu0 0.0
    %1116 = vmatmul.mubr.f32.gmra.mrb[0].mxu0 %v1036
    %v1117 = vpop.f32.mrb[0].mxu0
    %v1118 = vadd.f32 %v1021, %v1117
    %v1119 = vpop.f32.mrb[0].mxu0
    %1120 = vmatprep.mubr.f32.mxu0 0.0
    %1121 = vmatmul.mubr.f32.gmra.mrb[0].mxu0 %v1039
    %v1122 = vpop.f32.mrb[0].mxu0
    %v1123 = vadd.f32 %v1026, %v1122
    %v1124 = vpop.f32.mrb[0].mxu0
    %1125 = vdwg.mxu0
    %v1126 = vld [vmem:[%s7] sm:$0xff]
    %v1127 = vld [vmem:[%s7 + $0x8] sm:$0xff]
    %v1128 = vld [vmem:[%s7 + $0x10] sm:$0xff]
    %v1129 = vld [vmem:[%s7 + $0x18] sm:$0xff]
    %1131 = vset.pattern.permute.xlu0 0
    %1132 = vperm.xlu0 %1131, %v1126
    %v1133 = vpop.permute.xlu0 %1132
    %1136 = vset.pattern.permute.xlu0 0
    %1137 = vperm.xlu0 %1136, %v1127
    %v1138 = vpop.permute.xlu0 %1137
    %1141 = vset.pattern.permute.xlu0 0
    %1142 = vperm.xlu0 %1141, %v1128
    %v1143 = vpop.permute.xlu0 %1142
    %1146 = vset.pattern.permute.xlu0 0
    %1147 = vperm.xlu0 %1146, %v1129
    %v1148 = vpop.permute.xlu0 %1147
    %v1150 = vadd.f32 %v1108, %v1133
    %v1151 = vadd.f32 %v1113, %v1138
    %v1152 = vadd.f32 %v1118, %v1143
    %v1153 = vadd.f32 %v1123, %v1148
    %v1154 = vld [vmem:[%s8] sm:$0xff]
    %v1155 = vld [vmem:[%s8 + $0x8] sm:$0xff]
    %v1156 = vld [vmem:[%s8 + $0x10] sm:$0xff]
    %v1157 = vld [vmem:[%s8 + $0x18] sm:$0xff]
    %1159 = vset.pattern.permute.xlu0 0
    %1160 = vperm.xlu0 %1159, %v1154
    %v1161 = vpop.permute.xlu0 %1160
    %1164 = vset.pattern.permute.xlu0 0
    %1165 = vperm.xlu0 %1164, %v1155
    %v1166 = vpop.permute.xlu0 %1165
    %1169 = vset.pattern.permute.xlu0 0
    %1170 = vperm.xlu0 %1169, %v1156
    %v1171 = vpop.permute.xlu0 %1170
    %1174 = vset.pattern.permute.xlu0 0
    %1175 = vperm.xlu0 %1174, %v1157
    %v1176 = vpop.permute.xlu0 %1175
    %v1178 = vld [vmem:[#allocation4] sm:$0x1]
    %1180 = vset.pattern.permute.xlu0 0
    %1181 = vperm.xlu0 %1180, %v1178
    %v1182 = vpop.permute.xlu0 %1181
    %v1184 = vlaneseq
    %v1185 = vshrl.u32 %v1184, 7
    %v1186 = vsub.s32 0, %v1185
    %v1187 = vrot.slane %v1182, %v1186
    %v1188 = vld [vmem:[%s4] sm:$0xff]
    %v1189 = vld [vmem:[%s4 + $0x8] sm:$0xff]
    %v1190 = vld [vmem:[%s4 + $0x10] sm:$0xff]
    %v1191 = vld [vmem:[%s4 + $0x18] sm:$0xff]
    %v1193 = vsel %vm931, %v1188, 0
    %v1196 = vsel %vm931, %v1189, 0
    %v1199 = vsel %vm931, %v1190, 0
    %v1202 = vsel %vm931, %v1191, 0
    %1204 = vmatprep.subr.mxu0 0.0
    %1205 = vmatpush1.msra.mxu0 %v857
    %1206 = vmatprep.subr.mxu0 0.0
    %1207 = vmatpush1.msra.mxu0 %v858
    %1208 = vmatprep.subr.mxu0 0.0
    %1209 = vmatpush1.msra.mxu0 0.0
    %1210 = vmatprep.subr.mxu0 0.0
    %1211 = vmatpush1.msra.mxu0 0.0
    %1212 = vmatprep.subr.mxu0 0.0
    %1213 = vmatpush1.msra.mxu0 0.0
    %1214 = vmatprep.subr.mxu0 0.0
    %1215 = vmatpush1.msra.mxu0 0.0
    %1216 = vmatprep.subr.mxu0 0.0
    %1217 = vmatpush1.msra.mxu0 0.0
    %1218 = vmatprep.subr.mxu0 0.0
    %1219 = vmatpush1.msra.mxu0 0.0
    %1220 = vmatprep.subr.mxu0 0.0
    %1221 = vmatpush1.msra.mxu0 0.0
    %1222 = vmatprep.subr.mxu0 0.0
    %1223 = vmatpush1.msra.mxu0 0.0
    %1224 = vmatprep.subr.mxu0 0.0
    %1225 = vmatpush1.msra.mxu0 0.0
    %1226 = vmatprep.subr.mxu0 0.0
    %1227 = vmatpush1.msra.mxu0 0.0
    %1228 = vmatprep.subr.mxu0 0.0
    %1229 = vmatpush1.msra.mxu0 0.0
    %1230 = vmatprep.subr.mxu0 0.0
    %1231 = vmatpush1.msra.mxu0 0.0
    %1232 = vmatprep.subr.mxu0 0.0
    %1233 = vmatpush1.msra.mxu0 0.0
    %1234 = vmatprep.subr.mxu0 0.0
    %1235 = vmatpush1.msra.mxu0 0.0
    %1236 = vmatprep.subr.mxu0 0.0
    %1237 = vmatpush1.msra.mxu0 0.0
    %1238 = vmatprep.subr.mxu0 0.0
    %1239 = vmatpush1.msra.mxu0 0.0
    %1240 = vmatprep.subr.mxu0 0.0
    %1241 = vmatpush1.msra.mxu0 0.0
    %1242 = vmatprep.subr.mxu0 0.0
    %1243 = vmatpush1.msra.mxu0 0.0
    %1244 = vmatprep.subr.mxu0 0.0
    %1245 = vmatpush1.msra.mxu0 0.0
    %1246 = vmatprep.subr.mxu0 0.0
    %1247 = vmatpush1.msra.mxu0 0.0
    %1248 = vmatprep.subr.mxu0 0.0
    %1249 = vmatpush1.msra.mxu0 0.0
    %1250 = vmatprep.subr.mxu0 0.0
    %1251 = vmatpush1.msra.mxu0 0.0
    %1252 = vmatprep.subr.mxu0 0.0
    %1253 = vmatpush1.msra.mxu0 0.0
    %1254 = vmatprep.subr.mxu0 0.0
    %1255 = vmatpush1.msra.mxu0 0.0
    %1256 = vmatprep.subr.mxu0 0.0
    %1257 = vmatpush1.msra.mxu0 0.0
    %1258 = vmatprep.subr.mxu0 0.0
    %1259 = vmatpush1.msra.mxu0 0.0
    %1260 = vmatprep.subr.mxu0 0.0
    %1261 = vmatpush1.msra.mxu0 0.0
    %1262 = vmatprep.subr.mxu0 0.0
    %1263 = vmatpush1.msra.mxu0 0.0
    %1264 = vmatprep.subr.mxu0 0.0
    %1265 = vmatpush1.msra.mxu0 0.0
    %1266 = vmatprep.subr.mxu0 0.0
    %1267 = vmatpush1.msra.mxu0 0.0
    %1268 = vmatprep.mubr.f32.mxu0 0.0
    %1269 = vmatmul.mubr.f32.gmra.mrb[0].mxu0 %v1193
    %v1270 = vpop.f32.mrb[0].mxu0
    %v1271 = vadd.f32 %v1150, %v1270
    %v1272 = vpop.f32.mrb[0].mxu0
    %1273 = vmatprep.mubr.f32.mxu0 0.0
    %1274 = vmatmul.mubr.f32.gmra.mrb[0].mxu0 %v1196
    %v1275 = vpop.f32.mrb[0].mxu0
    %v1276 = vadd.f32 %v1151, %v1275
    %v1277 = vpop.f32.mrb[0].mxu0
    %1278 = vmatprep.mubr.f32.mxu0 0.0
    %1279 = vmatmul.mubr.f32.gmra.mrb[0].mxu0 %v1199
    %v1280 = vpop.f32.mrb[0].mxu0
    %v1281 = vadd.f32 %v1152, %v1280
    %v1282 = vpop.f32.mrb[0].mxu0
    %1283 = vmatprep.mubr.f32.mxu0 0.0
    %1284 = vmatmul.mubr.f32.gmra.mrb[0].mxu0 %v1202
    %v1285 = vpop.f32.mrb[0].mxu0
    %v1286 = vadd.f32 %v1153, %v1285
    %v1287 = vpop.f32.mrb[0].mxu0
    %1288 = vdwg.mxu0
    %v1289 = vmax.f32 %v1271, 0.0
    %v1290 = vmax.f32 %v1276, 0.0
    %v1291 = vmax.f32 %v1281, 0.0
    %v1292 = vmax.f32 %v1286, 0.0
    %1293 = vst [vmem:[#allocation3] sm:$0xff] %v1289
    %1294 = vst [vmem:[#allocation3 + $0x8] sm:$0xff] %v1290
    %1295 = vst [vmem:[#allocation3 + $0x10] sm:$0xff] %v1291
    %1296 = vst [vmem:[#allocation3 + $0x18] sm:$0xff] %v1292
    %v1297 = vmul.f32 %v1289, %v1161
    %v1298 = vmul.f32 %v1290, %v1166
    %v1299 = vmul.f32 %v1291, %v1171
    %v1300 = vmul.f32 %v1292, %v1176
    %v1301 = vadd.f32 %v1297, %v1298
    %v1302 = vadd.f32 %v1301, %v1299
    %v1303 = vadd.f32 %v1302, %v1300
    %v1304 = vrot.slane %v1303, 4
    %v1305 = vadd.f32 %v1303, %v1304
    %v1306 = vrot.slane %v1305, 2
    %v1307 = vadd.f32 %v1305, %v1306
    %v1308 = vrot.slane %v1307, 1
    %v1309 = vadd.f32 %v1307, %v1308
    %v1310 = vadd.f32 %v1309, %v1187
    %v1311 = vmax.f32 %v1310, 0.0
    %v1312 = vld [vmem:[%s4] sm:$0xff]
    %v1313 = vld [vmem:[%s4 + $0x8] sm:$0xff]
    %v1314 = vld [vmem:[%s4 + $0x10] sm:$0xff]
    %v1315 = vld [vmem:[%s4 + $0x18] sm:$0xff]
    %v1316 = vld [vmem:[%s250] sm:$0xff]
    %v1317 = vld [vmem:[%s250 + $0x8] sm:$0xff]
    %v1319 = vsel %vm931, %v1312, 0
    %v1322 = vsel %vm931, %v1313, 0
    %v1325 = vsel %vm931, %v1314, 0
    %v1328 = vsel %vm931, %v1315, 0
    %1330 = vmatprep.subr.mxu0 0.0
    %1331 = vmatpush1.msra.mxu0 %v1316
    %1332 = vmatprep.subr.mxu0 0.0
    %1333 = vmatpush1.msra.mxu0 %v1317
    %1334 = vmatprep.subr.mxu0 0.0
    %1335 = vmatpush1.msra.mxu0 0.0
    %1336 = vmatprep.subr.mxu0 0.0
    %1337 = vmatpush1.msra.mxu0 0.0
    %1338 = vmatprep.subr.mxu0 0.0
    %1339 = vmatpush1.msra.mxu0 0.0
    %1340 = vmatprep.subr.mxu0 0.0
    %1341 = vmatpush1.msra.mxu0 0.0
    %1342 = vmatprep.subr.mxu0 0.0
    %1343 = vmatpush1.msra.mxu0 0.0
    %1344 = vmatprep.subr.mxu0 0.0
    %1345 = vmatpush1.msra.mxu0 0.0
    %1346 = vmatprep.subr.mxu0 0.0
    %1347 = vmatpush1.msra.mxu0 0.0
    %1348 = vmatprep.subr.mxu0 0.0
    %1349 = vmatpush1.msra.mxu0 0.0
    %1350 = vmatprep.subr.mxu0 0.0
    %1351 = vmatpush1.msra.mxu0 0.0
    %1352 = vmatprep.subr.mxu0 0.0
    %1353 = vmatpush1.msra.mxu0 0.0
    %1354 = vmatprep.subr.mxu0 0.0
    %1355 = vmatpush1.msra.mxu0 0.0
    %1356 = vmatprep.subr.mxu0 0.0
    %1357 = vmatpush1.msra.mxu0 0.0
    %1358 = vmatprep.subr.mxu0 0.0
    %1359 = vmatpush1.msra.mxu0 0.0
    %1360 = vmatprep.subr.mxu0 0.0
    %1361 = vmatpush1.msra.mxu0 0.0
    %1362 = vmatprep.subr.mxu0 0.0
    %1363 = vmatpush1.msra.mxu0 0.0
    %1364 = vmatprep.subr.mxu0 0.0
    %1365 = vmatpush1.msra.mxu0 0.0
    %1366 = vmatprep.subr.mxu0 0.0
    %1367 = vmatpush1.msra.mxu0 0.0
    %1368 = vmatprep.subr.mxu0 0.0
    %1369 = vmatpush1.msra.mxu0 0.0
    %1370 = vmatprep.subr.mxu0 0.0
    %1371 = vmatpush1.msra.mxu0 0.0
    %1372 = vmatprep.subr.mxu0 0.0
    %1373 = vmatpush1.msra.mxu0 0.0
    %1374 = vmatprep.subr.mxu0 0.0
    %1375 = vmatpush1.msra.mxu0 0.0
    %1376 = vmatprep.subr.mxu0 0.0
    %1377 = vmatpush1.msra.mxu0 0.0
    %1378 = vmatprep.subr.mxu0 0.0
    %1379 = vmatpush1.msra.mxu0 0.0
    %1380 = vmatprep.subr.mxu0 0.0
    %1381 = vmatpush1.msra.mxu0 0.0
    %1382 = vmatprep.subr.mxu0 0.0
    %1383 = vmatpush1.msra.mxu0 0.0
    %1384 = vmatprep.subr.mxu0 0.0
    %1385 = vmatpush1.msra.mxu0 0.0
    %1386 = vmatprep.subr.mxu0 0.0
    %1387 = vmatpush1.msra.mxu0 0.0
    %1388 = vmatprep.subr.mxu0 0.0
    %1389 = vmatpush1.msra.mxu0 0.0
    %1390 = vmatprep.subr.mxu0 0.0
    %1391 = vmatpush1.msra.mxu0 0.0
    %1392 = vmatprep.subr.mxu0 0.0
    %1393 = vmatpush1.msra.mxu0 0.0
    %1394 = vmatprep.mubr.f32.mxu0 0.0
    %1395 = vmatmul.mubr.f32.gmra.mrb[0].mxu0 %v1319
    %v1396 = vpop.f32.mrb[0].mxu0
    %v1397 = vadd.f32 %v1150, %v1396
    %v1398 = vpop.f32.mrb[0].mxu0
    %1399 = vmatprep.mubr.f32.mxu0 0.0
    %1400 = vmatmul.mubr.f32.gmra.mrb[0].mxu0 %v1322
    %v1401 = vpop.f32.mrb[0].mxu0
    %v1402 = vadd.f32 %v1151, %v1401
    %v1403 = vpop.f32.mrb[0].mxu0
    %1404 = vmatprep.mubr.f32.mxu0 0.0
    %1405 = vmatmul.mubr.f32.gmra.mrb[0].mxu0 %v1325
    %v1406 = vpop.f32.mrb[0].mxu0
    %v1407 = vadd.f32 %v1152, %v1406
    %v1408 = vpop.f32.mrb[0].mxu0
    %1409 = vmatprep.mubr.f32.mxu0 0.0
    %1410 = vmatmul.mubr.f32.gmra.mrb[0].mxu0 %v1328
    %v1411 = vpop.f32.mrb[0].mxu0
    %v1412 = vadd.f32 %v1153, %v1411
    %v1413 = vpop.f32.mrb[0].mxu0
    %1414 = vdwg.mxu0
    %v1415 = vmax.f32 %v1397, 0.0
    %v1416 = vmax.f32 %v1402, 0.0
    %v1417 = vmax.f32 %v1407, 0.0
    %v1418 = vmax.f32 %v1412, 0.0
    %s1419 = scalar_lea.vmem [#allocation3], 32
    %1420 = vst [vmem:[%s1419] sm:$0xff] %v1415
    %1421 = vst [vmem:[%s1419 + $0x8] sm:$0xff] %v1416
    %1422 = vst [vmem:[%s1419 + $0x10] sm:$0xff] %v1417
    %1423 = vst [vmem:[%s1419 + $0x18] sm:$0xff] %v1418
    %v1424 = vmul.f32 %v1415, %v1161
    %v1425 = vmul.f32 %v1416, %v1166
    %v1426 = vmul.f32 %v1417, %v1171
    %v1427 = vmul.f32 %v1418, %v1176
    %v1428 = vadd.f32 %v1424, %v1425
    %v1429 = vadd.f32 %v1428, %v1426
    %v1430 = vadd.f32 %v1429, %v1427
    %v1431 = vrot.slane %v1430, 4
    %v1432 = vadd.f32 %v1430, %v1431
    %v1433 = vrot.slane %v1432, 2
    %v1434 = vadd.f32 %v1432, %v1433
    %v1435 = vrot.slane %v1434, 1
    %v1436 = vadd.f32 %v1434, %v1435
    %v1437 = vadd.f32 %v1436, %v1187
    %v1438 = vmax.f32 %v1437, 0.0
    %v1439 = vld [vmem:[%s4] sm:$0xff]
    %v1440 = vld [vmem:[%s4 + $0x8] sm:$0xff]
    %v1441 = vld [vmem:[%s4 + $0x10] sm:$0xff]
    %v1442 = vld [vmem:[%s4 + $0x18] sm:$0xff]
    %v1443 = vld [vmem:[%s350] sm:$0xff]
    %v1444 = vld [vmem:[%s350 + $0x8] sm:$0xff]
    %v1446 = vsel %vm931, %v1439, 0
    %v1449 = vsel %vm931, %v1440, 0
    %v1452 = vsel %vm931, %v1441, 0
    %v1455 = vsel %vm931, %v1442, 0
    %1457 = vmatprep.subr.mxu0 0.0
    %1458 = vmatpush1.msra.mxu0 %v1443
    %1459 = vmatprep.subr.mxu0 0.0
    %1460 = vmatpush1.msra.mxu0 %v1444
    %1461 = vmatprep.subr.mxu0 0.0
    %1462 = vmatpush1.msra.mxu0 0.0
    %1463 = vmatprep.subr.mxu0 0.0
    %1464 = vmatpush1.msra.mxu0 0.0
    %1465 = vmatprep.subr.mxu0 0.0
    %1466 = vmatpush1.msra.mxu0 0.0
    %1467 = vmatprep.subr.mxu0 0.0
    %1468 = vmatpush1.msra.mxu0 0.0
    %1469 = vmatprep.subr.mxu0 0.0
    %1470 = vmatpush1.msra.mxu0 0.0
    %1471 = vmatprep.subr.mxu0 0.0
    %1472 = vmatpush1.msra.mxu0 0.0
    %1473 = vmatprep.subr.mxu0 0.0
    %1474 = vmatpush1.msra.mxu0 0.0
    %1475 = vmatprep.subr.mxu0 0.0
    %1476 = vmatpush1.msra.mxu0 0.0
    %1477 = vmatprep.subr.mxu0 0.0
    %1478 = vmatpush1.msra.mxu0 0.0
    %1479 = vmatprep.subr.mxu0 0.0
    %1480 = vmatpush1.msra.mxu0 0.0
    %1481 = vmatprep.subr.mxu0 0.0
    %1482 = vmatpush1.msra.mxu0 0.0
    %1483 = vmatprep.subr.mxu0 0.0
    %1484 = vmatpush1.msra.mxu0 0.0
    %1485 = vmatprep.subr.mxu0 0.0
    %1486 = vmatpush1.msra.mxu0 0.0
    %1487 = vmatprep.subr.mxu0 0.0
    %1488 = vmatpush1.msra.mxu0 0.0
    %1489 = vmatprep.subr.mxu0 0.0
    %1490 = vmatpush1.msra.mxu0 0.0
    %1491 = vmatprep.subr.mxu0 0.0
    %1492 = vmatpush1.msra.mxu0 0.0
    %1493 = vmatprep.subr.mxu0 0.0
    %1494 = vmatpush1.msra.mxu0 0.0
    %1495 = vmatprep.subr.mxu0 0.0
    %1496 = vmatpush1.msra.mxu0 0.0
    %1497 = vmatprep.subr.mxu0 0.0
    %1498 = vmatpush1.msra.mxu0 0.0
    %1499 = vmatprep.subr.mxu0 0.0
    %1500 = vmatpush1.msra.mxu0 0.0
    %1501 = vmatprep.subr.mxu0 0.0
    %1502 = vmatpush1.msra.mxu0 0.0
    %1503 = vmatprep.subr.mxu0 0.0
    %1504 = vmatpush1.msra.mxu0 0.0
    %1505 = vmatprep.subr.mxu0 0.0
    %1506 = vmatpush1.msra.mxu0 0.0
    %1507 = vmatprep.subr.mxu0 0.0
    %1508 = vmatpush1.msra.mxu0 0.0
    %1509 = vmatprep.subr.mxu0 0.0
    %1510 = vmatpush1.msra.mxu0 0.0
    %1511 = vmatprep.subr.mxu0 0.0
    %1512 = vmatpush1.msra.mxu0 0.0
    %1513 = vmatprep.subr.mxu0 0.0
    %1514 = vmatpush1.msra.mxu0 0.0
    %1515 = vmatprep.subr.mxu0 0.0
    %1516 = vmatpush1.msra.mxu0 0.0
    %1517 = vmatprep.subr.mxu0 0.0
    %1518 = vmatpush1.msra.mxu0 0.0
    %1519 = vmatprep.subr.mxu0 0.0
    %1520 = vmatpush1.msra.mxu0 0.0
    %1521 = vmatprep.mubr.f32.mxu0 0.0
    %1522 = vmatmul.mubr.f32.gmra.mrb[0].mxu0 %v1446
    %v1523 = vpop.f32.mrb[0].mxu0
    %v1524 = vadd.f32 %v1150, %v1523
    %v1525 = vpop.f32.mrb[0].mxu0
    %1526 = vmatprep.mubr.f32.mxu0 0.0
    %1527 = vmatmul.mubr.f32.gmra.mrb[0].mxu0 %v1449
    %v1528 = vpop.f32.mrb[0].mxu0
    %v1529 = vadd.f32 %v1151, %v1528
    %v1530 = vpop.f32.mrb[0].mxu0
    %1531 = vmatprep.mubr.f32.mxu0 0.0
    %1532 = vmatmul.mubr.f32.gmra.mrb[0].mxu0 %v1452
    %v1533 = vpop.f32.mrb[0].mxu0
    %v1534 = vadd.f32 %v1152, %v1533
    %v1535 = vpop.f32.mrb[0].mxu0
    %1536 = vmatprep.mubr.f32.mxu0 0.0
    %1537 = vmatmul.mubr.f32.gmra.mrb[0].mxu0 %v1455
    %v1538 = vpop.f32.mrb[0].mxu0
    %v1539 = vadd.f32 %v1153, %v1538
    %v1540 = vpop.f32.mrb[0].mxu0
    %1541 = vdwg.mxu0
    %v1542 = vmax.f32 %v1524, 0.0
    %v1543 = vmax.f32 %v1529, 0.0
    %v1544 = vmax.f32 %v1534, 0.0
    %v1545 = vmax.f32 %v1539, 0.0
    %s1546 = scalar_lea.vmem [#allocation3], 64
    %1547 = vst [vmem:[%s1546] sm:$0xff] %v1542
    %1548 = vst [vmem:[%s1546 + $0x8] sm:$0xff] %v1543
    %1549 = vst [vmem:[%s1546 + $0x10] sm:$0xff] %v1544
    %1550 = vst [vmem:[%s1546 + $0x18] sm:$0xff] %v1545
    %v1551 = vmul.f32 %v1542, %v1161
    %v1552 = vmul.f32 %v1543, %v1166
    %v1553 = vmul.f32 %v1544, %v1171
    %v1554 = vmul.f32 %v1545, %v1176
    %v1555 = vadd.f32 %v1551, %v1552
    %v1556 = vadd.f32 %v1555, %v1553
    %v1557 = vadd.f32 %v1556, %v1554
    %v1558 = vrot.slane %v1557, 4
    %v1559 = vadd.f32 %v1557, %v1558
    %v1560 = vrot.slane %v1559, 2
    %v1561 = vadd.f32 %v1559, %v1560
    %v1562 = vrot.slane %v1561, 1
    %v1563 = vadd.f32 %v1561, %v1562
    %v1564 = vadd.f32 %v1563, %v1187
    %v1565 = vmax.f32 %v1564, 0.0
    %v1566 = vld [vmem:[%s4] sm:$0xff]
    %v1567 = vld [vmem:[%s4 + $0x8] sm:$0xff]
    %v1568 = vld [vmem:[%s4 + $0x10] sm:$0xff]
    %v1569 = vld [vmem:[%s4 + $0x18] sm:$0xff]
    %v1570 = vld [vmem:[%s450] sm:$0xff]
    %v1571 = vld [vmem:[%s450 + $0x8] sm:$0xff]
    %v1573 = vsel %vm931, %v1566, 0
    %v1576 = vsel %vm931, %v1567, 0
    %v1579 = vsel %vm931, %v1568, 0
    %v1582 = vsel %vm931, %v1569, 0
    %1584 = vmatprep.subr.mxu0 0.0
    %1585 = vmatpush1.msra.mxu0 %v1570
    %1586 = vmatprep.subr.mxu0 0.0
    %1587 = vmatpush1.msra.mxu0 %v1571
    %1588 = vmatprep.subr.mxu0 0.0
    %1589 = vmatpush1.msra.mxu0 0.0
    %1590 = vmatprep.subr.mxu0 0.0
    %1591 = vmatpush1.msra.mxu0 0.0
    %1592 = vmatprep.subr.mxu0 0.0
    %1593 = vmatpush1.msra.mxu0 0.0
    %1594 = vmatprep.subr.mxu0 0.0
    %1595 = vmatpush1.msra.mxu0 0.0
    %1596 = vmatprep.subr.mxu0 0.0
    %1597 = vmatpush1.msra.mxu0 0.0
    %1598 = vmatprep.subr.mxu0 0.0
    %1599 = vmatpush1.msra.mxu0 0.0
    %1600 = vmatprep.subr.mxu0 0.0
    %1601 = vmatpush1.msra.mxu0 0.0
    %1602 = vmatprep.subr.mxu0 0.0
    %1603 = vmatpush1.msra.mxu0 0.0
    %1604 = vmatprep.subr.mxu0 0.0
    %1605 = vmatpush1.msra.mxu0 0.0
    %1606 = vmatprep.subr.mxu0 0.0
    %1607 = vmatpush1.msra.mxu0 0.0
    %1608 = vmatprep.subr.mxu0 0.0
    %1609 = vmatpush1.msra.mxu0 0.0
    %1610 = vmatprep.subr.mxu0 0.0
    %1611 = vmatpush1.msra.mxu0 0.0
    %1612 = vmatprep.subr.mxu0 0.0
    %1613 = vmatpush1.msra.mxu0 0.0
    %1614 = vmatprep.subr.mxu0 0.0
    %1615 = vmatpush1.msra.mxu0 0.0
    %1616 = vmatprep.subr.mxu0 0.0
    %1617 = vmatpush1.msra.mxu0 0.0
    %1618 = vmatprep.subr.mxu0 0.0
    %1619 = vmatpush1.msra.mxu0 0.0
    %1620 = vmatprep.subr.mxu0 0.0
    %1621 = vmatpush1.msra.mxu0 0.0
    %1622 = vmatprep.subr.mxu0 0.0
    %1623 = vmatpush1.msra.mxu0 0.0
    %1624 = vmatprep.subr.mxu0 0.0
    %1625 = vmatpush1.msra.mxu0 0.0
    %1626 = vmatprep.subr.mxu0 0.0
    %1627 = vmatpush1.msra.mxu0 0.0
    %1628 = vmatprep.subr.mxu0 0.0
    %1629 = vmatpush1.msra.mxu0 0.0
    %1630 = vmatprep.subr.mxu0 0.0
    %1631 = vmatpush1.msra.mxu0 0.0
    %1632 = vmatprep.subr.mxu0 0.0
    %1633 = vmatpush1.msra.mxu0 0.0
    %1634 = vmatprep.subr.mxu0 0.0
    %1635 = vmatpush1.msra.mxu0 0.0
    %1636 = vmatprep.subr.mxu0 0.0
    %1637 = vmatpush1.msra.mxu0 0.0
    %1638 = vmatprep.subr.mxu0 0.0
    %1639 = vmatpush1.msra.mxu0 0.0
    %1640 = vmatprep.subr.mxu0 0.0
    %1641 = vmatpush1.msra.mxu0 0.0
    %1642 = vmatprep.subr.mxu0 0.0
    %1643 = vmatpush1.msra.mxu0 0.0
    %1644 = vmatprep.subr.mxu0 0.0
    %1645 = vmatpush1.msra.mxu0 0.0
    %1646 = vmatprep.subr.mxu0 0.0
    %1647 = vmatpush1.msra.mxu0 0.0
    %1648 = vmatprep.mubr.f32.mxu0 0.0
    %1649 = vmatmul.mubr.f32.gmra.mrb[0].mxu0 %v1573
    %v1650 = vpop.f32.mrb[0].mxu0
    %v1651 = vadd.f32 %v1150, %v1650
    %v1652 = vpop.f32.mrb[0].mxu0
    %1653 = vmatprep.mubr.f32.mxu0 0.0
    %1654 = vmatmul.mubr.f32.gmra.mrb[0].mxu0 %v1576
    %v1655 = vpop.f32.mrb[0].mxu0
    %v1656 = vadd.f32 %v1151, %v1655
    %v1657 = vpop.f32.mrb[0].mxu0
    %1658 = vmatprep.mubr.f32.mxu0 0.0
    %1659 = vmatmul.mubr.f32.gmra.mrb[0].mxu0 %v1579
    %v1660 = vpop.f32.mrb[0].mxu0
    %v1661 = vadd.f32 %v1152, %v1660
    %v1662 = vpop.f32.mrb[0].mxu0
    %1663 = vmatprep.mubr.f32.mxu0 0.0
    %1664 = vmatmul.mubr.f32.gmra.mrb[0].mxu0 %v1582
    %v1665 = vpop.f32.mrb[0].mxu0
    %v1666 = vadd.f32 %v1153, %v1665
    %v1667 = vpop.f32.mrb[0].mxu0
    %1668 = vdwg.mxu0
    %v1669 = vmax.f32 %v1651, 0.0
    %v1670 = vmax.f32 %v1656, 0.0
    %v1671 = vmax.f32 %v1661, 0.0
    %v1672 = vmax.f32 %v1666, 0.0
    %s1673 = scalar_lea.vmem [#allocation3], 96
    %1674 = vst [vmem:[%s1673] sm:$0xff] %v1669
    %1675 = vst [vmem:[%s1673 + $0x8] sm:$0xff] %v1670
    %1676 = vst [vmem:[%s1673 + $0x10] sm:$0xff] %v1671
    %1677 = vst [vmem:[%s1673 + $0x18] sm:$0xff] %v1672
    %v1678 = vmul.f32 %v1669, %v1161
    %v1679 = vmul.f32 %v1670, %v1166
    %v1680 = vmul.f32 %v1671, %v1171
    %v1681 = vmul.f32 %v1672, %v1176
    %v1682 = vadd.f32 %v1678, %v1679
    %v1683 = vadd.f32 %v1682, %v1680
    %v1684 = vadd.f32 %v1683, %v1681
    %v1685 = vrot.slane %v1684, 4
    %v1686 = vadd.f32 %v1684, %v1685
    %v1687 = vrot.slane %v1686, 2
    %v1688 = vadd.f32 %v1686, %v1687
    %v1689 = vrot.slane %v1688, 1
    %v1690 = vadd.f32 %v1688, %v1689
    %v1691 = vadd.f32 %v1690, %v1187
    %v1692 = vmax.f32 %v1691, 0.0
    %v1693 = vld [vmem:[%s4] sm:$0xff]
    %v1694 = vld [vmem:[%s4 + $0x8] sm:$0xff]
    %v1695 = vld [vmem:[%s4 + $0x10] sm:$0xff]
    %v1696 = vld [vmem:[%s4 + $0x18] sm:$0xff]
    %v1697 = vld [vmem:[%s550] sm:$0xff]
    %v1698 = vld [vmem:[%s550 + $0x8] sm:$0xff]
    %v1700 = vsel %vm931, %v1693, 0
    %v1703 = vsel %vm931, %v1694, 0
    %v1706 = vsel %vm931, %v1695, 0
    %v1709 = vsel %vm931, %v1696, 0
    %1711 = vmatprep.subr.mxu0 0.0
    %1712 = vmatpush1.msra.mxu0 %v1697
    %1713 = vmatprep.subr.mxu0 0.0
    %1714 = vmatpush1.msra.mxu0 %v1698
    %1715 = vmatprep.subr.mxu0 0.0
    %1716 = vmatpush1.msra.mxu0 0.0
    %1717 = vmatprep.subr.mxu0 0.0
    %1718 = vmatpush1.msra.mxu0 0.0
    %1719 = vmatprep.subr.mxu0 0.0
    %1720 = vmatpush1.msra.mxu0 0.0
    %1721 = vmatprep.subr.mxu0 0.0
    %1722 = vmatpush1.msra.mxu0 0.0
    %1723 = vmatprep.subr.mxu0 0.0
    %1724 = vmatpush1.msra.mxu0 0.0
    %1725 = vmatprep.subr.mxu0 0.0
    %1726 = vmatpush1.msra.mxu0 0.0
    %1727 = vmatprep.subr.mxu0 0.0
    %1728 = vmatpush1.msra.mxu0 0.0
    %1729 = vmatprep.subr.mxu0 0.0
    %1730 = vmatpush1.msra.mxu0 0.0
    %1731 = vmatprep.subr.mxu0 0.0
    %1732 = vmatpush1.msra.mxu0 0.0
    %1733 = vmatprep.subr.mxu0 0.0
    %1734 = vmatpush1.msra.mxu0 0.0
    %1735 = vmatprep.subr.mxu0 0.0
    %1736 = vmatpush1.msra.mxu0 0.0
    %1737 = vmatprep.subr.mxu0 0.0
    %1738 = vmatpush1.msra.mxu0 0.0
    %1739 = vmatprep.subr.mxu0 0.0
    %1740 = vmatpush1.msra.mxu0 0.0
    %1741 = vmatprep.subr.mxu0 0.0
    %1742 = vmatpush1.msra.mxu0 0.0
    %1743 = vmatprep.subr.mxu0 0.0
    %1744 = vmatpush1.msra.mxu0 0.0
    %1745 = vmatprep.subr.mxu0 0.0
    %1746 = vmatpush1.msra.mxu0 0.0
    %1747 = vmatprep.subr.mxu0 0.0
    %1748 = vmatpush1.msra.mxu0 0.0
    %1749 = vmatprep.subr.mxu0 0.0
    %1750 = vmatpush1.msra.mxu0 0.0
    %1751 = vmatprep.subr.mxu0 0.0
    %1752 = vmatpush1.msra.mxu0 0.0
    %1753 = vmatprep.subr.mxu0 0.0
    %1754 = vmatpush1.msra.mxu0 0.0
    %1755 = vmatprep.subr.mxu0 0.0
    %1756 = vmatpush1.msra.mxu0 0.0
    %1757 = vmatprep.subr.mxu0 0.0
    %1758 = vmatpush1.msra.mxu0 0.0
    %1759 = vmatprep.subr.mxu0 0.0
    %1760 = vmatpush1.msra.mxu0 0.0
    %1761 = vmatprep.subr.mxu0 0.0
    %1762 = vmatpush1.msra.mxu0 0.0
    %1763 = vmatprep.subr.mxu0 0.0
    %1764 = vmatpush1.msra.mxu0 0.0
    %1765 = vmatprep.subr.mxu0 0.0
    %1766 = vmatpush1.msra.mxu0 0.0
    %1767 = vmatprep.subr.mxu0 0.0
    %1768 = vmatpush1.msra.mxu0 0.0
    %1769 = vmatprep.subr.mxu0 0.0
    %1770 = vmatpush1.msra.mxu0 0.0
    %1771 = vmatprep.subr.mxu0 0.0
    %1772 = vmatpush1.msra.mxu0 0.0
    %1773 = vmatprep.subr.mxu0 0.0
    %1774 = vmatpush1.msra.mxu0 0.0
    %1775 = vmatprep.mubr.f32.mxu0 0.0
    %1776 = vmatmul.mubr.f32.gmra.mrb[0].mxu0 %v1700
    %v1777 = vpop.f32.mrb[0].mxu0
    %v1778 = vadd.f32 %v1150, %v1777
    %v1779 = vpop.f32.mrb[0].mxu0
    %1780 = vmatprep.mubr.f32.mxu0 0.0
    %1781 = vmatmul.mubr.f32.gmra.mrb[0].mxu0 %v1703
    %v1782 = vpop.f32.mrb[0].mxu0
    %v1783 = vadd.f32 %v1151, %v1782
    %v1784 = vpop.f32.mrb[0].mxu0
    %1785 = vmatprep.mubr.f32.mxu0 0.0
    %1786 = vmatmul.mubr.f32.gmra.mrb[0].mxu0 %v1706
    %v1787 = vpop.f32.mrb[0].mxu0
    %v1788 = vadd.f32 %v1152, %v1787
    %v1789 = vpop.f32.mrb[0].mxu0
    %1790 = vmatprep.mubr.f32.mxu0 0.0
    %1791 = vmatmul.mubr.f32.gmra.mrb[0].mxu0 %v1709
    %v1792 = vpop.f32.mrb[0].mxu0
    %v1793 = vadd.f32 %v1153, %v1792
    %v1794 = vpop.f32.mrb[0].mxu0
    %1795 = vdwg.mxu0
    %v1796 = vmax.f32 %v1778, 0.0
    %v1797 = vmax.f32 %v1783, 0.0
    %v1798 = vmax.f32 %v1788, 0.0
    %v1799 = vmax.f32 %v1793, 0.0
    %s1800 = scalar_lea.vmem [#allocation3], 128
    %1801 = vst [vmem:[%s1800] sm:$0xff] %v1796
    %1802 = vst [vmem:[%s1800 + $0x8] sm:$0xff] %v1797
    %1803 = vst [vmem:[%s1800 + $0x10] sm:$0xff] %v1798
    %1804 = vst [vmem:[%s1800 + $0x18] sm:$0xff] %v1799
    %v1805 = vmul.f32 %v1796, %v1161
    %v1806 = vmul.f32 %v1797, %v1166
    %v1807 = vmul.f32 %v1798, %v1171
    %v1808 = vmul.f32 %v1799, %v1176
    %v1809 = vadd.f32 %v1805, %v1806
    %v1810 = vadd.f32 %v1809, %v1807
    %v1811 = vadd.f32 %v1810, %v1808
    %v1812 = vrot.slane %v1811, 4
    %v1813 = vadd.f32 %v1811, %v1812
    %v1814 = vrot.slane %v1813, 2
    %v1815 = vadd.f32 %v1813, %v1814
    %v1816 = vrot.slane %v1815, 1
    %v1817 = vadd.f32 %v1815, %v1816
    %v1818 = vadd.f32 %v1817, %v1187
    %v1819 = vmax.f32 %v1818, 0.0
    %v1820 = vld [vmem:[%s4] sm:$0xff]
    %v1821 = vld [vmem:[%s4 + $0x8] sm:$0xff]
    %v1822 = vld [vmem:[%s4 + $0x10] sm:$0xff]
    %v1823 = vld [vmem:[%s4 + $0x18] sm:$0xff]
    %v1824 = vld [vmem:[%s650] sm:$0xff]
    %v1825 = vld [vmem:[%s650 + $0x8] sm:$0xff]
    %v1827 = vsel %vm931, %v1820, 0
    %v1830 = vsel %vm931, %v1821, 0
    %v1833 = vsel %vm931, %v1822, 0
    %v1836 = vsel %vm931, %v1823, 0
    %1838 = vmatprep.subr.mxu0 0.0
    %1839 = vmatpush1.msra.mxu0 %v1824
    %1840 = vmatprep.subr.mxu0 0.0
    %1841 = vmatpush1.msra.mxu0 %v1825
    %1842 = vmatprep.subr.mxu0 0.0
    %1843 = vmatpush1.msra.mxu0 0.0
    %1844 = vmatprep.subr.mxu0 0.0
    %1845 = vmatpush1.msra.mxu0 0.0
    %1846 = vmatprep.subr.mxu0 0.0
    %1847 = vmatpush1.msra.mxu0 0.0
    %1848 = vmatprep.subr.mxu0 0.0
    %1849 = vmatpush1.msra.mxu0 0.0
    %1850 = vmatprep.subr.mxu0 0.0
    %1851 = vmatpush1.msra.mxu0 0.0
    %1852 = vmatprep.subr.mxu0 0.0
    %1853 = vmatpush1.msra.mxu0 0.0
    %1854 = vmatprep.subr.mxu0 0.0
    %1855 = vmatpush1.msra.mxu0 0.0
    %1856 = vmatprep.subr.mxu0 0.0
    %1857 = vmatpush1.msra.mxu0 0.0
    %1858 = vmatprep.subr.mxu0 0.0
    %1859 = vmatpush1.msra.mxu0 0.0
    %1860 = vmatprep.subr.mxu0 0.0
    %1861 = vmatpush1.msra.mxu0 0.0
    %1862 = vmatprep.subr.mxu0 0.0
    %1863 = vmatpush1.msra.mxu0 0.0
    %1864 = vmatprep.subr.mxu0 0.0
    %1865 = vmatpush1.msra.mxu0 0.0
    %1866 = vmatprep.subr.mxu0 0.0
    %1867 = vmatpush1.msra.mxu0 0.0
    %1868 = vmatprep.subr.mxu0 0.0
    %1869 = vmatpush1.msra.mxu0 0.0
    %1870 = vmatprep.subr.mxu0 0.0
    %1871 = vmatpush1.msra.mxu0 0.0
    %1872 = vmatprep.subr.mxu0 0.0
    %1873 = vmatpush1.msra.mxu0 0.0
    %1874 = vmatprep.subr.mxu0 0.0
    %1875 = vmatpush1.msra.mxu0 0.0
    %1876 = vmatprep.subr.mxu0 0.0
    %1877 = vmatpush1.msra.mxu0 0.0
    %1878 = vmatprep.subr.mxu0 0.0
    %1879 = vmatpush1.msra.mxu0 0.0
    %1880 = vmatprep.subr.mxu0 0.0
    %1881 = vmatpush1.msra.mxu0 0.0
    %1882 = vmatprep.subr.mxu0 0.0
    %1883 = vmatpush1.msra.mxu0 0.0
    %1884 = vmatprep.subr.mxu0 0.0
    %1885 = vmatpush1.msra.mxu0 0.0
    %1886 = vmatprep.subr.mxu0 0.0
    %1887 = vmatpush1.msra.mxu0 0.0
    %1888 = vmatprep.subr.mxu0 0.0
    %1889 = vmatpush1.msra.mxu0 0.0
    %1890 = vmatprep.subr.mxu0 0.0
    %1891 = vmatpush1.msra.mxu0 0.0
    %1892 = vmatprep.subr.mxu0 0.0
    %1893 = vmatpush1.msra.mxu0 0.0
    %1894 = vmatprep.subr.mxu0 0.0
    %1895 = vmatpush1.msra.mxu0 0.0
    %1896 = vmatprep.subr.mxu0 0.0
    %1897 = vmatpush1.msra.mxu0 0.0
    %1898 = vmatprep.subr.mxu0 0.0
    %1899 = vmatpush1.msra.mxu0 0.0
    %1900 = vmatprep.subr.mxu0 0.0
    %1901 = vmatpush1.msra.mxu0 0.0
    %1902 = vmatprep.mubr.f32.mxu0 0.0
    %1903 = vmatmul.mubr.f32.gmra.mrb[0].mxu0 %v1827
    %v1904 = vpop.f32.mrb[0].mxu0
    %v1905 = vadd.f32 %v1150, %v1904
    %v1906 = vpop.f32.mrb[0].mxu0
    %1907 = vmatprep.mubr.f32.mxu0 0.0
    %1908 = vmatmul.mubr.f32.gmra.mrb[0].mxu0 %v1830
    %v1909 = vpop.f32.mrb[0].mxu0
    %v1910 = vadd.f32 %v1151, %v1909
    %v1911 = vpop.f32.mrb[0].mxu0
    %1912 = vmatprep.mubr.f32.mxu0 0.0
    %1913 = vmatmul.mubr.f32.gmra.mrb[0].mxu0 %v1833
    %v1914 = vpop.f32.mrb[0].mxu0
    %v1915 = vadd.f32 %v1152, %v1914
    %v1916 = vpop.f32.mrb[0].mxu0
    %1917 = vmatprep.mubr.f32.mxu0 0.0
    %1918 = vmatmul.mubr.f32.gmra.mrb[0].mxu0 %v1836
    %v1919 = vpop.f32.mrb[0].mxu0
    %v1920 = vadd.f32 %v1153, %v1919
    %v1921 = vpop.f32.mrb[0].mxu0
    %1922 = vdwg.mxu0
    %v1923 = vmax.f32 %v1905, 0.0
    %v1924 = vmax.f32 %v1910, 0.0
    %v1925 = vmax.f32 %v1915, 0.0
    %v1926 = vmax.f32 %v1920, 0.0
    %s1927 = scalar_lea.vmem [#allocation3], 160
    %1928 = vst [vmem:[%s1927] sm:$0xff] %v1923
    %1929 = vst [vmem:[%s1927 + $0x8] sm:$0xff] %v1924
    %1930 = vst [vmem:[%s1927 + $0x10] sm:$0xff] %v1925
    %1931 = vst [vmem:[%s1927 + $0x18] sm:$0xff] %v1926
    %v1932 = vmul.f32 %v1923, %v1161
    %v1933 = vmul.f32 %v1924, %v1166
    %v1934 = vmul.f32 %v1925, %v1171
    %v1935 = vmul.f32 %v1926, %v1176
    %v1936 = vadd.f32 %v1932, %v1933
    %v1937 = vadd.f32 %v1936, %v1934
    %v1938 = vadd.f32 %v1937, %v1935
    %v1939 = vrot.slane %v1938, 4
    %v1940 = vadd.f32 %v1938, %v1939
    %v1941 = vrot.slane %v1940, 2
    %v1942 = vadd.f32 %v1940, %v1941
    %v1943 = vrot.slane %v1942, 1
    %v1944 = vadd.f32 %v1942, %v1943
    %v1945 = vadd.f32 %v1944, %v1187
    %v1946 = vmax.f32 %v1945, 0.0
    %v1947 = vld [vmem:[%s4] sm:$0xff]
    %v1948 = vld [vmem:[%s4 + $0x8] sm:$0xff]
    %v1949 = vld [vmem:[%s4 + $0x10] sm:$0xff]
    %v1950 = vld [vmem:[%s4 + $0x18] sm:$0xff]
    %v1951 = vld [vmem:[%s750] sm:$0xff]
    %v1952 = vld [vmem:[%s750 + $0x8] sm:$0xff]
    %v1954 = vsel %vm931, %v1947, 0
    %v1957 = vsel %vm931, %v1948, 0
    %v1960 = vsel %vm931, %v1949, 0
    %v1963 = vsel %vm931, %v1950, 0
    %1965 = vmatprep.subr.mxu0 0.0
    %1966 = vmatpush1.msra.mxu0 %v1951
    %1967 = vmatprep.subr.mxu0 0.0
    %1968 = vmatpush1.msra.mxu0 %v1952
    %1969 = vmatprep.subr.mxu0 0.0
    %1970 = vmatpush1.msra.mxu0 0.0
    %1971 = vmatprep.subr.mxu0 0.0
    %1972 = vmatpush1.msra.mxu0 0.0
    %1973 = vmatprep.subr.mxu0 0.0
    %1974 = vmatpush1.msra.mxu0 0.0
    %1975 = vmatprep.subr.mxu0 0.0
    %1976 = vmatpush1.msra.mxu0 0.0
    %1977 = vmatprep.subr.mxu0 0.0
    %1978 = vmatpush1.msra.mxu0 0.0
    %1979 = vmatprep.subr.mxu0 0.0
    %1980 = vmatpush1.msra.mxu0 0.0
    %1981 = vmatprep.subr.mxu0 0.0
    %1982 = vmatpush1.msra.mxu0 0.0
    %1983 = vmatprep.subr.mxu0 0.0
    %1984 = vmatpush1.msra.mxu0 0.0
    %1985 = vmatprep.subr.mxu0 0.0
    %1986 = vmatpush1.msra.mxu0 0.0
    %1987 = vmatprep.subr.mxu0 0.0
    %1988 = vmatpush1.msra.mxu0 0.0
    %1989 = vmatprep.subr.mxu0 0.0
    %1990 = vmatpush1.msra.mxu0 0.0
    %1991 = vmatprep.subr.mxu0 0.0
    %1992 = vmatpush1.msra.mxu0 0.0
    %1993 = vmatprep.subr.mxu0 0.0
    %1994 = vmatpush1.msra.mxu0 0.0
    %1995 = vmatprep.subr.mxu0 0.0
    %1996 = vmatpush1.msra.mxu0 0.0
    %1997 = vmatprep.subr.mxu0 0.0
    %1998 = vmatpush1.msra.mxu0 0.0
    %1999 = vmatprep.subr.mxu0 0.0
    %2000 = vmatpush1.msra.mxu0 0.0
    %2001 = vmatprep.subr.mxu0 0.0
    %2002 = vmatpush1.msra.mxu0 0.0
    %2003 = vmatprep.subr.mxu0 0.0
    %2004 = vmatpush1.msra.mxu0 0.0
    %2005 = vmatprep.subr.mxu0 0.0
    %2006 = vmatpush1.msra.mxu0 0.0
    %2007 = vmatprep.subr.mxu0 0.0
    %2008 = vmatpush1.msra.mxu0 0.0
    %2009 = vmatprep.subr.mxu0 0.0
    %2010 = vmatpush1.msra.mxu0 0.0
    %2011 = vmatprep.subr.mxu0 0.0
    %2012 = vmatpush1.msra.mxu0 0.0
    %2013 = vmatprep.subr.mxu0 0.0
    %2014 = vmatpush1.msra.mxu0 0.0
    %2015 = vmatprep.subr.mxu0 0.0
    %2016 = vmatpush1.msra.mxu0 0.0
    %2017 = vmatprep.subr.mxu0 0.0
    %2018 = vmatpush1.msra.mxu0 0.0
    %2019 = vmatprep.subr.mxu0 0.0
    %2020 = vmatpush1.msra.mxu0 0.0
    %2021 = vmatprep.subr.mxu0 0.0
    %2022 = vmatpush1.msra.mxu0 0.0
    %2023 = vmatprep.subr.mxu0 0.0
    %2024 = vmatpush1.msra.mxu0 0.0
    %2025 = vmatprep.subr.mxu0 0.0
    %2026 = vmatpush1.msra.mxu0 0.0
    %2027 = vmatprep.subr.mxu0 0.0
    %2028 = vmatpush1.msra.mxu0 0.0
    %2029 = vmatprep.mubr.f32.mxu0 0.0
    %2030 = vmatmul.mubr.f32.gmra.mrb[0].mxu0 %v1954
    %v2031 = vpop.f32.mrb[0].mxu0
    %v2032 = vadd.f32 %v1150, %v2031
    %v2033 = vpop.f32.mrb[0].mxu0
    %2034 = vmatprep.mubr.f32.mxu0 0.0
    %2035 = vmatmul.mubr.f32.gmra.mrb[0].mxu0 %v1957
    %v2036 = vpop.f32.mrb[0].mxu0
    %v2037 = vadd.f32 %v1151, %v2036
    %v2038 = vpop.f32.mrb[0].mxu0
    %2039 = vmatprep.mubr.f32.mxu0 0.0
    %2040 = vmatmul.mubr.f32.gmra.mrb[0].mxu0 %v1960
    %v2041 = vpop.f32.mrb[0].mxu0
    %v2042 = vadd.f32 %v1152, %v2041
    %v2043 = vpop.f32.mrb[0].mxu0
    %2044 = vmatprep.mubr.f32.mxu0 0.0
    %2045 = vmatmul.mubr.f32.gmra.mrb[0].mxu0 %v1963
    %v2046 = vpop.f32.mrb[0].mxu0
    %v2047 = vadd.f32 %v1153, %v2046
    %v2048 = vpop.f32.mrb[0].mxu0
    %2049 = vdwg.mxu0
    %v2050 = vmax.f32 %v2032, 0.0
    %v2051 = vmax.f32 %v2037, 0.0
    %v2052 = vmax.f32 %v2042, 0.0
    %v2053 = vmax.f32 %v2047, 0.0
    %s2054 = scalar_lea.vmem [#allocation3], 192
    %2055 = vst [vmem:[%s2054] sm:$0xff] %v2050
    %2056 = vst [vmem:[%s2054 + $0x8] sm:$0xff] %v2051
    %2057 = vst [vmem:[%s2054 + $0x10] sm:$0xff] %v2052
    %2058 = vst [vmem:[%s2054 + $0x18] sm:$0xff] %v2053
    %v2059 = vmul.f32 %v2050, %v1161
    %v2060 = vmul.f32 %v2051, %v1166
    %v2061 = vmul.f32 %v2052, %v1171
    %v2062 = vmul.f32 %v2053, %v1176
    %v2063 = vadd.f32 %v2059, %v2060
    %v2064 = vadd.f32 %v2063, %v2061
    %v2065 = vadd.f32 %v2064, %v2062
    %v2066 = vrot.slane %v2065, 4
    %v2067 = vadd.f32 %v2065, %v2066
    %v2068 = vrot.slane %v2067, 2
    %v2069 = vadd.f32 %v2067, %v2068
    %v2070 = vrot.slane %v2069, 1
    %v2071 = vadd.f32 %v2069, %v2070
    %v2072 = vadd.f32 %v2071, %v1187
    %v2073 = vmax.f32 %v2072, 0.0
    %v2074 = vld [vmem:[%s4] sm:$0xff]
    %v2075 = vld [vmem:[%s4 + $0x8] sm:$0xff]
    %v2076 = vld [vmem:[%s4 + $0x10] sm:$0xff]
    %v2077 = vld [vmem:[%s4 + $0x18] sm:$0xff]
    %v2078 = vld [vmem:[%s850] sm:$0xff]
    %v2079 = vld [vmem:[%s850 + $0x8] sm:$0xff]
    %v2081 = vsel %vm931, %v2074, 0
    %v2084 = vsel %vm931, %v2075, 0
    %v2087 = vsel %vm931, %v2076, 0
    %v2090 = vsel %vm931, %v2077, 0
    %2092 = vmatprep.subr.mxu0 0.0
    %2093 = vmatpush1.msra.mxu0 %v2078
    %2094 = vmatprep.subr.mxu0 0.0
    %2095 = vmatpush1.msra.mxu0 %v2079
    %2096 = vmatprep.subr.mxu0 0.0
    %2097 = vmatpush1.msra.mxu0 0.0
    %2098 = vmatprep.subr.mxu0 0.0
    %2099 = vmatpush1.msra.mxu0 0.0
    %2100 = vmatprep.subr.mxu0 0.0
    %2101 = vmatpush1.msra.mxu0 0.0
    %2102 = vmatprep.subr.mxu0 0.0
    %2103 = vmatpush1.msra.mxu0 0.0
    %2104 = vmatprep.subr.mxu0 0.0
    %2105 = vmatpush1.msra.mxu0 0.0
    %2106 = vmatprep.subr.mxu0 0.0
    %2107 = vmatpush1.msra.mxu0 0.0
    %2108 = vmatprep.subr.mxu0 0.0
    %2109 = vmatpush1.msra.mxu0 0.0
    %2110 = vmatprep.subr.mxu0 0.0
    %2111 = vmatpush1.msra.mxu0 0.0
    %2112 = vmatprep.subr.mxu0 0.0
    %2113 = vmatpush1.msra.mxu0 0.0
    %2114 = vmatprep.subr.mxu0 0.0
    %2115 = vmatpush1.msra.mxu0 0.0
    %2116 = vmatprep.subr.mxu0 0.0
    %2117 = vmatpush1.msra.mxu0 0.0
    %2118 = vmatprep.subr.mxu0 0.0
    %2119 = vmatpush1.msra.mxu0 0.0
    %2120 = vmatprep.subr.mxu0 0.0
    %2121 = vmatpush1.msra.mxu0 0.0
    %2122 = vmatprep.subr.mxu0 0.0
    %2123 = vmatpush1.msra.mxu0 0.0
    %2124 = vmatprep.subr.mxu0 0.0
    %2125 = vmatpush1.msra.mxu0 0.0
    %2126 = vmatprep.subr.mxu0 0.0
    %2127 = vmatpush1.msra.mxu0 0.0
    %2128 = vmatprep.subr.mxu0 0.0
    %2129 = vmatpush1.msra.mxu0 0.0
    %2130 = vmatprep.subr.mxu0 0.0
    %2131 = vmatpush1.msra.mxu0 0.0
    %2132 = vmatprep.subr.mxu0 0.0
    %2133 = vmatpush1.msra.mxu0 0.0
    %2134 = vmatprep.subr.mxu0 0.0
    %2135 = vmatpush1.msra.mxu0 0.0
    %2136 = vmatprep.subr.mxu0 0.0
    %2137 = vmatpush1.msra.mxu0 0.0
    %2138 = vmatprep.subr.mxu0 0.0
    %2139 = vmatpush1.msra.mxu0 0.0
    %2140 = vmatprep.subr.mxu0 0.0
    %2141 = vmatpush1.msra.mxu0 0.0
    %2142 = vmatprep.subr.mxu0 0.0
    %2143 = vmatpush1.msra.mxu0 0.0
    %2144 = vmatprep.subr.mxu0 0.0
    %2145 = vmatpush1.msra.mxu0 0.0
    %2146 = vmatprep.subr.mxu0 0.0
    %2147 = vmatpush1.msra.mxu0 0.0
    %2148 = vmatprep.subr.mxu0 0.0
    %2149 = vmatpush1.msra.mxu0 0.0
    %2150 = vmatprep.subr.mxu0 0.0
    %2151 = vmatpush1.msra.mxu0 0.0
    %2152 = vmatprep.subr.mxu0 0.0
    %2153 = vmatpush1.msra.mxu0 0.0
    %2154 = vmatprep.subr.mxu0 0.0
    %2155 = vmatpush1.msra.mxu0 0.0
    %2156 = vmatprep.mubr.f32.mxu0 0.0
    %2157 = vmatmul.mubr.f32.gmra.mrb[0].mxu0 %v2081
    %v2158 = vpop.f32.mrb[0].mxu0
    %v2159 = vadd.f32 %v1150, %v2158
    %v2160 = vpop.f32.mrb[0].mxu0
    %2161 = vmatprep.mubr.f32.mxu0 0.0
    %2162 = vmatmul.mubr.f32.gmra.mrb[0].mxu0 %v2084
    %v2163 = vpop.f32.mrb[0].mxu0
    %v2164 = vadd.f32 %v1151, %v2163
    %v2165 = vpop.f32.mrb[0].mxu0
    %2166 = vmatprep.mubr.f32.mxu0 0.0
    %2167 = vmatmul.mubr.f32.gmra.mrb[0].mxu0 %v2087
    %v2168 = vpop.f32.mrb[0].mxu0
    %v2169 = vadd.f32 %v1152, %v2168
    %v2170 = vpop.f32.mrb[0].mxu0
    %2171 = vmatprep.mubr.f32.mxu0 0.0
    %2172 = vmatmul.mubr.f32.gmra.mrb[0].mxu0 %v2090
    %v2173 = vpop.f32.mrb[0].mxu0
    %v2174 = vadd.f32 %v1153, %v2173
    %v2175 = vpop.f32.mrb[0].mxu0
    %2176 = vdwg.mxu0
    %v2177 = vmax.f32 %v2159, 0.0
    %v2178 = vmax.f32 %v2164, 0.0
    %v2179 = vmax.f32 %v2169, 0.0
    %v2180 = vmax.f32 %v2174, 0.0
    %s2181 = scalar_lea.vmem [#allocation3], 224
    %2182 = vst [vmem:[%s2181] sm:$0xff] %v2177
    %2183 = vst [vmem:[%s2181 + $0x8] sm:$0xff] %v2178
    %2184 = vst [vmem:[%s2181 + $0x10] sm:$0xff] %v2179
    %2185 = vst [vmem:[%s2181 + $0x18] sm:$0xff] %v2180
    %v2186 = vmul.f32 %v2177, %v1161
    %v2187 = vmul.f32 %v2178, %v1166
    %v2188 = vmul.f32 %v2179, %v1171
    %v2189 = vmul.f32 %v2180, %v1176
    %v2190 = vadd.f32 %v2186, %v2187
    %v2191 = vadd.f32 %v2190, %v2188
    %v2192 = vadd.f32 %v2191, %v2189
    %v2193 = vrot.slane %v2192, 4
    %v2194 = vadd.f32 %v2192, %v2193
    %v2195 = vrot.slane %v2194, 2
    %v2196 = vadd.f32 %v2194, %v2195
    %v2197 = vrot.slane %v2196, 1
    %v2198 = vadd.f32 %v2196, %v2197
    %v2199 = vadd.f32 %v2198, %v1187
    %v2200 = vmax.f32 %v2199, 0.0
    %vm2201 = vcmask 1040384
    %v2202 = vsel %vm2201, %v1311, %v1438
    %vm2203 = vcmask 1041408
    %v2204 = vsel %vm2203, %v2202, %v1565
    %vm2205 = vcmask 1042432
    %v2206 = vsel %vm2205, %v2204, %v1692
    %v2207 = vsel %vm68, %v2206, %v1819
    %vm2208 = vcmask 1044480
    %v2209 = vsel %vm2208, %v2207, %v1946
    %vm2210 = vcmask 1045504
    %v2211 = vsel %vm2210, %v2209, %v2073
    %vm2212 = vcmask 1046528
    %v2213 = vsel %vm2212, %v2211, %v2200
    %v2214 = vrot.slane %v2213, 4
    %v2215 = vmax.f32 %v2213, %v2214
    %v2216 = vrot.slane %v2215, 2
    %v2217 = vmax.f32 %v2215, %v2216
    %v2218 = vrot.slane %v2217, 1
    %v2219 = vmax.f32 %v2217, %v2218
    %v2220 = vsub.f32 %v2213, %v2219
    %v2221 = vmul.f32 %v2220, 1.442695
    %v2222 = vpow.pop %v2221
    %v2223 = vrot.slane %v2222, 4
    %v2224 = vadd.f32 %v2222, %v2223
    %v2225 = vrot.slane %v2224, 2
    %v2226 = vadd.f32 %v2224, %v2225
    %v2227 = vrot.slane %v2226, 1
    %v2228 = vadd.f32 %v2226, %v2227
    %v2229 = vrcp.pop %v2228
    %v2230 = vmul.f32 %v2222, %v2229
    %v2231 = vld [vmem:[#allocation3] sm:$0xff]
    %v2232 = vld [vmem:[#allocation3 + $0x8] sm:$0xff]
    %v2233 = vld [vmem:[#allocation3 + $0x10] sm:$0xff]
    %v2234 = vld [vmem:[#allocation3 + $0x18] sm:$0xff]
    %v2235 = vlaneseq
    %v2236 = vshrl.u32 %v2235, 7
    %v2237 = vsub.s32 0, %v2236
    %v2238 = vrot.slane %v2230, %v2237
    %v2239 = vmul.f32 %v2238, %v2231
    %v2240 = vmul.f32 %v2238, %v2232
    %v2241 = vmul.f32 %v2238, %v2233
    %v2242 = vmul.f32 %v2238, %v2234
    %v2243 = vadd.f32 %v2239, 0.0
    %v2244 = vadd.f32 %v2240, 0.0
    %v2245 = vadd.f32 %v2241, 0.0
    %v2246 = vadd.f32 %v2242, 0.0
    %v2247 = vld [vmem:[%s1419] sm:$0xff]
    %v2248 = vld [vmem:[%s1419 + $0x8] sm:$0xff]
    %v2249 = vld [vmem:[%s1419 + $0x10] sm:$0xff]
    %v2250 = vld [vmem:[%s1419 + $0x18] sm:$0xff]
    %v2251 = vlaneseq
    %v2252 = vshrl.u32 %v2251, 7
    %v2253 = vsub.s32 1, %v2252
    %v2254 = vrot.slane %v2230, %v2253
    %v2255 = vmul.f32 %v2254, %v2247
    %v2256 = vmul.f32 %v2254, %v2248
    %v2257 = vmul.f32 %v2254, %v2249
    %v2258 = vmul.f32 %v2254, %v2250
    %v2259 = vadd.f32 %v2243, %v2255
    %v2260 = vadd.f32 %v2244, %v2256
    %v2261 = vadd.f32 %v2245, %v2257
    %v2262 = vadd.f32 %v2246, %v2258
    %v2263 = vld [vmem:[%s1546] sm:$0xff]
    %v2264 = vld [vmem:[%s1546 + $0x8] sm:$0xff]
    %v2265 = vld [vmem:[%s1546 + $0x10] sm:$0xff]
    %v2266 = vld [vmem:[%s1546 + $0x18] sm:$0xff]
    %v2267 = vlaneseq
    %v2268 = vshrl.u32 %v2267, 7
    %v2269 = vsub.s32 2, %v2268
    %v2270 = vrot.slane %v2230, %v2269
    %v2271 = vmul.f32 %v2270, %v2263
    %v2272 = vmul.f32 %v2270, %v2264
    %v2273 = vmul.f32 %v2270, %v2265
    %v2274 = vmul.f32 %v2270, %v2266
    %v2275 = vadd.f32 %v2259, %v2271
    %v2276 = vadd.f32 %v2260, %v2272
    %v2277 = vadd.f32 %v2261, %v2273
    %v2278 = vadd.f32 %v2262, %v2274
    %v2279 = vld [vmem:[%s1673] sm:$0xff]
    %v2280 = vld [vmem:[%s1673 + $0x8] sm:$0xff]
    %v2281 = vld [vmem:[%s1673 + $0x10] sm:$0xff]
    %v2282 = vld [vmem:[%s1673 + $0x18] sm:$0xff]
    %v2283 = vlaneseq
    %v2284 = vshrl.u32 %v2283, 7
    %v2285 = vsub.s32 3, %v2284
    %v2286 = vrot.slane %v2230, %v2285
    %v2287 = vmul.f32 %v2286, %v2279
    %v2288 = vmul.f32 %v2286, %v2280
    %v2289 = vmul.f32 %v2286, %v2281
    %v2290 = vmul.f32 %v2286, %v2282
    %v2291 = vadd.f32 %v2275, %v2287
    %v2292 = vadd.f32 %v2276, %v2288
    %v2293 = vadd.f32 %v2277, %v2289
    %v2294 = vadd.f32 %v2278, %v2290
    %v2295 = vld [vmem:[%s1800] sm:$0xff]
    %v2296 = vld [vmem:[%s1800 + $0x8] sm:$0xff]
    %v2297 = vld [vmem:[%s1800 + $0x10] sm:$0xff]
    %v2298 = vld [vmem:[%s1800 + $0x18] sm:$0xff]
    %v2299 = vlaneseq
    %v2300 = vshrl.u32 %v2299, 7
    %v2301 = vsub.s32 4, %v2300
    %v2302 = vrot.slane %v2230, %v2301
    %v2303 = vmul.f32 %v2302, %v2295
    %v2304 = vmul.f32 %v2302, %v2296
    %v2305 = vmul.f32 %v2302, %v2297
    %v2306 = vmul.f32 %v2302, %v2298
    %v2307 = vadd.f32 %v2291, %v2303
    %v2308 = vadd.f32 %v2292, %v2304
    %v2309 = vadd.f32 %v2293, %v2305
    %v2310 = vadd.f32 %v2294, %v2306
    %v2311 = vld [vmem:[%s1927] sm:$0xff]
    %v2312 = vld [vmem:[%s1927 + $0x8] sm:$0xff]
    %v2313 = vld [vmem:[%s1927 + $0x10] sm:$0xff]
    %v2314 = vld [vmem:[%s1927 + $0x18] sm:$0xff]
    %v2315 = vlaneseq
    %v2316 = vshrl.u32 %v2315, 7
    %v2317 = vsub.s32 5, %v2316
    %v2318 = vrot.slane %v2230, %v2317
    %v2319 = vmul.f32 %v2318, %v2311
    %v2320 = vmul.f32 %v2318, %v2312
    %v2321 = vmul.f32 %v2318, %v2313
    %v2322 = vmul.f32 %v2318, %v2314
    %v2323 = vadd.f32 %v2307, %v2319
    %v2324 = vadd.f32 %v2308, %v2320
    %v2325 = vadd.f32 %v2309, %v2321
    %v2326 = vadd.f32 %v2310, %v2322
    %v2327 = vld [vmem:[%s2054] sm:$0xff]
    %v2328 = vld [vmem:[%s2054 + $0x8] sm:$0xff]
    %v2329 = vld [vmem:[%s2054 + $0x10] sm:$0xff]
    %v2330 = vld [vmem:[%s2054 + $0x18] sm:$0xff]
    %v2331 = vlaneseq
    %v2332 = vshrl.u32 %v2331, 7
    %v2333 = vsub.s32 6, %v2332
    %v2334 = vrot.slane %v2230, %v2333
    %v2335 = vmul.f32 %v2334, %v2327
    %v2336 = vmul.f32 %v2334, %v2328
    %v2337 = vmul.f32 %v2334, %v2329
    %v2338 = vmul.f32 %v2334, %v2330
    %v2339 = vadd.f32 %v2323, %v2335
    %v2340 = vadd.f32 %v2324, %v2336
    %v2341 = vadd.f32 %v2325, %v2337
    %v2342 = vadd.f32 %v2326, %v2338
    %v2343 = vld [vmem:[%s2181] sm:$0xff]
    %v2344 = vld [vmem:[%s2181 + $0x8] sm:$0xff]
    %v2345 = vld [vmem:[%s2181 + $0x10] sm:$0xff]
    %v2346 = vld [vmem:[%s2181 + $0x18] sm:$0xff]
    %v2347 = vlaneseq
    %v2348 = vshrl.u32 %v2347, 7
    %v2349 = vsub.s32 7, %v2348
    %v2350 = vrot.slane %v2230, %v2349
    %v2351 = vmul.f32 %v2350, %v2343
    %v2352 = vmul.f32 %v2350, %v2344
    %v2353 = vmul.f32 %v2350, %v2345
    %v2354 = vmul.f32 %v2350, %v2346
    %v2355 = vadd.f32 %v2339, %v2351
    %v2356 = vadd.f32 %v2340, %v2352
    %v2357 = vadd.f32 %v2341, %v2353
    %v2358 = vadd.f32 %v2342, %v2354
    %v2359 = vld [vmem:[%s10] sm:$0xff]
    %v2360 = vld [vmem:[%s10 + $0x8] sm:$0xff]
    %v2361 = vld [vmem:[%s11] sm:$0xff]
    %v2362 = vld [vmem:[%s11 + $0x8] sm:$0xff]
    %2364 = vset.pattern.permute.xlu0 0
    %2365 = vperm.xlu0 %2364, %v2361
    %v2366 = vpop.permute.xlu0 %2365
    %2369 = vset.pattern.permute.xlu0 0
    %2370 = vperm.xlu0 %2369, %v2362
    %v2371 = vpop.permute.xlu0 %2370
    %vm2373 = vcmask 261120
    %v2375 = vsel %vm2373, %v2359, 0
    %v2378 = vsel %vm2373, %v2360, 0
    %2380 = vmatprep.subr.mxu0 0.0
    %2381 = vmatpush1.msra.mxu0 %v2355
    %2382 = vmatprep.subr.mxu0 0.0
    %2383 = vmatpush1.msra.mxu0 %v2356
    %2384 = vmatprep.subr.mxu0 0.0
    %2385 = vmatpush1.msra.mxu0 %v2357
    %2386 = vmatprep.subr.mxu0 0.0
    %2387 = vmatpush1.msra.mxu0 %v2358
    %2388 = vmatprep.subr.mxu0 0.0
    %2389 = vmatpush1.msra.mxu0 0.0
    %2390 = vmatprep.subr.mxu0 0.0
    %2391 = vmatpush1.msra.mxu0 0.0
    %2392 = vmatprep.subr.mxu0 0.0
    %2393 = vmatpush1.msra.mxu0 0.0
    %2394 = vmatprep.subr.mxu0 0.0
    %2395 = vmatpush1.msra.mxu0 0.0
    %2396 = vmatprep.subr.mxu0 0.0
    %2397 = vmatpush1.msra.mxu0 0.0
    %2398 = vmatprep.subr.mxu0 0.0
    %2399 = vmatpush1.msra.mxu0 0.0
    %2400 = vmatprep.subr.mxu0 0.0
    %2401 = vmatpush1.msra.mxu0 0.0
    %2402 = vmatprep.subr.mxu0 0.0
    %2403 = vmatpush1.msra.mxu0 0.0
    %2404 = vmatprep.subr.mxu0 0.0
    %2405 = vmatpush1.msra.mxu0 0.0
    %2406 = vmatprep.subr.mxu0 0.0
    %2407 = vmatpush1.msra.mxu0 0.0
    %2408 = vmatprep.subr.mxu0 0.0
    %2409 = vmatpush1.msra.mxu0 0.0
    %2410 = vmatprep.subr.mxu0 0.0
    %2411 = vmatpush1.msra.mxu0 0.0
    %2412 = vmatprep.subr.mxu0 0.0
    %2413 = vmatpush1.msra.mxu0 0.0
    %2414 = vmatprep.subr.mxu0 0.0
    %2415 = vmatpush1.msra.mxu0 0.0
    %2416 = vmatprep.subr.mxu0 0.0
    %2417 = vmatpush1.msra.mxu0 0.0
    %2418 = vmatprep.subr.mxu0 0.0
    %2419 = vmatpush1.msra.mxu0 0.0
    %2420 = vmatprep.subr.mxu0 0.0
    %2421 = vmatpush1.msra.mxu0 0.0
    %2422 = vmatprep.subr.mxu0 0.0
    %2423 = vmatpush1.msra.mxu0 0.0
    %2424 = vmatprep.subr.mxu0 0.0
    %2425 = vmatpush1.msra.mxu0 0.0
    %2426 = vmatprep.subr.mxu0 0.0
    %2427 = vmatpush1.msra.mxu0 0.0
    %2428 = vmatprep.subr.mxu0 0.0
    %2429 = vmatpush1.msra.mxu0 0.0
    %2430 = vmatprep.subr.mxu0 0.0
    %2431 = vmatpush1.msra.mxu0 0.0
    %2432 = vmatprep.subr.mxu0 0.0
    %2433 = vmatpush1.msra.mxu0 0.0
    %2434 = vmatprep.subr.mxu0 0.0
    %2435 = vmatpush1.msra.mxu0 0.0
    %2436 = vmatprep.subr.mxu0 0.0
    %2437 = vmatpush1.msra.mxu0 0.0
    %2438 = vmatprep.subr.mxu0 0.0
    %2439 = vmatpush1.msra.mxu0 0.0
    %2440 = vmatprep.subr.mxu0 0.0
    %2441 = vmatpush1.msra.mxu0 0.0
    %2442 = vmatprep.subr.mxu0 0.0
    %2443 = vmatpush1.msra.mxu0 0.0
    %2444 = vmatprep.mubr.f32.mxu0 0.0
    %2445 = vmatmul.mubr.f32.gmra.mrb[0].mxu0 %v2375
    %v2446 = vpop.f32.mrb[0].mxu0
    %v2447 = vadd.f32 %v2366, %v2446
    %v2448 = vpop.f32.mrb[0].mxu0
    %2449 = vmatprep.mubr.f32.mxu0 0.0
    %2450 = vmatmul.mubr.f32.gmra.mrb[0].mxu0 %v2378
    %v2451 = vpop.f32.mrb[0].mxu0
    %v2452 = vadd.f32 %v2371, %v2451
    %v2453 = vpop.f32.mrb[0].mxu0
    %2454 = vdwg.mxu0
    %v2455 = vmax.f32 %v2447, 0.0
    %v2456 = vmax.f32 %v2452, 0.0
    %2457 = vst [vmem:[#allocation5] sm:$0xff] %v2455
    %2458 = vst [vmem:[#allocation5 + $0x8] sm:$0xff] %v2456
    // Predicated region
    $region50: #{tpu_custom_call.1} parent=1 // pred_check
      _
    $region51: #{tpu_custom_call.1} parent=1 // pred_check_branch
      %2460 = sbr.rel (0) target = $region53
    $region52: #{tpu_custom_call.1} parent=1 // pred_region
      %s2462 = ssub.s32 256, 256
      %2463 = vsyncadd [#allocation6], %s2462
      %s2464 = sshll.u32 [#allocation5], 4
      %s2465 = int_to_ptr.vmem [resolvable:$true] %s2464
      %2470 = dma.vmem_to_hbm [thread:$0]  %s2465, 256, %s12, [#allocation6], 128, 128, 8
    $region53: #{tpu_custom_call.1} parent=1 // pred_fallthru
      _
    // Predicated region
    $region54: #{tpu_custom_call.1} parent=1 // pred_check
      _
    $region55: #{tpu_custom_call.1} parent=1 // pred_check_branch
      %2472 = sbr.rel (0) target = $region57
    $region56: #{tpu_custom_call.1} parent=1 // pred_region
      %2473 = dma.done [#allocation6], 256
    $region57: #{tpu_custom_call.1} parent=1 // pred_fallthru
      _
    %2474 = vsyncpa [#allocation6], 1

</llo_original>
